<compile_context>
chip_gen: v7x
topology: tpu7x:2x2x1
jax: 0.10.0
libtpu: 0.0.40
codegen_flags: <defaults>
</compile_context>

<pallas_src>
import functools

import jax
import jax.numpy as jnp
from jax import lax
from jax.experimental import pallas as pl
from jax.experimental.pallas import tpu as pltpu


def _round_up(x, m):
    return (x + m - 1) // m * m


def _cdiv(a, b):
    return (a + b - 1) // b


def _embed_kernel(feats_ref, w1_ref, b1_ref, w2_ref, b2m_ref, out_ref, acc_ref,
                  *, inv_t, t_total, t_tile, ragged, chunk):
    # feats_ref: (tB, tT, F) f32   w1: (F, Hp) bf16   b1: (1, Hp) f32
    # w2: (Hp, Ep) bf16            b2m: (1, Ep) f32 (= b2 - mean_vec, padded)
    # out: (tB, Ep) f32            acc: (tB, F) f32 scratch
    t = pl.program_id(1)

    @pl.when(t == 0)
    def _():
        acc_ref[...] = jnp.zeros_like(acc_ref)

    if ragged:
        # Number of valid frames in this temporal tile (>= t_tile except last).
        valid = t_total - t * t_tile

    def masked(x, start):
        # Zero out frames past the end of the real sequence (stale VMEM).
        if not ragged:
            return x
        idx = lax.broadcasted_iota(jnp.int32, (x.shape[1], x.shape[2]), 0) + start
        return jnp.where(idx < valid, x, 0.0)

    n_full = t_tile // chunk
    rem = t_tile - n_full * chunk

    part = jnp.zeros(acc_ref.shape, jnp.float32)
    if n_full > 0:
        def body(c, acc):
            start = pl.multiple_of(c * chunk, chunk)
            x = feats_ref[:, pl.ds(start, chunk), :].astype(jnp.float32)
            return acc + jnp.sum(masked(x, start), axis=1)
        part = lax.fori_loop(0, n_full, body, part, unroll=(n_full <= 8))
    if rem > 0:
        x = feats_ref[:, n_full * chunk:t_tile, :].astype(jnp.float32)
        part = part + jnp.sum(masked(x, n_full * chunk), axis=1)
    acc_ref[...] += part

    @pl.when(t == pl.num_programs(1) - 1)
    def _():
        pooled = (acc_ref[...] * inv_t).astype(jnp.bfloat16)          # mean over real T
        h = jnp.dot(pooled, w1_ref[...],
                    preferred_element_type=jnp.float32) + b1_ref[...]
        h = jnp.maximum(h, 0.0).astype(jnp.bfloat16)                  # ReLU
        out_ref[...] = (jnp.dot(h, w2_ref[...],
                                preferred_element_type=jnp.float32)
                        + b2m_ref[...])                               # +b2 - mean_vec


def model_forward(feats, w1, b1, w2, b2, mean_vec):
    """feats: (B, 1, T, F) -> embeds (B, E) float32."""
    x = jnp.squeeze(feats, axis=1)                         # (B, T, F), no copy pass
    B, T, F = x.shape
    H = w1.shape[1]
    E = w2.shape[1]

    LANE, SUB = 128, 8
    Hp = _round_up(H, LANE)
    Ep = _round_up(E, LANE)

    # Batch tile: keep >= 2 parallel blocks (v7x megacore) when B allows it.
    if B >= 16:
        tB = min(128, _round_up((B + 1) // 2, SUB))
    else:
        tB = _round_up(max(B, 1), SUB)

    # Temporal tile: stream T in big slabs; full-T block if it already fits.
    MAX_TT = 512
    if T <= MAX_TT:
        tT = T                       # full dim -> exempt from the 8-sublane rule
    else:
        tT = MAX_TT
        MAX_TILE_BYTES = 12 << 20    # keep double-buffered feats well under VMEM
        while tB * tT * F * x.dtype.itemsize > MAX_TILE_BYTES and tT > 64:
            tT //= 2
    ragged = (T % tT) != 0
    chunk = 64

    nB = _cdiv(B, tB)
    nT = _cdiv(T, tT)

    # Tiny parameter tensors: bf16 weights for the MXU, f32 biases,
    # b2 and mean_vec folded into one vector. Zero padding of H/E lanes is
    # exact (padded lanes stay 0 and are sliced off).
    w1p = jnp.pad(w1.astype(jnp.bfloat16), ((0, 0), (0, Hp - H)))
    b1p = jnp.pad(b1.astype(jnp.float32).reshape(1, H), ((0, 0), (0, Hp - H)))
    w2p = jnp.pad(w2.astype(jnp.bfloat16), ((0, Hp - H), (0, Ep - E)))
    b2mp = jnp.pad((b2 - mean_vec).astype(jnp.float32).reshape(1, E),
                   ((0, 0), (0, Ep - E)))

    feats_block_bytes = tB * tT * F * x.dtype.itemsize
    vmem_limit = int(min(96 << 20, max(32 << 20, 2 * feats_block_bytes + (8 << 20))))

    def const(shape):  # grid-invariant block -> stays resident in VMEM
        return pl.BlockSpec(shape, lambda b, t: tuple(0 for _ in shape))

    out = pl.pallas_call(
        functools.partial(_embed_kernel, inv_t=1.0 / float(T), t_total=T,
                          t_tile=tT, ragged=ragged, chunk=chunk),
        out_shape=jax.ShapeDtypeStruct((nB * tB, Ep), jnp.float32),
        grid=(nB, nT),
        in_specs=[
            pl.BlockSpec((tB, tT, F), lambda b, t: (b, t, 0)),   # feats tile (f32, no pad)
            const((F, Hp)),                                      # w1 (bf16)
            const((1, Hp)),                                      # b1
            const((Hp, Ep)),                                     # w2 (bf16)
            const((1, Ep)),                                      # b2 - mean_vec
        ],
        out_specs=pl.BlockSpec((tB, Ep), lambda b, t: (b, 0)),
        scratch_shapes=[pltpu.VMEM((tB, F), jnp.float32)],
        compiler_params=pltpu.CompilerParams(
            dimension_semantics=("parallel", "arbitrary"),
            vmem_limit_bytes=vmem_limit,
        ),
    )(x, w1p, b1p, w2p, b2mp)

    return out[:B, :E]


def reference_forward(feats, w1, b1, w2, b2, mean_vec):
    # Same math, plain JAX, full f32.
    x = jnp.squeeze(feats, axis=1).astype(jnp.float32)
    pooled = jnp.mean(x, axis=1)
    h = jnp.maximum(pooled @ w1 + b1, 0.0)
    return h @ w2 + b2 - mean_vec


if __name__ == "__main__":
    # Small-but-realistic wespeaker-ish shapes: 80-dim fbank, 600 frames
    # (deliberately not a multiple of the 512-frame tile to exercise the
    # ragged-T mask and the multi-step temporal accumulation).
    B, T, F, H, E = 16, 600, 80, 256, 192

    key = jax.random.PRNGKey(0)
    k_feats, k_w1, k_b1, k_w2, k_b2, k_mean = jax.random.split(key, 6)

    feats = jax.random.normal(k_feats, (B, 1, T, F), dtype=jnp.float32)
    w1 = jax.random.normal(k_w1, (F, H), dtype=jnp.float32) * 0.1
    b1 = jax.random.normal(k_b1, (H,), dtype=jnp.float32) * 0.01
    w2 = jax.random.normal(k_w2, (H, E), dtype=jnp.float32) * 0.1
    b2 = jax.random.normal(k_b2, (E,), dtype=jnp.float32) * 0.01
    mean_vec = jax.random.normal(k_mean, (E,), dtype=jnp.float32) * 0.05

    out = model_forward(feats, w1, b1, w2, b2, mean_vec)
    out = jax.block_until_ready(out)

    ref = reference_forward(feats, w1, b1, w2, b2, mean_vec)
    assert out.shape == (B, E)
    assert jnp.allclose(out, ref, atol=2e-3, rtol=2e-3), "mismatch vs reference"

    print("KERNEL_OK")
</pallas_src>

<mosaic_0001>
module attributes {stable_mosaic.version = 11 : i64} {
  func.func @_embed_kernel(%arg0: i32, %arg1: i32, %arg2: memref<8x512x80xf32, #tpu.memory_space<vmem>>, %arg3: memref<80x256xbf16, #tpu.memory_space<vmem>>, %arg4: memref<1x256xf32, #tpu.memory_space<vmem>>, %arg5: memref<256x256xbf16, #tpu.memory_space<vmem>>, %arg6: memref<1x256xf32, #tpu.memory_space<vmem>>, %arg7: memref<8x256xf32, #tpu.memory_space<vmem>>, %arg8: memref<8x80xf32, #tpu.memory_space<vmem>>) attributes {dimension_semantics = [#tpu.dimension_semantics<parallel>, #tpu.dimension_semantics<arbitrary>], iteration_bounds = array<i64: 2, 2>, scalar_prefetch = 0 : i64, scratch_operands = 1 : i64, tpu.core_type = #tpu.core_type<tc>, window_params = [{transform_indices = @transform_0, window_bounds = array<i64: 8, 512, 80>}, {pipeline_mode = #tpu.pipeline_mode<synchronous>, transform_indices = @transform_1, window_bounds = array<i64: 80, 256>}, {pipeline_mode = #tpu.pipeline_mode<synchronous>, transform_indices = @transform_2, window_bounds = array<i64: 1, 256>}, {pipeline_mode = #tpu.pipeline_mode<synchronous>, transform_indices = @transform_3, window_bounds = array<i64: 256, 256>}, {pipeline_mode = #tpu.pipeline_mode<synchronous>, transform_indices = @transform_4, window_bounds = array<i64: 1, 256>}, {transform_indices = @transform_5, window_bounds = array<i64: 8, 256>}]} {
    %c0_i32 = arith.constant 0 : i32
    %0 = arith.cmpi eq, %arg1, %c0_i32 : i32
    %1 = arith.extui %0 : i1 to i32
    %c0_i32_0 = arith.constant 0 : i32
    %2 = arith.cmpi ne, %1, %c0_i32_0 : i32
    scf.if %2 {
      %cst_46 = arith.constant 0.000000e+00 : f32
      %132 = vector.broadcast %cst_46 : f32 to vector<8x80xf32>
      %c0_47 = arith.constant 0 : index
      %c0_48 = arith.constant 0 : index
      %133 = vector.load %arg8[%c0_47, %c0_48] : memref<8x80xf32, #tpu.memory_space<vmem>>, vector<8x80xf32>
      tpu.vector_store %arg8[%c0_47, %c0_48], %132 {strides = array<i32>} : memref<8x80xf32, #tpu.memory_space<vmem>>, vector<8x80xf32>,
    } else {
    }
    %c512_i32 = arith.constant 512 : i32
    %3 = arith.muli %arg1, %c512_i32 : i32
    %c600_i32 = arith.constant 600 : i32
    %4 = arith.subi %c600_i32, %3 : i32
    %cst = arith.constant 0.000000e+00 : f32
    %5 = vector.broadcast %cst : f32 to vector<8x80xf32>
    %c0_i32_1 = arith.constant 0 : i32
    %c64_i32 = arith.constant 64 : i32
    %6 = arith.muli %c0_i32_1, %c64_i32 : i32
    %7 = tpu.assume_multiple %6, 64 : i32
    %c0 = arith.constant 0 : index
    %8 = arith.index_cast %7 : i32 to index
    %c0_2 = arith.constant 0 : index
    %9 = vector.load %arg2[%c0, %8, %c0_2] : memref<8x512x80xf32, #tpu.memory_space<vmem>>, vector<8x64x80xf32>
    %10 = tpu.iota {dimensions = array<i32: 0>} : vector<64x80xi32>
    %11 = vector.broadcast %7 : i32 to vector<64x80xi32>
    %12 = arith.addi %10, %11 : vector<64x80xi32>
    %13 = vector.broadcast %4 : i32 to vector<64x80xi32>
    %14 = arith.cmpi slt, %12, %13 : vector<64x80xi32>
    %cst_3 = arith.constant 0.000000e+00 : f32
    %15 = vector.shape_cast %14 : vector<64x80xi1> to vector<1x64x80xi1>
    %16 = vector.broadcast %15 : vector<1x64x80xi1> to vector<8x64x80xi1>
    %17 = vector.broadcast %cst_3 : f32 to vector<8x64x80xf32>
    %18 = arith.select %16, %9, %17 : vector<8x64x80xi1>, vector<8x64x80xf32>
    %cst_4 = arith.constant dense<0.000000e+00> : vector<8x80xf32>
    %19 = vector.multi_reduction <add>, %18, %cst_4 [1] : vector<8x64x80xf32> to vector<8x80xf32>
    %20 = arith.addf %5, %19 : vector<8x80xf32>
    %c1_i32 = arith.constant 1 : i32
    %c64_i32_5 = arith.constant 64 : i32
    %21 = arith.muli %c1_i32, %c64_i32_5 : i32
    %22 = tpu.assume_multiple %21, 64 : i32
    %c0_6 = arith.constant 0 : index
    %23 = arith.index_cast %22 : i32 to index
    %c0_7 = arith.constant 0 : index
    %24 = vector.load %arg2[%c0_6, %23, %c0_7] : memref<8x512x80xf32, #tpu.memory_space<vmem>>, vector<8x64x80xf32>
    %25 = tpu.iota {dimensions = array<i32: 0>} : vector<64x80xi32>
    %26 = vector.broadcast %22 : i32 to vector<64x80xi32>
    %27 = arith.addi %25, %26 : vector<64x80xi32>
    %28 = vector.broadcast %4 : i32 to vector<64x80xi32>
    %29 = arith.cmpi slt, %27, %28 : vector<64x80xi32>
    %cst_8 = arith.constant 0.000000e+00 : f32
    %30 = vector.shape_cast %29 : vector<64x80xi1> to vector<1x64x80xi1>
    %31 = vector.broadcast %30 : vector<1x64x80xi1> to vector<8x64x80xi1>
    %32 = vector.broadcast %cst_8 : f32 to vector<8x64x80xf32>
    %33 = arith.select %31, %24, %32 : vector<8x64x80xi1>, vector<8x64x80xf32>
    %cst_9 = arith.constant dense<0.000000e+00> : vector<8x80xf32>
    %34 = vector.multi_reduction <add>, %33, %cst_9 [1] : vector<8x64x80xf32> to vector<8x80xf32>
    %35 = arith.addf %20, %34 : vector<8x80xf32>
    %c2_i32 = arith.constant 2 : i32
    %c64_i32_10 = arith.constant 64 : i32
    %36 = arith.muli %c2_i32, %c64_i32_10 : i32
    %37 = tpu.assume_multiple %36, 64 : i32
    %c0_11 = arith.constant 0 : index
    %38 = arith.index_cast %37 : i32 to index
    %c0_12 = arith.constant 0 : index
    %39 = vector.load %arg2[%c0_11, %38, %c0_12] : memref<8x512x80xf32, #tpu.memory_space<vmem>>, vector<8x64x80xf32>
    %40 = tpu.iota {dimensions = array<i32: 0>} : vector<64x80xi32>
    %41 = vector.broadcast %37 : i32 to vector<64x80xi32>
    %42 = arith.addi %40, %41 : vector<64x80xi32>
    %43 = vector.broadcast %4 : i32 to vector<64x80xi32>
    %44 = arith.cmpi slt, %42, %43 : vector<64x80xi32>
    %cst_13 = arith.constant 0.000000e+00 : f32
    %45 = vector.shape_cast %44 : vector<64x80xi1> to vector<1x64x80xi1>
    %46 = vector.broadcast %45 : vector<1x64x80xi1> to vector<8x64x80xi1>
    %47 = vector.broadcast %cst_13 : f32 to vector<8x64x80xf32>
    %48 = arith.select %46, %39, %47 : vector<8x64x80xi1>, vector<8x64x80xf32>
    %cst_14 = arith.constant dense<0.000000e+00> : vector<8x80xf32>
    %49 = vector.multi_reduction <add>, %48, %cst_14 [1] : vector<8x64x80xf32> to vector<8x80xf32>
    %50 = arith.addf %35, %49 : vector<8x80xf32>
    %c3_i32 = arith.constant 3 : i32
    %c64_i32_15 = arith.constant 64 : i32
    %51 = arith.muli %c3_i32, %c64_i32_15 : i32
    %52 = tpu.assume_multiple %51, 64 : i32
    %c0_16 = arith.constant 0 : index
    %53 = arith.index_cast %52 : i32 to index
    %c0_17 = arith.constant 0 : index
    %54 = vector.load %arg2[%c0_16, %53, %c0_17] : memref<8x512x80xf32, #tpu.memory_space<vmem>>, vector<8x64x80xf32>
    %55 = tpu.iota {dimensions = array<i32: 0>} : vector<64x80xi32>
    %56 = vector.broadcast %52 : i32 to vector<64x80xi32>
    %57 = arith.addi %55, %56 : vector<64x80xi32>
    %58 = vector.broadcast %4 : i32 to vector<64x80xi32>
    %59 = arith.cmpi slt, %57, %58 : vector<64x80xi32>
    %cst_18 = arith.constant 0.000000e+00 : f32
    %60 = vector.shape_cast %59 : vector<64x80xi1> to vector<1x64x80xi1>
    %61 = vector.broadcast %60 : vector<1x64x80xi1> to vector<8x64x80xi1>
    %62 = vector.broadcast %cst_18 : f32 to vector<8x64x80xf32>
    %63 = arith.select %61, %54, %62 : vector<8x64x80xi1>, vector<8x64x80xf32>
    %cst_19 = arith.constant dense<0.000000e+00> : vector<8x80xf32>
    %64 = vector.multi_reduction <add>, %63, %cst_19 [1] : vector<8x64x80xf32> to vector<8x80xf32>
    %65 = arith.addf %50, %64 : vector<8x80xf32>
    %c4_i32 = arith.constant 4 : i32
    %c64_i32_20 = arith.constant 64 : i32
    %66 = arith.muli %c4_i32, %c64_i32_20 : i32
    %67 = tpu.assume_multiple %66, 64 : i32
    %c0_21 = arith.constant 0 : index
    %68 = arith.index_cast %67 : i32 to index
    %c0_22 = arith.constant 0 : index
    %69 = vector.load %arg2[%c0_21, %68, %c0_22] : memref<8x512x80xf32, #tpu.memory_space<vmem>>, vector<8x64x80xf32>
    %70 = tpu.iota {dimensions = array<i32: 0>} : vector<64x80xi32>
    %71 = vector.broadcast %67 : i32 to vector<64x80xi32>
    %72 = arith.addi %70, %71 : vector<64x80xi32>
    %73 = vector.broadcast %4 : i32 to vector<64x80xi32>
    %74 = arith.cmpi slt, %72, %73 : vector<64x80xi32>
    %cst_23 = arith.constant 0.000000e+00 : f32
    %75 = vector.shape_cast %74 : vector<64x80xi1> to vector<1x64x80xi1>
    %76 = vector.broadcast %75 : vector<1x64x80xi1> to vector<8x64x80xi1>
    %77 = vector.broadcast %cst_23 : f32 to vector<8x64x80xf32>
    %78 = arith.select %76, %69, %77 : vector<8x64x80xi1>, vector<8x64x80xf32>
    %cst_24 = arith.constant dense<0.000000e+00> : vector<8x80xf32>
    %79 = vector.multi_reduction <add>, %78, %cst_24 [1] : vector<8x64x80xf32> to vector<8x80xf32>
    %80 = arith.addf %65, %79 : vector<8x80xf32>
    %c5_i32 = arith.constant 5 : i32
    %c64_i32_25 = arith.constant 64 : i32
    %81 = arith.muli %c5_i32, %c64_i32_25 : i32
    %82 = tpu.assume_multiple %81, 64 : i32
    %c0_26 = arith.constant 0 : index
    %83 = arith.index_cast %82 : i32 to index
    %c0_27 = arith.constant 0 : index
    %84 = vector.load %arg2[%c0_26, %83, %c0_27] : memref<8x512x80xf32, #tpu.memory_space<vmem>>, vector<8x64x80xf32>
    %85 = tpu.iota {dimensions = array<i32: 0>} : vector<64x80xi32>
    %86 = vector.broadcast %82 : i32 to vector<64x80xi32>
    %87 = arith.addi %85, %86 : vector<64x80xi32>
    %88 = vector.broadcast %4 : i32 to vector<64x80xi32>
    %89 = arith.cmpi slt, %87, %88 : vector<64x80xi32>
    %cst_28 = arith.constant 0.000000e+00 : f32
    %90 = vector.shape_cast %89 : vector<64x80xi1> to vector<1x64x80xi1>
    %91 = vector.broadcast %90 : vector<1x64x80xi1> to vector<8x64x80xi1>
    %92 = vector.broadcast %cst_28 : f32 to vector<8x64x80xf32>
    %93 = arith.select %91, %84, %92 : vector<8x64x80xi1>, vector<8x64x80xf32>
    %cst_29 = arith.constant dense<0.000000e+00> : vector<8x80xf32>
    %94 = vector.multi_reduction <add>, %93, %cst_29 [1] : vector<8x64x80xf32> to vector<8x80xf32>
    %95 = arith.addf %80, %94 : vector<8x80xf32>
    %c6_i32 = arith.constant 6 : i32
    %c64_i32_30 = arith.constant 64 : i32
    %96 = arith.muli %c6_i32, %c64_i32_30 : i32
    %97 = tpu.assume_multiple %96, 64 : i32
    %c0_31 = arith.constant 0 : index
    %98 = arith.index_cast %97 : i32 to index
    %c0_32 = arith.constant 0 : index
    %99 = vector.load %arg2[%c0_31, %98, %c0_32] : memref<8x512x80xf32, #tpu.memory_space<vmem>>, vector<8x64x80xf32>
    %100 = tpu.iota {dimensions = array<i32: 0>} : vector<64x80xi32>
    %101 = vector.broadcast %97 : i32 to vector<64x80xi32>
    %102 = arith.addi %100, %101 : vector<64x80xi32>
    %103 = vector.broadcast %4 : i32 to vector<64x80xi32>
    %104 = arith.cmpi slt, %102, %103 : vector<64x80xi32>
    %cst_33 = arith.constant 0.000000e+00 : f32
    %105 = vector.shape_cast %104 : vector<64x80xi1> to vector<1x64x80xi1>
    %106 = vector.broadcast %105 : vector<1x64x80xi1> to vector<8x64x80xi1>
    %107 = vector.broadcast %cst_33 : f32 to vector<8x64x80xf32>
    %108 = arith.select %106, %99, %107 : vector<8x64x80xi1>, vector<8x64x80xf32>
    %cst_34 = arith.constant dense<0.000000e+00> : vector<8x80xf32>
    %109 = vector.multi_reduction <add>, %108, %cst_34 [1] : vector<8x64x80xf32> to vector<8x80xf32>
    %110 = arith.addf %95, %109 : vector<8x80xf32>
    %c7_i32 = arith.constant 7 : i32
    %c64_i32_35 = arith.constant 64 : i32
    %111 = arith.muli %c7_i32, %c64_i32_35 : i32
    %112 = tpu.assume_multiple %111, 64 : i32
    %c0_36 = arith.constant 0 : index
    %113 = arith.index_cast %112 : i32 to index
    %c0_37 = arith.constant 0 : index
    %114 = vector.load %arg2[%c0_36, %113, %c0_37] : memref<8x512x80xf32, #tpu.memory_space<vmem>>, vector<8x64x80xf32>
    %115 = tpu.iota {dimensions = array<i32: 0>} : vector<64x80xi32>
    %116 = vector.broadcast %112 : i32 to vector<64x80xi32>
    %117 = arith.addi %115, %116 : vector<64x80xi32>
    %118 = vector.broadcast %4 : i32 to vector<64x80xi32>
    %119 = arith.cmpi slt, %117, %118 : vector<64x80xi32>
    %cst_38 = arith.constant 0.000000e+00 : f32
    %120 = vector.shape_cast %119 : vector<64x80xi1> to vector<1x64x80xi1>
    %121 = vector.broadcast %120 : vector<1x64x80xi1> to vector<8x64x80xi1>
    %122 = vector.broadcast %cst_38 : f32 to vector<8x64x80xf32>
    %123 = arith.select %121, %114, %122 : vector<8x64x80xi1>, vector<8x64x80xf32>
    %cst_39 = arith.constant dense<0.000000e+00> : vector<8x80xf32>
    %124 = vector.multi_reduction <add>, %123, %cst_39 [1] : vector<8x64x80xf32> to vector<8x80xf32>
    %125 = arith.addf %110, %124 : vector<8x80xf32>
    %c8_i32 = arith.constant 8 : i32
    %c0_40 = arith.constant 0 : index
    %c0_41 = arith.constant 0 : index
    %126 = vector.load %arg8[%c0_40, %c0_41] : memref<8x80xf32, #tpu.memory_space<vmem>>, vector<8x80xf32>
    %127 = arith.addf %126, %125 : vector<8x80xf32>
    %c0_42 = arith.constant 0 : index
    %c0_43 = arith.constant 0 : index
    %128 = vector.load %arg8[%c0_42, %c0_43] : memref<8x80xf32, #tpu.memory_space<vmem>>, vector<8x80xf32>
    tpu.vector_store %arg8[%c0_42, %c0_43], %127 {strides = array<i32>} : memref<8x80xf32, #tpu.memory_space<vmem>>, vector<8x80xf32>,
    %c1_i32_44 = arith.constant 1 : i32
    %129 = arith.cmpi eq, %arg1, %c1_i32_44 : i32
    %130 = arith.extui %129 : i1 to i32
    %c0_i32_45 = arith.constant 0 : i32
    %131 = arith.cmpi ne, %130, %c0_i32_45 : i32
    scf.if %131 {
      %c0_46 = arith.constant 0 : index
      %c0_47 = arith.constant 0 : index
      %132 = vector.load %arg8[%c0_46, %c0_47] : memref<8x80xf32, #tpu.memory_space<vmem>>, vector<8x80xf32>
      %cst_48 = arith.constant 0.00166666671 : f32
      %133 = vector.broadcast %cst_48 : f32 to vector<8x80xf32>
      %134 = arith.mulf %132, %133 : vector<8x80xf32>
      %135 = arith.truncf %134 : vector<8x80xf32> to vector<8x80xbf16>
      %c0_49 = arith.constant 0 : index
      %c0_50 = arith.constant 0 : index
      %136 = vector.load %arg3[%c0_49, %c0_50] : memref<80x256xbf16, #tpu.memory_space<vmem>>, vector<80x256xbf16>
      %cst_51 = arith.constant dense<0.000000e+00> : vector<8x256xf32>
      %137 = tpu.matmul %135, %136, %cst_51 {dimension_numbers = #tpu.dot_dimension_numbers<[1], [0], [0], [1], [0, 0, 1, 1], [], []>} : vector<8x80xbf16>, vector<80x256xbf16>, vector<8x256xf32> -> vector<8x256xf32>
      %c0_52 = arith.constant 0 : index
      %c0_53 = arith.constant 0 : index
      %138 = vector.load %arg4[%c0_52, %c0_53] : memref<1x256xf32, #tpu.memory_space<vmem>>, vector<1x256xf32>
      %139 = vector.broadcast %138 : vector<1x256xf32> to vector<8x256xf32>
      %140 = arith.addf %137, %139 : vector<8x256xf32>
      %cst_54 = arith.constant 0.000000e+00 : f32
      %141 = vector.broadcast %cst_54 : f32 to vector<8x256xf32>
      %142 = arith.maximumf %140, %141 : vector<8x256xf32>
      %143 = arith.truncf %142 : vector<8x256xf32> to vector<8x256xbf16>
      %c0_55 = arith.constant 0 : index
      %c0_56 = arith.constant 0 : index
      %144 = vector.load %arg5[%c0_55, %c0_56] : memref<256x256xbf16, #tpu.memory_space<vmem>>, vector<256x256xbf16>
      %cst_57 = arith.constant dense<0.000000e+00> : vector<8x256xf32>
      %145 = tpu.matmul %143, %144, %cst_57 {dimension_numbers = #tpu.dot_dimension_numbers<[1], [0], [0], [1], [0, 0, 1, 1], [], []>} : vector<8x256xbf16>, vector<256x256xbf16>, vector<8x256xf32> -> vector<8x256xf32>
      %c0_58 = arith.constant 0 : index
      %c0_59 = arith.constant 0 : index
      %146 = vector.load %arg6[%c0_58, %c0_59] : memref<1x256xf32, #tpu.memory_space<vmem>>, vector<1x256xf32>
      %147 = vector.broadcast %146 : vector<1x256xf32> to vector<8x256xf32>
      %148 = arith.addf %145, %147 : vector<8x256xf32>
      %c0_60 = arith.constant 0 : index
      %c0_61 = arith.constant 0 : index
      %149 = vector.load %arg7[%c0_60, %c0_61] : memref<8x256xf32, #tpu.memory_space<vmem>>, vector<8x256xf32>
      tpu.vector_store %arg7[%c0_60, %c0_61], %148 {strides = array<i32>} : memref<8x256xf32, #tpu.memory_space<vmem>>, vector<8x256xf32>,
    } else {
    }
    return
  }
  func.func @transform_0(%arg0: i32, %arg1: i32) -> (i32, i32, i32) {
    %c0_i32 = arith.constant 0 : i32
    %c0_i32_0 = arith.constant 0 : i32
    return %arg0, %arg1, %c0_i32 : i32, i32, i32
  }
  func.func @transform_1(%arg0: i32, %arg1: i32) -> (i32, i32) {
    %c0_i32 = arith.constant 0 : i32
    %c0_i32_0 = arith.constant 0 : i32
    %c0_i32_1 = arith.constant 0 : i32
    return %c0_i32, %c0_i32_0 : i32, i32
  }
  func.func @transform_2(%arg0: i32, %arg1: i32) -> (i32, i32) {
    %c0_i32 = arith.constant 0 : i32
    %c0_i32_0 = arith.constant 0 : i32
    %c0_i32_1 = arith.constant 0 : i32
    return %c0_i32, %c0_i32_0 : i32, i32
  }
  func.func @transform_3(%arg0: i32, %arg1: i32) -> (i32, i32) {
    %c0_i32 = arith.constant 0 : i32
    %c0_i32_0 = arith.constant 0 : i32
    %c0_i32_1 = arith.constant 0 : i32
    return %c0_i32, %c0_i32_0 : i32, i32
  }
  func.func @transform_4(%arg0: i32, %arg1: i32) -> (i32, i32) {
    %c0_i32 = arith.constant 0 : i32
    %c0_i32_0 = arith.constant 0 : i32
    %c0_i32_1 = arith.constant 0 : i32
    return %c0_i32, %c0_i32_0 : i32, i32
  }
  func.func @transform_5(%arg0: i32, %arg1: i32) -> (i32, i32) {
    %c0_i32 = arith.constant 0 : i32
    %c0_i32_0 = arith.constant 0 : i32
    return %arg0, %c0_i32 : i32, i32
  }
}

</mosaic_0001>

<llo_original>
// kernel: tpu_custom_call.1
$region0: #{tpu_custom_call.1}
  #allocation0 [shape = 'u32[]', space=smem, size = 0x4, offset = 0x4, fixed_abs, tag = 'smem constant byte address 0x4 - core index']
  #allocation1 [shape = 'u32[144,128]{1,0:T(1,128)}', space=vmem, size = 0x12000, scoped, tag = 'internal scratch']
  #allocation2 [shape = 'f32[8,80]{1,0:T(8,128)}', space=vmem, size = 0x1000, scoped, tag = 'scratch operand']
  %s0 = inlined_call_operand.vmem [shape: f32[16,600,80], index: 0, kind: input, shape index: {}]
  %s1 = inlined_call_operand.vmem [shape: bf16[80,256], index: 1, kind: input, shape index: {}]
  %s2 = inlined_call_operand.vmem [shape: f32[1,256], index: 2, kind: input, shape index: {}]
  %s3 = inlined_call_operand.vmem [shape: bf16[256,256], index: 3, kind: input, shape index: {}]
  %s4 = inlined_call_operand.vmem [shape: f32[1,256], index: 4, kind: input, shape index: {}]
  %s5 = inlined_call_operand.hbm [shape: f32[16,256], index: 5, kind: output, shape index: {}]
  %s6 = sld [smem:[#allocation0]]
  $region113: #{tpu_custom_call.1} parent=0
    _
  %s8 = ssub.s32 1, %s6
  %s9 = scalar_select 0, %s8, %s6
  $region1: #{tpu_custom_call.1} parent=0
    #allocation3 [shape = 'u8[4194304]{0}', space=vmem, size = 0x400000, scoped, tag = 'input window, operand 0']
    #allocation4 [shape = 'u8[16384]{0}', space=vmem, size = 0x4000, scoped, tag = 'output window, operand 0']
    #allocation5 [shape = 's32[2]{0}', space=sflag, size = 0x8, scoped, tag = 'scoped memory for tpu_custom_call.1']
    %10 = vsyncpa [#allocation5], 0
    %s11 = scalar_lea.sflag [#allocation5], 1
    %12 = vsyncpa %s11, 0
    loop: start=0, step=1, limit=6
    $region2: #{tpu_custom_call.1} parent=1 // loop_pre_header
      _
    $region3: #{tpu_custom_call.1} parent=1 // loop_header
      %s14 = sphi 0, %s18
      %p15 = scmp.ge.s32.totalorder %s14, 6
      %s21 = sphi 0, %s33
      %s22 = sphi 0, %s29
      %s23 = sphi 0, %s21
      %s24 = sphi 0, %s22
      %s25 = sphi 0, %s23
      %s26 = sphi 0, %s24
      %s38 = sphi 0, %s40
      %s41 = sphi 0, %s38
      %s42 = sphi 0, %s41
      %s58 = sphi 0, %s42
      %s62 = sphi 0, %s62
      %s64 = sphi 0, %s62
      %s65 = sphi 0, %s64
      %s79 = sphi 0, %s65
      %s83 = sphi 0, %s83
      %s85 = sphi 0, %s83
      %s86 = sphi 0, %s85
      %s100 = sphi 0, %s86
      %s104 = sphi 0, %s104
      %s106 = sphi 0, %s104
      %s107 = sphi 0, %s106
      %s121 = sphi 0, %s107
      %s125 = sphi 0, %s125
      %s127 = sphi 0, %s125
      %s128 = sphi 0, %s127
      %s142 = sphi 0, %s128
      %s148 = sphi 0, %s150
      %s151 = sphi 0, %s148
      %s152 = sphi 0, %s151
      %s168 = sphi 0, %s152
    $region4: #{tpu_custom_call.1} parent=1 // loop_header_branch
      %17 = sbr.rel (%p15) target = $region8
    $region5: #{tpu_custom_call.1} parent=1 // loop_body
      %s19 = ssub.s32 %s14, 1
      %s20 = ssub.s32 %s14, 2
      %s27 = sadd.s32 1, %s22
      %p28 = scmp.ge.s32.totalorder %s27, 2
      %s29 = scalar_select %p28, 0, %s27
      %s30 = sadd.s32 1, %s21
      %s31 = scalar_select %p28, %s30, %s21
      %p32 = scmp.ge.s32.totalorder %s31, 2
      %s33 = scalar_select %p32, 0, %s31
      %s34 = ssub.s32 %s21, %s33
      %s35 = ssub.s32 %s22, %s29
      %s36 = sor.u32 %s34, %s35
      %p37 = scmp.eq.s32.totalorder %s36, 0
      %s39 = sadd.s32 %s38, 1
      %s40 = scalar_select %p37, %s38, %s39
      %p43 = pneg %p37
      %p44 = scmp.eq.s32.totalorder %s14, 3
      %p45 = por %p43, %p44
      %p46 = scmp.ne.s32.totalorder %s38, %s41
      %p47 = scmp.eq.s32.totalorder %s14, 0
      %p48 = por %p46, %p47
      %p49 = scmp.ne.s32.totalorder %s38, %s41
      %p50 = scmp.eq.s32.totalorder %s19, 3
      %p51 = por %p49, %p50
      %p52 = scmp.ne.s32.totalorder %s41, %s42
      %p53 = scmp.eq.s32.totalorder %s19, 0
      %p54 = por %p52, %p53
      %p55 = scmp.ne.s32.totalorder %s41, %s42
      %p56 = scmp.eq.s32.totalorder %s20, 3
      %p57 = por %p55, %p56
      %p59 = scmp.ne.s32.totalorder %s42, %s58
      %p60 = scmp.eq.s32.totalorder %s20, 0
      %p61 = por %p59, %p60
      %s63 = sadd.s32 %s62, 1
      %p66 = scmp.eq.s32.totalorder %s14, 3
      %p67 = scmp.ne.s32.totalorder %s62, %s64
      %p68 = scmp.eq.s32.totalorder %s14, 0
      %p69 = por %p67, %p68
      %p70 = scmp.ne.s32.totalorder %s62, %s64
      %p71 = scmp.eq.s32.totalorder %s19, 3
      %p72 = por %p70, %p71
      %p73 = scmp.ne.s32.totalorder %s64, %s65
      %p74 = scmp.eq.s32.totalorder %s19, 0
      %p75 = por %p73, %p74
      %p76 = scmp.ne.s32.totalorder %s64, %s65
      %p77 = scmp.eq.s32.totalorder %s20, 3
      %p78 = por %p76, %p77
      %p80 = scmp.ne.s32.totalorder %s65, %s79
      %p81 = scmp.eq.s32.totalorder %s20, 0
      %p82 = por %p80, %p81
      %s84 = sadd.s32 %s83, 1
      %p87 = scmp.eq.s32.totalorder %s14, 3
      %p88 = scmp.ne.s32.totalorder %s83, %s85
      %p89 = scmp.eq.s32.totalorder %s14, 0
      %p90 = por %p88, %p89
      %p91 = scmp.ne.s32.totalorder %s83, %s85
      %p92 = scmp.eq.s32.totalorder %s19, 3
      %p93 = por %p91, %p92
      %p94 = scmp.ne.s32.totalorder %s85, %s86
      %p95 = scmp.eq.s32.totalorder %s19, 0
      %p96 = por %p94, %p95
      %p97 = scmp.ne.s32.totalorder %s85, %s86
      %p98 = scmp.eq.s32.totalorder %s20, 3
      %p99 = por %p97, %p98
      %p101 = scmp.ne.s32.totalorder %s86, %s100
      %p102 = scmp.eq.s32.totalorder %s20, 0
      %p103 = por %p101, %p102
      %s105 = sadd.s32 %s104, 1
      %p108 = scmp.eq.s32.totalorder %s14, 3
      %p109 = scmp.ne.s32.totalorder %s104, %s106
      %p110 = scmp.eq.s32.totalorder %s14, 0
      %p111 = por %p109, %p110
      %p112 = scmp.ne.s32.totalorder %s104, %s106
      %p113 = scmp.eq.s32.totalorder %s19, 3
      %p114 = por %p112, %p113
      %p115 = scmp.ne.s32.totalorder %s106, %s107
      %p116 = scmp.eq.s32.totalorder %s19, 0
      %p117 = por %p115, %p116
      %p118 = scmp.ne.s32.totalorder %s106, %s107
      %p119 = scmp.eq.s32.totalorder %s20, 3
      %p120 = por %p118, %p119
      %p122 = scmp.ne.s32.totalorder %s107, %s121
      %p123 = scmp.eq.s32.totalorder %s20, 0
      %p124 = por %p122, %p123
      %s126 = sadd.s32 %s125, 1
      %p129 = scmp.eq.s32.totalorder %s14, 3
      %p130 = scmp.ne.s32.totalorder %s125, %s127
      %p131 = scmp.eq.s32.totalorder %s14, 0
      %p132 = por %p130, %p131
      %p133 = scmp.ne.s32.totalorder %s125, %s127
      %p134 = scmp.eq.s32.totalorder %s19, 3
      %p135 = por %p133, %p134
      %p136 = scmp.ne.s32.totalorder %s127, %s128
      %p137 = scmp.eq.s32.totalorder %s19, 0
      %p138 = por %p136, %p137
      %p139 = scmp.ne.s32.totalorder %s127, %s128
      %p140 = scmp.eq.s32.totalorder %s20, 3
      %p141 = por %p139, %p140
      %p143 = scmp.ne.s32.totalorder %s128, %s142
      %p144 = scmp.eq.s32.totalorder %s20, 0
      %p145 = por %p143, %p144
      %s146 = ssub.s32 %s21, %s33
      %p147 = scmp.eq.s32.totalorder %s146, 0
      %s149 = sadd.s32 %s148, 1
      %s150 = scalar_select %p147, %s148, %s149
      %p153 = pneg %p147
      %p154 = scmp.eq.s32.totalorder %s14, 3
      %p155 = por %p153, %p154
      %p156 = scmp.ne.s32.totalorder %s148, %s151
      %p157 = scmp.eq.s32.totalorder %s14, 0
      %p158 = por %p156, %p157
      %p159 = scmp.ne.s32.totalorder %s148, %s151
      %p160 = scmp.eq.s32.totalorder %s19, 3
      %p161 = por %p159, %p160
      %p162 = scmp.ne.s32.totalorder %s151, %s152
      %p163 = scmp.eq.s32.totalorder %s19, 0
      %p164 = por %p162, %p163
      %p165 = scmp.ne.s32.totalorder %s151, %s152
      %p166 = scmp.eq.s32.totalorder %s20, 3
      %p167 = por %p165, %p166
      %p169 = scmp.ne.s32.totalorder %s152, %s168
      %p170 = scmp.eq.s32.totalorder %s20, 0
      %p171 = por %p169, %p170
      %p172 = scmp.le.s32.totalorder 1, %s14
      %p173 = scmp.lt.s32.totalorder %s14, 5
      %p174 = pnand %p172, %p173
      %p175 = pneg %p174
      // Predicated region
      $region9: #{tpu_custom_call.1} parent=5 // pred_check
        _
      $region10: #{tpu_custom_call.1} parent=5 // pred_check_branch
        %177 = sbr.rel (%p174) target = $region12
      $region11: #{tpu_custom_call.1} parent=5 // pred_region
        %s178 = ssub.s32 %s14, 1
        // Predicated region
        $region13: #{tpu_custom_call.1} parent=11 // pred_check
          %p179 = pneg %p75
        $region14: #{tpu_custom_call.1} parent=11 // pred_check_branch
          %181 = sbr.rel (%p179) target = $region16
        $region15: #{tpu_custom_call.1} parent=11 // pred_region
          _
        $region16: #{tpu_custom_call.1} parent=11 // pred_fallthru
          _
        // Predicated region
        $region17: #{tpu_custom_call.1} parent=11 // pred_check
          %p182 = pneg %p96
        $region18: #{tpu_custom_call.1} parent=11 // pred_check_branch
          %184 = sbr.rel (%p182) target = $region20
        $region19: #{tpu_custom_call.1} parent=11 // pred_region
          _
        $region20: #{tpu_custom_call.1} parent=11 // pred_fallthru
          _
        // Predicated region
        $region21: #{tpu_custom_call.1} parent=11 // pred_check
          %p185 = pneg %p117
        $region22: #{tpu_custom_call.1} parent=11 // pred_check_branch
          %187 = sbr.rel (%p185) target = $region24
        $region23: #{tpu_custom_call.1} parent=11 // pred_region
          _
        $region24: #{tpu_custom_call.1} parent=11 // pred_fallthru
          _
        // Predicated region
        $region25: #{tpu_custom_call.1} parent=11 // pred_check
          %p188 = pneg %p138
        $region26: #{tpu_custom_call.1} parent=11 // pred_check_branch
          %190 = sbr.rel (%p188) target = $region28
        $region27: #{tpu_custom_call.1} parent=11 // pred_region
          _
        $region28: #{tpu_custom_call.1} parent=11 // pred_fallthru
          _
      $region12: #{tpu_custom_call.1} parent=5 // pred_fallthru
        _
      %p191 = scmp.lt.s32.totalorder %s14, 4
      // Predicated region
      $region29: #{tpu_custom_call.1} parent=5 // pred_check
        %p192 = pneg %p191
      $region30: #{tpu_custom_call.1} parent=5 // pred_check_branch
        %194 = sbr.rel (%p192) target = $region32
      $region31: #{tpu_custom_call.1} parent=5 // pred_region
        // Predicated region
        $region33: #{tpu_custom_call.1} parent=31 // pred_check
          %p195 = pneg %p48
        $region34: #{tpu_custom_call.1} parent=31 // pred_check_branch
          %197 = sbr.rel (%p195) target = $region36
        $region35: #{tpu_custom_call.1} parent=31 // pred_region
          %s198 = sand.u32 %s38, 1
          %s199 = sand.u32 %s38, 1
          %s200 = smul.addr %s199, 4096
          %s201 = scalar_lea.vmem [#allocation3], %s200
          %s202 = smul.u32 8, %s21
          %s203 = smul.u32 64, %s22
          %s204 = ssub.s32 75, %s203
          %p205 = scmp.lt.s32.totalorder %s204, 64
          %s206 = scalar_select %p205, %s204, 64
          %s207 = smul.u32 1024, %s206
          %p208 = scmp.ne.s32.totalorder 0, %s207
          %s209 = smul.addr %s202, 75
          %s210 = sadd.s32 %s203, %s209
          %s211 = smul.addr %s210, 8
          %s212 = scalar_lea.vmem %s0, %s211
          // Predicated region
          $region37: #{tpu_custom_call.1} parent=35 // pred_check
            %p213 = pneg %p208
          $region38: #{tpu_custom_call.1} parent=35 // pred_check_branch
            %215 = sbr.rel (%p213) target = $region40
          $region39: #{tpu_custom_call.1} parent=35 // pred_region
            // Predicated region
            $region41: #{tpu_custom_call.1} parent=39 // pred_check
              _
            $region42: #{tpu_custom_call.1} parent=39 // pred_check_branch
              %217 = sbr.rel (0) target = $region44
            $region43: #{tpu_custom_call.1} parent=39 // pred_region
              // Predicated region
              $region63: #{tpu_custom_call.1} parent=43 // pred_check
                _
              $region64: #{tpu_custom_call.1} parent=43 // pred_check_branch
                %406 = sbr.rel (0) target = $region66
              $region65: #{tpu_custom_call.1} parent=43 // pred_region
                %s407 = sshrl.u32 %s206, 3
                // While loop
                $region67: #{tpu_custom_call.1} parent=65 // loop_pre_header
                  _
                $region68: #{tpu_custom_call.1} parent=65 // loop_header
                  %s409 = sphi 0, %s411
                  %p410 = scmp.ge.s32.totalorder %s409, %s407
                  %s414 = sphi 0, %s547
                  %s415 = sphi %s212, %s550
                  %s416 = sphi %s201, %s551
                $region69: #{tpu_custom_call.1} parent=65 // loop_header_branch
                  %413 = sbr.rel (%p410) target = $region73
                $region70: #{tpu_custom_call.1} parent=65 // loop_body
                  %v417 = vld [vmem:[%s415] sm:$0xff]
                  %418 = vst [vmem:[%s416] sm:$0xff] %v417
                  %v419 = vld [vmem:[%s415 + $0x8] sm:$0xff]
                  %420 = vst [vmem:[%s416 + $0x8] sm:$0xff] %v419
                  %v421 = vld [vmem:[%s415 + $0x10] sm:$0xff]
                  %422 = vst [vmem:[%s416 + $0x10] sm:$0xff] %v421
                  %v423 = vld [vmem:[%s415 + $0x18] sm:$0xff]
                  %424 = vst [vmem:[%s416 + $0x18] sm:$0xff] %v423
                  %v425 = vld [vmem:[%s415 + $0x20] sm:$0xff]
                  %426 = vst [vmem:[%s416 + $0x20] sm:$0xff] %v425
                  %v427 = vld [vmem:[%s415 + $0x28] sm:$0xff]
                  %428 = vst [vmem:[%s416 + $0x28] sm:$0xff] %v427
                  %v429 = vld [vmem:[%s415 + $0x30] sm:$0xff]
                  %430 = vst [vmem:[%s416 + $0x30] sm:$0xff] %v429
                  %v431 = vld [vmem:[%s415 + $0x38] sm:$0xff]
                  %432 = vst [vmem:[%s416 + $0x38] sm:$0xff] %v431
                  %v433 = vld [vmem:[%s415 + $0x258] sm:$0xff]
                  %434 = vst [vmem:[%s416 + $0x200] sm:$0xff] %v433
                  %v435 = vld [vmem:[%s415 + $0x260] sm:$0xff]
                  %436 = vst [vmem:[%s416 + $0x208] sm:$0xff] %v435
                  %v437 = vld [vmem:[%s415 + $0x268] sm:$0xff]
                  %438 = vst [vmem:[%s416 + $0x210] sm:$0xff] %v437
                  %v439 = vld [vmem:[%s415 + $0x270] sm:$0xff]
                  %440 = vst [vmem:[%s416 + $0x218] sm:$0xff] %v439
                  %v441 = vld [vmem:[%s415 + $0x278] sm:$0xff]
                  %442 = vst [vmem:[%s416 + $0x220] sm:$0xff] %v441
                  %v443 = vld [vmem:[%s415 + $0x280] sm:$0xff]
                  %444 = vst [vmem:[%s416 + $0x228] sm:$0xff] %v443
                  %v445 = vld [vmem:[%s415 + $0x288] sm:$0xff]
                  %446 = vst [vmem:[%s416 + $0x230] sm:$0xff] %v445
                  %v447 = vld [vmem:[%s415 + $0x290] sm:$0xff]
                  %448 = vst [vmem:[%s416 + $0x238] sm:$0xff] %v447
                  %v449 = vld [vmem:[%s415 + $0x4b0] sm:$0xff]
                  %450 = vst [vmem:[%s416 + $0x400] sm:$0xff] %v449
                  %v451 = vld [vmem:[%s415 + $0x4b8] sm:$0xff]
                  %452 = vst [vmem:[%s416 + $0x408] sm:$0xff] %v451
                  %v453 = vld [vmem:[%s415 + $0x4c0] sm:$0xff]
                  %454 = vst [vmem:[%s416 + $0x410] sm:$0xff] %v453
                  %v455 = vld [vmem:[%s415 + $0x4c8] sm:$0xff]
                  %456 = vst [vmem:[%s416 + $0x418] sm:$0xff] %v455
                  %v457 = vld [vmem:[%s415 + $0x4d0] sm:$0xff]
                  %458 = vst [vmem:[%s416 + $0x420] sm:$0xff] %v457
                  %v459 = vld [vmem:[%s415 + $0x4d8] sm:$0xff]
                  %460 = vst [vmem:[%s416 + $0x428] sm:$0xff] %v459
                  %v461 = vld [vmem:[%s415 + $0x4e0] sm:$0xff]
                  %462 = vst [vmem:[%s416 + $0x430] sm:$0xff] %v461
                  %v463 = vld [vmem:[%s415 + $0x4e8] sm:$0xff]
                  %464 = vst [vmem:[%s416 + $0x438] sm:$0xff] %v463
                  %v465 = vld [vmem:[%s415 + $0x708] sm:$0xff]
                  %466 = vst [vmem:[%s416 + $0x600] sm:$0xff] %v465
                  %v467 = vld [vmem:[%s415 + $0x710] sm:$0xff]
                  %468 = vst [vmem:[%s416 + $0x608] sm:$0xff] %v467
                  %v469 = vld [vmem:[%s415 + $0x718] sm:$0xff]
                  %470 = vst [vmem:[%s416 + $0x610] sm:$0xff] %v469
                  %v471 = vld [vmem:[%s415 + $0x720] sm:$0xff]
                  %472 = vst [vmem:[%s416 + $0x618] sm:$0xff] %v471
                  %v473 = vld [vmem:[%s415 + $0x728] sm:$0xff]
                  %474 = vst [vmem:[%s416 + $0x620] sm:$0xff] %v473
                  %v475 = vld [vmem:[%s415 + $0x730] sm:$0xff]
                  %476 = vst [vmem:[%s416 + $0x628] sm:$0xff] %v475
                  %v477 = vld [vmem:[%s415 + $0x738] sm:$0xff]
                  %478 = vst [vmem:[%s416 + $0x630] sm:$0xff] %v477
                  %v479 = vld [vmem:[%s415 + $0x740] sm:$0xff]
                  %480 = vst [vmem:[%s416 + $0x638] sm:$0xff] %v479
                  %v481 = vld [vmem:[%s415 + $0x960] sm:$0xff]
                  %482 = vst [vmem:[%s416 + $0x800] sm:$0xff] %v481
                  %v483 = vld [vmem:[%s415 + $0x968] sm:$0xff]
                  %484 = vst [vmem:[%s416 + $0x808] sm:$0xff] %v483
                  %v485 = vld [vmem:[%s415 + $0x970] sm:$0xff]
                  %486 = vst [vmem:[%s416 + $0x810] sm:$0xff] %v485
                  %v487 = vld [vmem:[%s415 + $0x978] sm:$0xff]
                  %488 = vst [vmem:[%s416 + $0x818] sm:$0xff] %v487
                  %v489 = vld [vmem:[%s415 + $0x980] sm:$0xff]
                  %490 = vst [vmem:[%s416 + $0x820] sm:$0xff] %v489
                  %v491 = vld [vmem:[%s415 + $0x988] sm:$0xff]
                  %492 = vst [vmem:[%s416 + $0x828] sm:$0xff] %v491
                  %v493 = vld [vmem:[%s415 + $0x990] sm:$0xff]
                  %494 = vst [vmem:[%s416 + $0x830] sm:$0xff] %v493
                  %v495 = vld [vmem:[%s415 + $0x998] sm:$0xff]
                  %496 = vst [vmem:[%s416 + $0x838] sm:$0xff] %v495
                  %v497 = vld [vmem:[%s415 + $0xbb8] sm:$0xff]
                  %498 = vst [vmem:[%s416 + $0xa00] sm:$0xff] %v497
                  %v499 = vld [vmem:[%s415 + $0xbc0] sm:$0xff]
                  %500 = vst [vmem:[%s416 + $0xa08] sm:$0xff] %v499
                  %v501 = vld [vmem:[%s415 + $0xbc8] sm:$0xff]
                  %502 = vst [vmem:[%s416 + $0xa10] sm:$0xff] %v501
                  %v503 = vld [vmem:[%s415 + $0xbd0] sm:$0xff]
                  %504 = vst [vmem:[%s416 + $0xa18] sm:$0xff] %v503
                  %v505 = vld [vmem:[%s415 + $0xbd8] sm:$0xff]
                  %506 = vst [vmem:[%s416 + $0xa20] sm:$0xff] %v505
                  %v507 = vld [vmem:[%s415 + $0xbe0] sm:$0xff]
                  %508 = vst [vmem:[%s416 + $0xa28] sm:$0xff] %v507
                  %v509 = vld [vmem:[%s415 + $0xbe8] sm:$0xff]
                  %510 = vst [vmem:[%s416 + $0xa30] sm:$0xff] %v509
                  %v511 = vld [vmem:[%s415 + $0xbf0] sm:$0xff]
                  %512 = vst [vmem:[%s416 + $0xa38] sm:$0xff] %v511
                  %v513 = vld [vmem:[%s415 + $0xe10] sm:$0xff]
                  %514 = vst [vmem:[%s416 + $0xc00] sm:$0xff] %v513
                  %v515 = vld [vmem:[%s415 + $0xe18] sm:$0xff]
                  %516 = vst [vmem:[%s416 + $0xc08] sm:$0xff] %v515
                  %v517 = vld [vmem:[%s415 + $0xe20] sm:$0xff]
                  %518 = vst [vmem:[%s416 + $0xc10] sm:$0xff] %v517
                  %v519 = vld [vmem:[%s415 + $0xe28] sm:$0xff]
                  %520 = vst [vmem:[%s416 + $0xc18] sm:$0xff] %v519
                  %v521 = vld [vmem:[%s415 + $0xe30] sm:$0xff]
                  %522 = vst [vmem:[%s416 + $0xc20] sm:$0xff] %v521
                  %v523 = vld [vmem:[%s415 + $0xe38] sm:$0xff]
                  %524 = vst [vmem:[%s416 + $0xc28] sm:$0xff] %v523
                  %v525 = vld [vmem:[%s415 + $0xe40] sm:$0xff]
                  %526 = vst [vmem:[%s416 + $0xc30] sm:$0xff] %v525
                  %v527 = vld [vmem:[%s415 + $0xe48] sm:$0xff]
                  %528 = vst [vmem:[%s416 + $0xc38] sm:$0xff] %v527
                  %v529 = vld [vmem:[%s415 + $0x1068] sm:$0xff]
                  %530 = vst [vmem:[%s416 + $0xe00] sm:$0xff] %v529
                  %v531 = vld [vmem:[%s415 + $0x1070] sm:$0xff]
                  %532 = vst [vmem:[%s416 + $0xe08] sm:$0xff] %v531
                  %v533 = vld [vmem:[%s415 + $0x1078] sm:$0xff]
                  %534 = vst [vmem:[%s416 + $0xe10] sm:$0xff] %v533
                  %v535 = vld [vmem:[%s415 + $0x1080] sm:$0xff]
                  %536 = vst [vmem:[%s416 + $0xe18] sm:$0xff] %v535
                  %v537 = vld [vmem:[%s415 + $0x1088] sm:$0xff]
                  %538 = vst [vmem:[%s416 + $0xe20] sm:$0xff] %v537
                  %v539 = vld [vmem:[%s415 + $0x1090] sm:$0xff]
                  %540 = vst [vmem:[%s416 + $0xe28] sm:$0xff] %v539
                  %v541 = vld [vmem:[%s415 + $0x1098] sm:$0xff]
                  %542 = vst [vmem:[%s416 + $0xe30] sm:$0xff] %v541
                  %v543 = vld [vmem:[%s415 + $0x10a0] sm:$0xff]
                  %544 = vst [vmem:[%s416 + $0xe38] sm:$0xff] %v543
                  %s545 = sadd.s32 1, %s414
                  %p546 = scmp.ge.s32.totalorder %s545, %s407
                  %s547 = scalar_select %p546, 0, %s545
                  %s548 = smul.u32 %s547, 64
                  %s549 = smul.u32 %s547, 64
                  %s550 = scalar_lea.vmem %s212, %s548
                  %s551 = scalar_lea.vmem %s201, %s549 [#allocation3]
                $region71: #{tpu_custom_call.1} parent=65 // loop_footer
                  %s411 = sadd.s32 %s409, 1
                $region72: #{tpu_custom_call.1} parent=65 // loop_footer_branch
                  %408 = sbr.rel target = $region68
                $region73: #{tpu_custom_call.1} parent=65 // loop_exit
                  _
                %s552 = sshrl.u32 %s206, 3
                %s553 = sand.u32 %s206, 7
                %s554 = smul.u32 %s552, 8
                %s555 = smul.u32 8, %s554
                %s556 = scalar_lea.vmem %s212, %s555
                %s557 = smul.u32 8, %s554
                %s558 = scalar_lea.vmem %s201, %s557 [#allocation3]
                // While loop
                $region74: #{tpu_custom_call.1} parent=65 // loop_pre_header
                  _
                $region75: #{tpu_custom_call.1} parent=65 // loop_header
                  %s560 = sphi 0, %s562
                  %p561 = scmp.ge.s32.totalorder %s560, %s553
                  %s565 = sphi 0, %s586
                  %s566 = sphi %s556, %s589
                  %s567 = sphi %s558, %s590
                $region76: #{tpu_custom_call.1} parent=65 // loop_header_branch
                  %564 = sbr.rel (%p561) target = $region80
                $region77: #{tpu_custom_call.1} parent=65 // loop_body
                  %v568 = vld [vmem:[%s566] sm:$0xff]
                  %569 = vst [vmem:[%s567] sm:$0xff] %v568
                  %v570 = vld [vmem:[%s566 + $0x258] sm:$0xff]
                  %571 = vst [vmem:[%s567 + $0x200] sm:$0xff] %v570
                  %v572 = vld [vmem:[%s566 + $0x4b0] sm:$0xff]
                  %573 = vst [vmem:[%s567 + $0x400] sm:$0xff] %v572
                  %v574 = vld [vmem:[%s566 + $0x708] sm:$0xff]
                  %575 = vst [vmem:[%s567 + $0x600] sm:$0xff] %v574
                  %v576 = vld [vmem:[%s566 + $0x960] sm:$0xff]
                  %577 = vst [vmem:[%s567 + $0x800] sm:$0xff] %v576
                  %v578 = vld [vmem:[%s566 + $0xbb8] sm:$0xff]
                  %579 = vst [vmem:[%s567 + $0xa00] sm:$0xff] %v578
                  %v580 = vld [vmem:[%s566 + $0xe10] sm:$0xff]
                  %581 = vst [vmem:[%s567 + $0xc00] sm:$0xff] %v580
                  %v582 = vld [vmem:[%s566 + $0x1068] sm:$0xff]
                  %583 = vst [vmem:[%s567 + $0xe00] sm:$0xff] %v582
                  %s584 = sadd.s32 1, %s565
                  %p585 = scmp.ge.s32.totalorder %s584, %s553
                  %s586 = scalar_select %p585, 0, %s584
                  %s587 = smul.u32 %s586, 8
                  %s588 = smul.u32 %s586, 8
                  %s589 = scalar_lea.vmem %s556, %s587
                  %s590 = scalar_lea.vmem %s558, %s588 [#allocation3]
                $region78: #{tpu_custom_call.1} parent=65 // loop_footer
                  %s562 = sadd.s32 %s560, 1
                $region79: #{tpu_custom_call.1} parent=65 // loop_footer_branch
                  %559 = sbr.rel target = $region75
                $region80: #{tpu_custom_call.1} parent=65 // loop_exit
                  _
              $region66: #{tpu_custom_call.1} parent=43 // pred_fallthru
                _
              // Predicated region
              $region81: #{tpu_custom_call.1} parent=43 // pred_check
                _
              $region82: #{tpu_custom_call.1} parent=43 // pred_check_branch
                %592 = sbr.rel target = $region84
              $region83: #{tpu_custom_call.1} parent=43 // pred_region
                _
              $region84: #{tpu_custom_call.1} parent=43 // pred_fallthru
                _
            $region44: #{tpu_custom_call.1} parent=39 // pred_fallthru
              _
            // Predicated region
            $region45: #{tpu_custom_call.1} parent=39 // pred_check
              _
            $region46: #{tpu_custom_call.1} parent=39 // pred_check_branch
              %219 = sbr.rel target = $region48
            $region47: #{tpu_custom_call.1} parent=39 // pred_region
              %s221 = sshrl.u32 %s206, 3
              // While loop
              $region49: #{tpu_custom_call.1} parent=47 // loop_pre_header
                _
              $region50: #{tpu_custom_call.1} parent=47 // loop_header
                %s223 = sphi 0, %s225
                %p224 = scmp.ge.s32.totalorder %s223, %s221
                %s228 = sphi 0, %s361
                %s229 = sphi %s212, %s364
                %s230 = sphi %s201, %s365
              $region51: #{tpu_custom_call.1} parent=47 // loop_header_branch
                %227 = sbr.rel (%p224) target = $region55
              $region52: #{tpu_custom_call.1} parent=47 // loop_body
                %v231 = vld [vmem:[%s229] sm:$0xff]
                %232 = vst [vmem:[%s230] sm:$0xff] %v231
                %v233 = vld [vmem:[%s229 + $0x8] sm:$0xff]
                %234 = vst [vmem:[%s230 + $0x8] sm:$0xff] %v233
                %v235 = vld [vmem:[%s229 + $0x10] sm:$0xff]
                %236 = vst [vmem:[%s230 + $0x10] sm:$0xff] %v235
                %v237 = vld [vmem:[%s229 + $0x18] sm:$0xff]
                %238 = vst [vmem:[%s230 + $0x18] sm:$0xff] %v237
                %v239 = vld [vmem:[%s229 + $0x20] sm:$0xff]
                %240 = vst [vmem:[%s230 + $0x20] sm:$0xff] %v239
                %v241 = vld [vmem:[%s229 + $0x28] sm:$0xff]
                %242 = vst [vmem:[%s230 + $0x28] sm:$0xff] %v241
                %v243 = vld [vmem:[%s229 + $0x30] sm:$0xff]
                %244 = vst [vmem:[%s230 + $0x30] sm:$0xff] %v243
                %v245 = vld [vmem:[%s229 + $0x38] sm:$0xff]
                %246 = vst [vmem:[%s230 + $0x38] sm:$0xff] %v245
                %v247 = vld [vmem:[%s229 + $0x258] sm:$0xff]
                %248 = vst [vmem:[%s230 + $0x200] sm:$0xff] %v247
                %v249 = vld [vmem:[%s229 + $0x260] sm:$0xff]
                %250 = vst [vmem:[%s230 + $0x208] sm:$0xff] %v249
                %v251 = vld [vmem:[%s229 + $0x268] sm:$0xff]
                %252 = vst [vmem:[%s230 + $0x210] sm:$0xff] %v251
                %v253 = vld [vmem:[%s229 + $0x270] sm:$0xff]
                %254 = vst [vmem:[%s230 + $0x218] sm:$0xff] %v253
                %v255 = vld [vmem:[%s229 + $0x278] sm:$0xff]
                %256 = vst [vmem:[%s230 + $0x220] sm:$0xff] %v255
                %v257 = vld [vmem:[%s229 + $0x280] sm:$0xff]
                %258 = vst [vmem:[%s230 + $0x228] sm:$0xff] %v257
                %v259 = vld [vmem:[%s229 + $0x288] sm:$0xff]
                %260 = vst [vmem:[%s230 + $0x230] sm:$0xff] %v259
                %v261 = vld [vmem:[%s229 + $0x290] sm:$0xff]
                %262 = vst [vmem:[%s230 + $0x238] sm:$0xff] %v261
                %v263 = vld [vmem:[%s229 + $0x4b0] sm:$0xff]
                %264 = vst [vmem:[%s230 + $0x400] sm:$0xff] %v263
                %v265 = vld [vmem:[%s229 + $0x4b8] sm:$0xff]
                %266 = vst [vmem:[%s230 + $0x408] sm:$0xff] %v265
                %v267 = vld [vmem:[%s229 + $0x4c0] sm:$0xff]
                %268 = vst [vmem:[%s230 + $0x410] sm:$0xff] %v267
                %v269 = vld [vmem:[%s229 + $0x4c8] sm:$0xff]
                %270 = vst [vmem:[%s230 + $0x418] sm:$0xff] %v269
                %v271 = vld [vmem:[%s229 + $0x4d0] sm:$0xff]
                %272 = vst [vmem:[%s230 + $0x420] sm:$0xff] %v271
                %v273 = vld [vmem:[%s229 + $0x4d8] sm:$0xff]
                %274 = vst [vmem:[%s230 + $0x428] sm:$0xff] %v273
                %v275 = vld [vmem:[%s229 + $0x4e0] sm:$0xff]
                %276 = vst [vmem:[%s230 + $0x430] sm:$0xff] %v275
                %v277 = vld [vmem:[%s229 + $0x4e8] sm:$0xff]
                %278 = vst [vmem:[%s230 + $0x438] sm:$0xff] %v277
                %v279 = vld [vmem:[%s229 + $0x708] sm:$0xff]
                %280 = vst [vmem:[%s230 + $0x600] sm:$0xff] %v279
                %v281 = vld [vmem:[%s229 + $0x710] sm:$0xff]
                %282 = vst [vmem:[%s230 + $0x608] sm:$0xff] %v281
                %v283 = vld [vmem:[%s229 + $0x718] sm:$0xff]
                %284 = vst [vmem:[%s230 + $0x610] sm:$0xff] %v283
                %v285 = vld [vmem:[%s229 + $0x720] sm:$0xff]
                %286 = vst [vmem:[%s230 + $0x618] sm:$0xff] %v285
                %v287 = vld [vmem:[%s229 + $0x728] sm:$0xff]
                %288 = vst [vmem:[%s230 + $0x620] sm:$0xff] %v287
                %v289 = vld [vmem:[%s229 + $0x730] sm:$0xff]
                %290 = vst [vmem:[%s230 + $0x628] sm:$0xff] %v289
                %v291 = vld [vmem:[%s229 + $0x738] sm:$0xff]
                %292 = vst [vmem:[%s230 + $0x630] sm:$0xff] %v291
                %v293 = vld [vmem:[%s229 + $0x740] sm:$0xff]
                %294 = vst [vmem:[%s230 + $0x638] sm:$0xff] %v293
                %v295 = vld [vmem:[%s229 + $0x960] sm:$0xff]
                %296 = vst [vmem:[%s230 + $0x800] sm:$0xff] %v295
                %v297 = vld [vmem:[%s229 + $0x968] sm:$0xff]
                %298 = vst [vmem:[%s230 + $0x808] sm:$0xff] %v297
                %v299 = vld [vmem:[%s229 + $0x970] sm:$0xff]
                %300 = vst [vmem:[%s230 + $0x810] sm:$0xff] %v299
                %v301 = vld [vmem:[%s229 + $0x978] sm:$0xff]
                %302 = vst [vmem:[%s230 + $0x818] sm:$0xff] %v301
                %v303 = vld [vmem:[%s229 + $0x980] sm:$0xff]
                %304 = vst [vmem:[%s230 + $0x820] sm:$0xff] %v303
                %v305 = vld [vmem:[%s229 + $0x988] sm:$0xff]
                %306 = vst [vmem:[%s230 + $0x828] sm:$0xff] %v305
                %v307 = vld [vmem:[%s229 + $0x990] sm:$0xff]
                %308 = vst [vmem:[%s230 + $0x830] sm:$0xff] %v307
                %v309 = vld [vmem:[%s229 + $0x998] sm:$0xff]
                %310 = vst [vmem:[%s230 + $0x838] sm:$0xff] %v309
                %v311 = vld [vmem:[%s229 + $0xbb8] sm:$0xff]
                %312 = vst [vmem:[%s230 + $0xa00] sm:$0xff] %v311
                %v313 = vld [vmem:[%s229 + $0xbc0] sm:$0xff]
                %314 = vst [vmem:[%s230 + $0xa08] sm:$0xff] %v313
                %v315 = vld [vmem:[%s229 + $0xbc8] sm:$0xff]
                %316 = vst [vmem:[%s230 + $0xa10] sm:$0xff] %v315
                %v317 = vld [vmem:[%s229 + $0xbd0] sm:$0xff]
                %318 = vst [vmem:[%s230 + $0xa18] sm:$0xff] %v317
                %v319 = vld [vmem:[%s229 + $0xbd8] sm:$0xff]
                %320 = vst [vmem:[%s230 + $0xa20] sm:$0xff] %v319
                %v321 = vld [vmem:[%s229 + $0xbe0] sm:$0xff]
                %322 = vst [vmem:[%s230 + $0xa28] sm:$0xff] %v321
                %v323 = vld [vmem:[%s229 + $0xbe8] sm:$0xff]
                %324 = vst [vmem:[%s230 + $0xa30] sm:$0xff] %v323
                %v325 = vld [vmem:[%s229 + $0xbf0] sm:$0xff]
                %326 = vst [vmem:[%s230 + $0xa38] sm:$0xff] %v325
                %v327 = vld [vmem:[%s229 + $0xe10] sm:$0xff]
                %328 = vst [vmem:[%s230 + $0xc00] sm:$0xff] %v327
                %v329 = vld [vmem:[%s229 + $0xe18] sm:$0xff]
                %330 = vst [vmem:[%s230 + $0xc08] sm:$0xff] %v329
                %v331 = vld [vmem:[%s229 + $0xe20] sm:$0xff]
                %332 = vst [vmem:[%s230 + $0xc10] sm:$0xff] %v331
                %v333 = vld [vmem:[%s229 + $0xe28] sm:$0xff]
                %334 = vst [vmem:[%s230 + $0xc18] sm:$0xff] %v333
                %v335 = vld [vmem:[%s229 + $0xe30] sm:$0xff]
                %336 = vst [vmem:[%s230 + $0xc20] sm:$0xff] %v335
                %v337 = vld [vmem:[%s229 + $0xe38] sm:$0xff]
                %338 = vst [vmem:[%s230 + $0xc28] sm:$0xff] %v337
                %v339 = vld [vmem:[%s229 + $0xe40] sm:$0xff]
                %340 = vst [vmem:[%s230 + $0xc30] sm:$0xff] %v339
                %v341 = vld [vmem:[%s229 + $0xe48] sm:$0xff]
                %342 = vst [vmem:[%s230 + $0xc38] sm:$0xff] %v341
                %v343 = vld [vmem:[%s229 + $0x1068] sm:$0xff]
                %344 = vst [vmem:[%s230 + $0xe00] sm:$0xff] %v343
                %v345 = vld [vmem:[%s229 + $0x1070] sm:$0xff]
                %346 = vst [vmem:[%s230 + $0xe08] sm:$0xff] %v345
                %v347 = vld [vmem:[%s229 + $0x1078] sm:$0xff]
                %348 = vst [vmem:[%s230 + $0xe10] sm:$0xff] %v347
                %v349 = vld [vmem:[%s229 + $0x1080] sm:$0xff]
                %350 = vst [vmem:[%s230 + $0xe18] sm:$0xff] %v349
                %v351 = vld [vmem:[%s229 + $0x1088] sm:$0xff]
                %352 = vst [vmem:[%s230 + $0xe20] sm:$0xff] %v351
                %v353 = vld [vmem:[%s229 + $0x1090] sm:$0xff]
                %354 = vst [vmem:[%s230 + $0xe28] sm:$0xff] %v353
                %v355 = vld [vmem:[%s229 + $0x1098] sm:$0xff]
                %356 = vst [vmem:[%s230 + $0xe30] sm:$0xff] %v355
                %v357 = vld [vmem:[%s229 + $0x10a0] sm:$0xff]
                %358 = vst [vmem:[%s230 + $0xe38] sm:$0xff] %v357
                %s359 = sadd.s32 1, %s228
                %p360 = scmp.ge.s32.totalorder %s359, %s221
                %s361 = scalar_select %p360, 0, %s359
                %s362 = smul.u32 %s361, 64
                %s363 = smul.u32 %s361, 64
                %s364 = scalar_lea.vmem %s212, %s362
                %s365 = scalar_lea.vmem %s201, %s363 [#allocation3]
              $region53: #{tpu_custom_call.1} parent=47 // loop_footer
                %s225 = sadd.s32 %s223, 1
              $region54: #{tpu_custom_call.1} parent=47 // loop_footer_branch
                %222 = sbr.rel target = $region50
              $region55: #{tpu_custom_call.1} parent=47 // loop_exit
                _
              %s366 = sshrl.u32 %s206, 3
              %s367 = sand.u32 %s206, 7
              %s368 = smul.u32 %s366, 8
              %s369 = smul.u32 8, %s368
              %s370 = scalar_lea.vmem %s212, %s369
              %s371 = smul.u32 8, %s368
              %s372 = scalar_lea.vmem %s201, %s371 [#allocation3]
              // While loop
              $region56: #{tpu_custom_call.1} parent=47 // loop_pre_header
                _
              $region57: #{tpu_custom_call.1} parent=47 // loop_header
                %s374 = sphi 0, %s376
                %p375 = scmp.ge.s32.totalorder %s374, %s367
                %s379 = sphi 0, %s400
                %s380 = sphi %s370, %s403
                %s381 = sphi %s372, %s404
              $region58: #{tpu_custom_call.1} parent=47 // loop_header_branch
                %378 = sbr.rel (%p375) target = $region62
              $region59: #{tpu_custom_call.1} parent=47 // loop_body
                %v382 = vld [vmem:[%s380] sm:$0xff]
                %383 = vst [vmem:[%s381] sm:$0xff] %v382
                %v384 = vld [vmem:[%s380 + $0x258] sm:$0xff]
                %385 = vst [vmem:[%s381 + $0x200] sm:$0xff] %v384
                %v386 = vld [vmem:[%s380 + $0x4b0] sm:$0xff]
                %387 = vst [vmem:[%s381 + $0x400] sm:$0xff] %v386
                %v388 = vld [vmem:[%s380 + $0x708] sm:$0xff]
                %389 = vst [vmem:[%s381 + $0x600] sm:$0xff] %v388
                %v390 = vld [vmem:[%s380 + $0x960] sm:$0xff]
                %391 = vst [vmem:[%s381 + $0x800] sm:$0xff] %v390
                %v392 = vld [vmem:[%s380 + $0xbb8] sm:$0xff]
                %393 = vst [vmem:[%s381 + $0xa00] sm:$0xff] %v392
                %v394 = vld [vmem:[%s380 + $0xe10] sm:$0xff]
                %395 = vst [vmem:[%s381 + $0xc00] sm:$0xff] %v394
                %v396 = vld [vmem:[%s380 + $0x1068] sm:$0xff]
                %397 = vst [vmem:[%s381 + $0xe00] sm:$0xff] %v396
                %s398 = sadd.s32 1, %s379
                %p399 = scmp.ge.s32.totalorder %s398, %s367
                %s400 = scalar_select %p399, 0, %s398
                %s401 = smul.u32 %s400, 8
                %s402 = smul.u32 %s400, 8
                %s403 = scalar_lea.vmem %s370, %s401
                %s404 = scalar_lea.vmem %s372, %s402 [#allocation3]
              $region60: #{tpu_custom_call.1} parent=47 // loop_footer
                %s376 = sadd.s32 %s374, 1
              $region61: #{tpu_custom_call.1} parent=47 // loop_footer_branch
                %373 = sbr.rel target = $region57
              $region62: #{tpu_custom_call.1} parent=47 // loop_exit
                _
            $region48: #{tpu_custom_call.1} parent=39 // pred_fallthru
              _
          $region40: #{tpu_custom_call.1} parent=35 // pred_fallthru
            _
          %593 = vnop
        $region36: #{tpu_custom_call.1} parent=31 // pred_fallthru
          _
      $region32: #{tpu_custom_call.1} parent=5 // pred_fallthru
        _
      %p594 = scmp.le.s32.totalorder 1, %s14
      %p595 = scmp.lt.s32.totalorder %s14, 5
      %p596 = pnand %p594, %p595
      %p597 = pneg %p596
      // Predicated region
      $region85: #{tpu_custom_call.1} parent=5 // pred_check
        _
      $region86: #{tpu_custom_call.1} parent=5 // pred_check_branch
        %599 = sbr.rel (%p596) target = $region88
      $region87: #{tpu_custom_call.1} parent=5 // pred_region
        %s600 = ssub.s32 %s14, 1
        %s601 = sand.u32 %s41, 1
        %s602 = sand.u32 %s41, 1
        %s603 = smul.addr %s602, 4096
        %s604 = scalar_lea.vmem [#allocation3], %s603
        // Predicated region
        $region89: #{tpu_custom_call.1} parent=87 // pred_check
          %p605 = pneg %p54
        $region90: #{tpu_custom_call.1} parent=87 // pred_check_branch
          %607 = sbr.rel (%p605) target = $region92
        $region91: #{tpu_custom_call.1} parent=87 // pred_region
          _
        $region92: #{tpu_custom_call.1} parent=87 // pred_fallthru
          _
        %s608 = sand.u32 %s41, 1
        %s609 = sand.u32 %s41, 1
        %s610 = smul.addr %s609, 4096
        %s611 = scalar_lea.vmem [#allocation3], %s610
        %p612 = pneg %p54
        %p613 = pneg %p51
        %p614 = pneg %p75
        %p615 = pneg %p72
        %p616 = pneg %p96
        %p617 = pneg %p93
        %p618 = pneg %p117
        %p619 = pneg %p114
        %p620 = pneg %p138
        %p621 = pneg %p135
        %p622 = pneg %p164
        %p623 = pneg %p161
        %s624 = sand.u32 %s151, 1
        %s625 = scalar_lea.sflag [#allocation5], %s624
        %s626 = sand.u32 %s151, 1
        %s627 = smul.addr %s626, 16
        %s628 = scalar_lea.vmem [#allocation4], %s627
        %s629 = smul.u32 8, %s23
        %s630 = smul.u32 64, %s24
        %s631 = ssub.s32 75, %s630
        %p632 = scmp.lt.s32.totalorder %s631, 64
        %s633 = scalar_select %p632, %s631, 64
        %s634 = smul.u32 1024, %s633
        %p636 = scmp.eq.s32.totalorder %s24, 0
        // Predicated region
        $region93: #{tpu_custom_call.1} parent=87 // pred_check
          %p637 = pneg %p636
        $region94: #{tpu_custom_call.1} parent=87 // pred_check_branch
          %639 = sbr.rel (%p637) target = $region96
        $region95: #{tpu_custom_call.1} parent=87 // pred_region
          %vm640 = vcmask 654336
          %641 = vst.msk [vmem:[#allocation2] sm:$0xff] %vm640, 0.0
        $region96: #{tpu_custom_call.1} parent=87 // pred_fallthru
          _
        %s642 = smul.u32 %s24, 512
        %s643 = ssub.s32 600, %s642
        %v644 = vld [vmem:[%s604] sm:$0xff]
        %v645 = vld [vmem:[%s604 + $0x8] sm:$0xff]
        %v646 = vld [vmem:[%s604 + $0x10] sm:$0xff]
        %v647 = vld [vmem:[%s604 + $0x18] sm:$0xff]
        %v648 = vld [vmem:[%s604 + $0x20] sm:$0xff]
        %v649 = vld [vmem:[%s604 + $0x28] sm:$0xff]
        %v650 = vld [vmem:[%s604 + $0x30] sm:$0xff]
        %v651 = vld [vmem:[%s604 + $0x38] sm:$0xff]
        %v652 = vld [vmem:[%s604 + $0x200] sm:$0xff]
        %v653 = vld [vmem:[%s604 + $0x208] sm:$0xff]
        %v654 = vld [vmem:[%s604 + $0x210] sm:$0xff]
        %v655 = vld [vmem:[%s604 + $0x218] sm:$0xff]
        %v656 = vld [vmem:[%s604 + $0x220] sm:$0xff]
        %v657 = vld [vmem:[%s604 + $0x228] sm:$0xff]
        %v658 = vld [vmem:[%s604 + $0x230] sm:$0xff]
        %v659 = vld [vmem:[%s604 + $0x238] sm:$0xff]
        %v660 = vld [vmem:[%s604 + $0x400] sm:$0xff]
        %v661 = vld [vmem:[%s604 + $0x408] sm:$0xff]
        %v662 = vld [vmem:[%s604 + $0x410] sm:$0xff]
        %v663 = vld [vmem:[%s604 + $0x418] sm:$0xff]
        %v664 = vld [vmem:[%s604 + $0x420] sm:$0xff]
        %v665 = vld [vmem:[%s604 + $0x428] sm:$0xff]
        %v666 = vld [vmem:[%s604 + $0x430] sm:$0xff]
        %v667 = vld [vmem:[%s604 + $0x438] sm:$0xff]
        %v668 = vld [vmem:[%s604 + $0x600] sm:$0xff]
        %v669 = vld [vmem:[%s604 + $0x608] sm:$0xff]
        %v670 = vld [vmem:[%s604 + $0x610] sm:$0xff]
        %v671 = vld [vmem:[%s604 + $0x618] sm:$0xff]
        %v672 = vld [vmem:[%s604 + $0x620] sm:$0xff]
        %v673 = vld [vmem:[%s604 + $0x628] sm:$0xff]
        %v674 = vld [vmem:[%s604 + $0x630] sm:$0xff]
        %v675 = vld [vmem:[%s604 + $0x638] sm:$0xff]
        %v676 = vld [vmem:[%s604 + $0x800] sm:$0xff]
        %v677 = vld [vmem:[%s604 + $0x808] sm:$0xff]
        %v678 = vld [vmem:[%s604 + $0x810] sm:$0xff]
        %v679 = vld [vmem:[%s604 + $0x818] sm:$0xff]
        %v680 = vld [vmem:[%s604 + $0x820] sm:$0xff]
        %v681 = vld [vmem:[%s604 + $0x828] sm:$0xff]
        %v682 = vld [vmem:[%s604 + $0x830] sm:$0xff]
        %v683 = vld [vmem:[%s604 + $0x838] sm:$0xff]
        %v684 = vld [vmem:[%s604 + $0xa00] sm:$0xff]
        %v685 = vld [vmem:[%s604 + $0xa08] sm:$0xff]
        %v686 = vld [vmem:[%s604 + $0xa10] sm:$0xff]
        %v687 = vld [vmem:[%s604 + $0xa18] sm:$0xff]
        %v688 = vld [vmem:[%s604 + $0xa20] sm:$0xff]
        %v689 = vld [vmem:[%s604 + $0xa28] sm:$0xff]
        %v690 = vld [vmem:[%s604 + $0xa30] sm:$0xff]
        %v691 = vld [vmem:[%s604 + $0xa38] sm:$0xff]
        %v692 = vld [vmem:[%s604 + $0xc00] sm:$0xff]
        %v693 = vld [vmem:[%s604 + $0xc08] sm:$0xff]
        %v694 = vld [vmem:[%s604 + $0xc10] sm:$0xff]
        %v695 = vld [vmem:[%s604 + $0xc18] sm:$0xff]
        %v696 = vld [vmem:[%s604 + $0xc20] sm:$0xff]
        %v697 = vld [vmem:[%s604 + $0xc28] sm:$0xff]
        %v698 = vld [vmem:[%s604 + $0xc30] sm:$0xff]
        %v699 = vld [vmem:[%s604 + $0xc38] sm:$0xff]
        %v700 = vld [vmem:[%s604 + $0xe00] sm:$0xff]
        %v701 = vld [vmem:[%s604 + $0xe08] sm:$0xff]
        %v702 = vld [vmem:[%s604 + $0xe10] sm:$0xff]
        %v703 = vld [vmem:[%s604 + $0xe18] sm:$0xff]
        %v704 = vld [vmem:[%s604 + $0xe20] sm:$0xff]
        %v705 = vld [vmem:[%s604 + $0xe28] sm:$0xff]
        %v706 = vld [vmem:[%s604 + $0xe30] sm:$0xff]
        %v707 = vld [vmem:[%s604 + $0xe38] sm:$0xff]
        %v708 = vlaneseq
        %v709 = vshrl.u32 %v708, 7
        %v710 = vadd.s32 %v709, 8
        %v711 = vadd.s32 %v709, 16
        %v712 = vadd.s32 %v709, 24
        %v713 = vadd.s32 %v709, 32
        %v714 = vadd.s32 %v709, 40
        %v715 = vadd.s32 %v709, 48
        %v716 = vadd.s32 %v709, 56
        %v717 = vstv 0
        %v718 = vadd.s32 %v709, %v717
        %v719 = vadd.s32 %v710, %v717
        %v720 = vadd.s32 %v711, %v717
        %v721 = vadd.s32 %v712, %v717
        %v722 = vadd.s32 %v713, %v717
        %v723 = vadd.s32 %v714, %v717
        %v724 = vadd.s32 %v715, %v717
        %v725 = vadd.s32 %v716, %v717
        %v726 = vstv %s643
        %vm727 = vcmp.lt.s32.totalorder %v718, %v726
        %vm728 = vcmp.lt.s32.totalorder %v719, %v726
        %vm729 = vcmp.lt.s32.totalorder %v720, %v726
        %vm730 = vcmp.lt.s32.totalorder %v721, %v726
        %vm731 = vcmp.lt.s32.totalorder %v722, %v726
        %vm732 = vcmp.lt.s32.totalorder %v723, %v726
        %vm733 = vcmp.lt.s32.totalorder %v724, %v726
        %vm734 = vcmp.lt.s32.totalorder %v725, %v726
        %v735 = vsel %vm727, 1, 0
        %v736 = vsel %vm728, 1, 0
        %v737 = vsel %vm729, 1, 0
        %v738 = vsel %vm730, 1, 0
        %v739 = vsel %vm731, 1, 0
        %v740 = vsel %vm732, 1, 0
        %v741 = vsel %vm733, 1, 0
        %v742 = vsel %vm734, 1, 0
        %vm743 = vcmp.eq.s32.totalorder %v735, 1
        %vm744 = vcmp.eq.s32.totalorder %v736, 1
        %vm745 = vcmp.eq.s32.totalorder %v737, 1
        %vm746 = vcmp.eq.s32.totalorder %v738, 1
        %vm747 = vcmp.eq.s32.totalorder %v739, 1
        %vm748 = vcmp.eq.s32.totalorder %v740, 1
        %vm749 = vcmp.eq.s32.totalorder %v741, 1
        %vm750 = vcmp.eq.s32.totalorder %v742, 1
        %v751 = vsel %vm743, %v644, 0.0
        %v752 = vsel %vm744, %v645, 0.0
        %v753 = vsel %vm745, %v646, 0.0
        %v754 = vsel %vm746, %v647, 0.0
        %v755 = vsel %vm747, %v648, 0.0
        %v756 = vsel %vm748, %v649, 0.0
        %v757 = vsel %vm749, %v650, 0.0
        %v758 = vsel %vm750, %v651, 0.0
        %v759 = vsel %vm743, %v652, 0.0
        %v760 = vsel %vm744, %v653, 0.0
        %v761 = vsel %vm745, %v654, 0.0
        %v762 = vsel %vm746, %v655, 0.0
        %v763 = vsel %vm747, %v656, 0.0
        %v764 = vsel %vm748, %v657, 0.0
        %v765 = vsel %vm749, %v658, 0.0
        %v766 = vsel %vm750, %v659, 0.0
        %v767 = vsel %vm743, %v660, 0.0
        %v768 = vsel %vm744, %v661, 0.0
        %v769 = vsel %vm745, %v662, 0.0
        %v770 = vsel %vm746, %v663, 0.0
        %v771 = vsel %vm747, %v664, 0.0
        %v772 = vsel %vm748, %v665, 0.0
        %v773 = vsel %vm749, %v666, 0.0
        %v774 = vsel %vm750, %v667, 0.0
        %v775 = vsel %vm743, %v668, 0.0
        %v776 = vsel %vm744, %v669, 0.0
        %v777 = vsel %vm745, %v670, 0.0
        %v778 = vsel %vm746, %v671, 0.0
        %v779 = vsel %vm747, %v672, 0.0
        %v780 = vsel %vm748, %v673, 0.0
        %v781 = vsel %vm749, %v674, 0.0
        %v782 = vsel %vm750, %v675, 0.0
        %v783 = vsel %vm743, %v676, 0.0
        %v784 = vsel %vm744, %v677, 0.0
        %v785 = vsel %vm745, %v678, 0.0
        %v786 = vsel %vm746, %v679, 0.0
        %v787 = vsel %vm747, %v680, 0.0
        %v788 = vsel %vm748, %v681, 0.0
        %v789 = vsel %vm749, %v682, 0.0
        %v790 = vsel %vm750, %v683, 0.0
        %v791 = vsel %vm743, %v684, 0.0
        %v792 = vsel %vm744, %v685, 0.0
        %v793 = vsel %vm745, %v686, 0.0
        %v794 = vsel %vm746, %v687, 0.0
        %v795 = vsel %vm747, %v688, 0.0
        %v796 = vsel %vm748, %v689, 0.0
        %v797 = vsel %vm749, %v690, 0.0
        %v798 = vsel %vm750, %v691, 0.0
        %v799 = vsel %vm743, %v692, 0.0
        %v800 = vsel %vm744, %v693, 0.0
        %v801 = vsel %vm745, %v694, 0.0
        %v802 = vsel %vm746, %v695, 0.0
        %v803 = vsel %vm747, %v696, 0.0
        %v804 = vsel %vm748, %v697, 0.0
        %v805 = vsel %vm749, %v698, 0.0
        %v806 = vsel %vm750, %v699, 0.0
        %v807 = vsel %vm743, %v700, 0.0
        %v808 = vsel %vm744, %v701, 0.0
        %v809 = vsel %vm745, %v702, 0.0
        %v810 = vsel %vm746, %v703, 0.0
        %v811 = vsel %vm747, %v704, 0.0
        %v812 = vsel %vm748, %v705, 0.0
        %v813 = vsel %vm749, %v706, 0.0
        %v814 = vsel %vm750, %v707, 0.0
        %vm815 = vcmask 654336
        %v816 = vsel %vm815, %v751, 0.0
        %v817 = vsel %vm815, %v752, 0.0
        %v818 = vadd.f32 %v816, %v817
        %v819 = vsel %vm815, %v753, 0.0
        %v820 = vadd.f32 %v818, %v819
        %v821 = vsel %vm815, %v754, 0.0
        %v822 = vadd.f32 %v820, %v821
        %v823 = vsel %vm815, %v755, 0.0
        %v824 = vadd.f32 %v822, %v823
        %v825 = vsel %vm815, %v756, 0.0
        %v826 = vadd.f32 %v824, %v825
        %v827 = vsel %vm815, %v757, 0.0
        %v828 = vadd.f32 %v826, %v827
        %v829 = vsel %vm815, %v758, 0.0
        %v830 = vadd.f32 %v828, %v829
        %v831 = vrot.slane %v830, 4
        %v832 = vadd.f32 %v830, %v831
        %v833 = vrot.slane %v832, 2
        %v834 = vadd.f32 %v832, %v833
        %v835 = vrot.slane %v834, 1
        %v836 = vadd.f32 %v834, %v835
        %v837 = vsel %vm815, %v759, 0.0
        %v838 = vsel %vm815, %v760, 0.0
        %v839 = vadd.f32 %v837, %v838
        %v840 = vsel %vm815, %v761, 0.0
        %v841 = vadd.f32 %v839, %v840
        %v842 = vsel %vm815, %v762, 0.0
        %v843 = vadd.f32 %v841, %v842
        %v844 = vsel %vm815, %v763, 0.0
        %v845 = vadd.f32 %v843, %v844
        %v846 = vsel %vm815, %v764, 0.0
        %v847 = vadd.f32 %v845, %v846
        %v848 = vsel %vm815, %v765, 0.0
        %v849 = vadd.f32 %v847, %v848
        %v850 = vsel %vm815, %v766, 0.0
        %v851 = vadd.f32 %v849, %v850
        %v852 = vrot.slane %v851, 4
        %v853 = vadd.f32 %v851, %v852
        %v854 = vrot.slane %v853, 2
        %v855 = vadd.f32 %v853, %v854
        %v856 = vrot.slane %v855, 1
        %v857 = vadd.f32 %v855, %v856
        %v858 = vsel %vm815, %v767, 0.0
        %v859 = vsel %vm815, %v768, 0.0
        %v860 = vadd.f32 %v858, %v859
        %v861 = vsel %vm815, %v769, 0.0
        %v862 = vadd.f32 %v860, %v861
        %v863 = vsel %vm815, %v770, 0.0
        %v864 = vadd.f32 %v862, %v863
        %v865 = vsel %vm815, %v771, 0.0
        %v866 = vadd.f32 %v864, %v865
        %v867 = vsel %vm815, %v772, 0.0
        %v868 = vadd.f32 %v866, %v867
        %v869 = vsel %vm815, %v773, 0.0
        %v870 = vadd.f32 %v868, %v869
        %v871 = vsel %vm815, %v774, 0.0
        %v872 = vadd.f32 %v870, %v871
        %v873 = vrot.slane %v872, 4
        %v874 = vadd.f32 %v872, %v873
        %v875 = vrot.slane %v874, 2
        %v876 = vadd.f32 %v874, %v875
        %v877 = vrot.slane %v876, 1
        %v878 = vadd.f32 %v876, %v877
        %v879 = vsel %vm815, %v775, 0.0
        %v880 = vsel %vm815, %v776, 0.0
        %v881 = vadd.f32 %v879, %v880
        %v882 = vsel %vm815, %v777, 0.0
        %v883 = vadd.f32 %v881, %v882
        %v884 = vsel %vm815, %v778, 0.0
        %v885 = vadd.f32 %v883, %v884
        %v886 = vsel %vm815, %v779, 0.0
        %v887 = vadd.f32 %v885, %v886
        %v888 = vsel %vm815, %v780, 0.0
        %v889 = vadd.f32 %v887, %v888
        %v890 = vsel %vm815, %v781, 0.0
        %v891 = vadd.f32 %v889, %v890
        %v892 = vsel %vm815, %v782, 0.0
        %v893 = vadd.f32 %v891, %v892
        %v894 = vrot.slane %v893, 4
        %v895 = vadd.f32 %v893, %v894
        %v896 = vrot.slane %v895, 2
        %v897 = vadd.f32 %v895, %v896
        %v898 = vrot.slane %v897, 1
        %v899 = vadd.f32 %v897, %v898
        %v900 = vsel %vm815, %v783, 0.0
        %v901 = vsel %vm815, %v784, 0.0
        %v902 = vadd.f32 %v900, %v901
        %v903 = vsel %vm815, %v785, 0.0
        %v904 = vadd.f32 %v902, %v903
        %v905 = vsel %vm815, %v786, 0.0
        %v906 = vadd.f32 %v904, %v905
        %v907 = vsel %vm815, %v787, 0.0
        %v908 = vadd.f32 %v906, %v907
        %v909 = vsel %vm815, %v788, 0.0
        %v910 = vadd.f32 %v908, %v909
        %v911 = vsel %vm815, %v789, 0.0
        %v912 = vadd.f32 %v910, %v911
        %v913 = vsel %vm815, %v790, 0.0
        %v914 = vadd.f32 %v912, %v913
        %v915 = vrot.slane %v914, 4
        %v916 = vadd.f32 %v914, %v915
        %v917 = vrot.slane %v916, 2
        %v918 = vadd.f32 %v916, %v917
        %v919 = vrot.slane %v918, 1
        %v920 = vadd.f32 %v918, %v919
        %v921 = vsel %vm815, %v791, 0.0
        %v922 = vsel %vm815, %v792, 0.0
        %v923 = vadd.f32 %v921, %v922
        %v924 = vsel %vm815, %v793, 0.0
        %v925 = vadd.f32 %v923, %v924
        %v926 = vsel %vm815, %v794, 0.0
        %v927 = vadd.f32 %v925, %v926
        %v928 = vsel %vm815, %v795, 0.0
        %v929 = vadd.f32 %v927, %v928
        %v930 = vsel %vm815, %v796, 0.0
        %v931 = vadd.f32 %v929, %v930
        %v932 = vsel %vm815, %v797, 0.0
        %v933 = vadd.f32 %v931, %v932
        %v934 = vsel %vm815, %v798, 0.0
        %v935 = vadd.f32 %v933, %v934
        %v936 = vrot.slane %v935, 4
        %v937 = vadd.f32 %v935, %v936
        %v938 = vrot.slane %v937, 2
        %v939 = vadd.f32 %v937, %v938
        %v940 = vrot.slane %v939, 1
        %v941 = vadd.f32 %v939, %v940
        %v942 = vsel %vm815, %v799, 0.0
        %v943 = vsel %vm815, %v800, 0.0
        %v944 = vadd.f32 %v942, %v943
        %v945 = vsel %vm815, %v801, 0.0
        %v946 = vadd.f32 %v944, %v945
        %v947 = vsel %vm815, %v802, 0.0
        %v948 = vadd.f32 %v946, %v947
        %v949 = vsel %vm815, %v803, 0.0
        %v950 = vadd.f32 %v948, %v949
        %v951 = vsel %vm815, %v804, 0.0
        %v952 = vadd.f32 %v950, %v951
        %v953 = vsel %vm815, %v805, 0.0
        %v954 = vadd.f32 %v952, %v953
        %v955 = vsel %vm815, %v806, 0.0
        %v956 = vadd.f32 %v954, %v955
        %v957 = vrot.slane %v956, 4
        %v958 = vadd.f32 %v956, %v957
        %v959 = vrot.slane %v958, 2
        %v960 = vadd.f32 %v958, %v959
        %v961 = vrot.slane %v960, 1
        %v962 = vadd.f32 %v960, %v961
        %v963 = vsel %vm815, %v807, 0.0
        %v964 = vsel %vm815, %v808, 0.0
        %v965 = vadd.f32 %v963, %v964
        %v966 = vsel %vm815, %v809, 0.0
        %v967 = vadd.f32 %v965, %v966
        %v968 = vsel %vm815, %v810, 0.0
        %v969 = vadd.f32 %v967, %v968
        %v970 = vsel %vm815, %v811, 0.0
        %v971 = vadd.f32 %v969, %v970
        %v972 = vsel %vm815, %v812, 0.0
        %v973 = vadd.f32 %v971, %v972
        %v974 = vsel %vm815, %v813, 0.0
        %v975 = vadd.f32 %v973, %v974
        %v976 = vsel %vm815, %v814, 0.0
        %v977 = vadd.f32 %v975, %v976
        %v978 = vrot.slane %v977, 4
        %v979 = vadd.f32 %v977, %v978
        %v980 = vrot.slane %v979, 2
        %v981 = vadd.f32 %v979, %v980
        %v982 = vrot.slane %v981, 1
        %v983 = vadd.f32 %v981, %v982
        %v984 = vadd.f32 %v836, 0.0
        %v985 = vadd.f32 %v857, 0.0
        %v986 = vadd.f32 %v878, 0.0
        %v987 = vadd.f32 %v899, 0.0
        %v988 = vadd.f32 %v920, 0.0
        %v989 = vadd.f32 %v941, 0.0
        %v990 = vadd.f32 %v962, 0.0
        %v991 = vadd.f32 %v983, 0.0
        %s992 = scalar_lea.vmem %s604, 64 [#allocation3]
        %v993 = vld [vmem:[%s992] sm:$0xff]
        %v994 = vld [vmem:[%s992 + $0x8] sm:$0xff]
        %v995 = vld [vmem:[%s992 + $0x10] sm:$0xff]
        %v996 = vld [vmem:[%s992 + $0x18] sm:$0xff]
        %v997 = vld [vmem:[%s992 + $0x20] sm:$0xff]
        %v998 = vld [vmem:[%s992 + $0x28] sm:$0xff]
        %v999 = vld [vmem:[%s992 + $0x30] sm:$0xff]
        %v1000 = vld [vmem:[%s992 + $0x38] sm:$0xff]
        %v1001 = vld [vmem:[%s992 + $0x200] sm:$0xff]
        %v1002 = vld [vmem:[%s992 + $0x208] sm:$0xff]
        %v1003 = vld [vmem:[%s992 + $0x210] sm:$0xff]
        %v1004 = vld [vmem:[%s992 + $0x218] sm:$0xff]
        %v1005 = vld [vmem:[%s992 + $0x220] sm:$0xff]
        %v1006 = vld [vmem:[%s992 + $0x228] sm:$0xff]
        %v1007 = vld [vmem:[%s992 + $0x230] sm:$0xff]
        %v1008 = vld [vmem:[%s992 + $0x238] sm:$0xff]
        %v1009 = vld [vmem:[%s992 + $0x400] sm:$0xff]
        %v1010 = vld [vmem:[%s992 + $0x408] sm:$0xff]
        %v1011 = vld [vmem:[%s992 + $0x410] sm:$0xff]
        %v1012 = vld [vmem:[%s992 + $0x418] sm:$0xff]
        %v1013 = vld [vmem:[%s992 + $0x420] sm:$0xff]
        %v1014 = vld [vmem:[%s992 + $0x428] sm:$0xff]
        %v1015 = vld [vmem:[%s992 + $0x430] sm:$0xff]
        %v1016 = vld [vmem:[%s992 + $0x438] sm:$0xff]
        %v1017 = vld [vmem:[%s992 + $0x600] sm:$0xff]
        %v1018 = vld [vmem:[%s992 + $0x608] sm:$0xff]
        %v1019 = vld [vmem:[%s992 + $0x610] sm:$0xff]
        %v1020 = vld [vmem:[%s992 + $0x618] sm:$0xff]
        %v1021 = vld [vmem:[%s992 + $0x620] sm:$0xff]
        %v1022 = vld [vmem:[%s992 + $0x628] sm:$0xff]
        %v1023 = vld [vmem:[%s992 + $0x630] sm:$0xff]
        %v1024 = vld [vmem:[%s992 + $0x638] sm:$0xff]
        %v1025 = vld [vmem:[%s992 + $0x800] sm:$0xff]
        %v1026 = vld [vmem:[%s992 + $0x808] sm:$0xff]
        %v1027 = vld [vmem:[%s992 + $0x810] sm:$0xff]
        %v1028 = vld [vmem:[%s992 + $0x818] sm:$0xff]
        %v1029 = vld [vmem:[%s992 + $0x820] sm:$0xff]
        %v1030 = vld [vmem:[%s992 + $0x828] sm:$0xff]
        %v1031 = vld [vmem:[%s992 + $0x830] sm:$0xff]
        %v1032 = vld [vmem:[%s992 + $0x838] sm:$0xff]
        %v1033 = vld [vmem:[%s992 + $0xa00] sm:$0xff]
        %v1034 = vld [vmem:[%s992 + $0xa08] sm:$0xff]
        %v1035 = vld [vmem:[%s992 + $0xa10] sm:$0xff]
        %v1036 = vld [vmem:[%s992 + $0xa18] sm:$0xff]
        %v1037 = vld [vmem:[%s992 + $0xa20] sm:$0xff]
        %v1038 = vld [vmem:[%s992 + $0xa28] sm:$0xff]
        %v1039 = vld [vmem:[%s992 + $0xa30] sm:$0xff]
        %v1040 = vld [vmem:[%s992 + $0xa38] sm:$0xff]
        %v1041 = vld [vmem:[%s992 + $0xc00] sm:$0xff]
        %v1042 = vld [vmem:[%s992 + $0xc08] sm:$0xff]
        %v1043 = vld [vmem:[%s992 + $0xc10] sm:$0xff]
        %v1044 = vld [vmem:[%s992 + $0xc18] sm:$0xff]
        %v1045 = vld [vmem:[%s992 + $0xc20] sm:$0xff]
        %v1046 = vld [vmem:[%s992 + $0xc28] sm:$0xff]
        %v1047 = vld [vmem:[%s992 + $0xc30] sm:$0xff]
        %v1048 = vld [vmem:[%s992 + $0xc38] sm:$0xff]
        %v1049 = vld [vmem:[%s992 + $0xe00] sm:$0xff]
        %v1050 = vld [vmem:[%s992 + $0xe08] sm:$0xff]
        %v1051 = vld [vmem:[%s992 + $0xe10] sm:$0xff]
        %v1052 = vld [vmem:[%s992 + $0xe18] sm:$0xff]
        %v1053 = vld [vmem:[%s992 + $0xe20] sm:$0xff]
        %v1054 = vld [vmem:[%s992 + $0xe28] sm:$0xff]
        %v1055 = vld [vmem:[%s992 + $0xe30] sm:$0xff]
        %v1056 = vld [vmem:[%s992 + $0xe38] sm:$0xff]
        %v1057 = vstv 64
        %v1058 = vadd.s32 %v709, %v1057
        %v1059 = vadd.s32 %v710, %v1057
        %v1060 = vadd.s32 %v711, %v1057
        %v1061 = vadd.s32 %v712, %v1057
        %v1062 = vadd.s32 %v713, %v1057
        %v1063 = vadd.s32 %v714, %v1057
        %v1064 = vadd.s32 %v715, %v1057
        %v1065 = vadd.s32 %v716, %v1057
        %vm1066 = vcmp.lt.s32.totalorder %v1058, %v726
        %vm1067 = vcmp.lt.s32.totalorder %v1059, %v726
        %vm1068 = vcmp.lt.s32.totalorder %v1060, %v726
        %vm1069 = vcmp.lt.s32.totalorder %v1061, %v726
        %vm1070 = vcmp.lt.s32.totalorder %v1062, %v726
        %vm1071 = vcmp.lt.s32.totalorder %v1063, %v726
        %vm1072 = vcmp.lt.s32.totalorder %v1064, %v726
        %vm1073 = vcmp.lt.s32.totalorder %v1065, %v726
        %v1074 = vsel %vm1066, 1, 0
        %v1075 = vsel %vm1067, 1, 0
        %v1076 = vsel %vm1068, 1, 0
        %v1077 = vsel %vm1069, 1, 0
        %v1078 = vsel %vm1070, 1, 0
        %v1079 = vsel %vm1071, 1, 0
        %v1080 = vsel %vm1072, 1, 0
        %v1081 = vsel %vm1073, 1, 0
        %vm1082 = vcmp.eq.s32.totalorder %v1074, 1
        %vm1083 = vcmp.eq.s32.totalorder %v1075, 1
        %vm1084 = vcmp.eq.s32.totalorder %v1076, 1
        %vm1085 = vcmp.eq.s32.totalorder %v1077, 1
        %vm1086 = vcmp.eq.s32.totalorder %v1078, 1
        %vm1087 = vcmp.eq.s32.totalorder %v1079, 1
        %vm1088 = vcmp.eq.s32.totalorder %v1080, 1
        %vm1089 = vcmp.eq.s32.totalorder %v1081, 1
        %v1090 = vsel %vm1082, %v993, 0.0
        %v1091 = vsel %vm1083, %v994, 0.0
        %v1092 = vsel %vm1084, %v995, 0.0
        %v1093 = vsel %vm1085, %v996, 0.0
        %v1094 = vsel %vm1086, %v997, 0.0
        %v1095 = vsel %vm1087, %v998, 0.0
        %v1096 = vsel %vm1088, %v999, 0.0
        %v1097 = vsel %vm1089, %v1000, 0.0
        %v1098 = vsel %vm1082, %v1001, 0.0
        %v1099 = vsel %vm1083, %v1002, 0.0
        %v1100 = vsel %vm1084, %v1003, 0.0
        %v1101 = vsel %vm1085, %v1004, 0.0
        %v1102 = vsel %vm1086, %v1005, 0.0
        %v1103 = vsel %vm1087, %v1006, 0.0
        %v1104 = vsel %vm1088, %v1007, 0.0
        %v1105 = vsel %vm1089, %v1008, 0.0
        %v1106 = vsel %vm1082, %v1009, 0.0
        %v1107 = vsel %vm1083, %v1010, 0.0
        %v1108 = vsel %vm1084, %v1011, 0.0
        %v1109 = vsel %vm1085, %v1012, 0.0
        %v1110 = vsel %vm1086, %v1013, 0.0
        %v1111 = vsel %vm1087, %v1014, 0.0
        %v1112 = vsel %vm1088, %v1015, 0.0
        %v1113 = vsel %vm1089, %v1016, 0.0
        %v1114 = vsel %vm1082, %v1017, 0.0
        %v1115 = vsel %vm1083, %v1018, 0.0
        %v1116 = vsel %vm1084, %v1019, 0.0
        %v1117 = vsel %vm1085, %v1020, 0.0
        %v1118 = vsel %vm1086, %v1021, 0.0
        %v1119 = vsel %vm1087, %v1022, 0.0
        %v1120 = vsel %vm1088, %v1023, 0.0
        %v1121 = vsel %vm1089, %v1024, 0.0
        %v1122 = vsel %vm1082, %v1025, 0.0
        %v1123 = vsel %vm1083, %v1026, 0.0
        %v1124 = vsel %vm1084, %v1027, 0.0
        %v1125 = vsel %vm1085, %v1028, 0.0
        %v1126 = vsel %vm1086, %v1029, 0.0
        %v1127 = vsel %vm1087, %v1030, 0.0
        %v1128 = vsel %vm1088, %v1031, 0.0
        %v1129 = vsel %vm1089, %v1032, 0.0
        %v1130 = vsel %vm1082, %v1033, 0.0
        %v1131 = vsel %vm1083, %v1034, 0.0
        %v1132 = vsel %vm1084, %v1035, 0.0
        %v1133 = vsel %vm1085, %v1036, 0.0
        %v1134 = vsel %vm1086, %v1037, 0.0
        %v1135 = vsel %vm1087, %v1038, 0.0
        %v1136 = vsel %vm1088, %v1039, 0.0
        %v1137 = vsel %vm1089, %v1040, 0.0
        %v1138 = vsel %vm1082, %v1041, 0.0
        %v1139 = vsel %vm1083, %v1042, 0.0
        %v1140 = vsel %vm1084, %v1043, 0.0
        %v1141 = vsel %vm1085, %v1044, 0.0
        %v1142 = vsel %vm1086, %v1045, 0.0
        %v1143 = vsel %vm1087, %v1046, 0.0
        %v1144 = vsel %vm1088, %v1047, 0.0
        %v1145 = vsel %vm1089, %v1048, 0.0
        %v1146 = vsel %vm1082, %v1049, 0.0
        %v1147 = vsel %vm1083, %v1050, 0.0
        %v1148 = vsel %vm1084, %v1051, 0.0
        %v1149 = vsel %vm1085, %v1052, 0.0
        %v1150 = vsel %vm1086, %v1053, 0.0
        %v1151 = vsel %vm1087, %v1054, 0.0
        %v1152 = vsel %vm1088, %v1055, 0.0
        %v1153 = vsel %vm1089, %v1056, 0.0
        %v1154 = vsel %vm815, %v1090, 0.0
        %v1155 = vsel %vm815, %v1091, 0.0
        %v1156 = vadd.f32 %v1154, %v1155
        %v1157 = vsel %vm815, %v1092, 0.0
        %v1158 = vadd.f32 %v1156, %v1157
        %v1159 = vsel %vm815, %v1093, 0.0
        %v1160 = vadd.f32 %v1158, %v1159
        %v1161 = vsel %vm815, %v1094, 0.0
        %v1162 = vadd.f32 %v1160, %v1161
        %v1163 = vsel %vm815, %v1095, 0.0
        %v1164 = vadd.f32 %v1162, %v1163
        %v1165 = vsel %vm815, %v1096, 0.0
        %v1166 = vadd.f32 %v1164, %v1165
        %v1167 = vsel %vm815, %v1097, 0.0
        %v1168 = vadd.f32 %v1166, %v1167
        %v1169 = vrot.slane %v1168, 4
        %v1170 = vadd.f32 %v1168, %v1169
        %v1171 = vrot.slane %v1170, 2
        %v1172 = vadd.f32 %v1170, %v1171
        %v1173 = vrot.slane %v1172, 1
        %v1174 = vadd.f32 %v1172, %v1173
        %v1175 = vsel %vm815, %v1098, 0.0
        %v1176 = vsel %vm815, %v1099, 0.0
        %v1177 = vadd.f32 %v1175, %v1176
        %v1178 = vsel %vm815, %v1100, 0.0
        %v1179 = vadd.f32 %v1177, %v1178
        %v1180 = vsel %vm815, %v1101, 0.0
        %v1181 = vadd.f32 %v1179, %v1180
        %v1182 = vsel %vm815, %v1102, 0.0
        %v1183 = vadd.f32 %v1181, %v1182
        %v1184 = vsel %vm815, %v1103, 0.0
        %v1185 = vadd.f32 %v1183, %v1184
        %v1186 = vsel %vm815, %v1104, 0.0
        %v1187 = vadd.f32 %v1185, %v1186
        %v1188 = vsel %vm815, %v1105, 0.0
        %v1189 = vadd.f32 %v1187, %v1188
        %v1190 = vrot.slane %v1189, 4
        %v1191 = vadd.f32 %v1189, %v1190
        %v1192 = vrot.slane %v1191, 2
        %v1193 = vadd.f32 %v1191, %v1192
        %v1194 = vrot.slane %v1193, 1
        %v1195 = vadd.f32 %v1193, %v1194
        %v1196 = vsel %vm815, %v1106, 0.0
        %v1197 = vsel %vm815, %v1107, 0.0
        %v1198 = vadd.f32 %v1196, %v1197
        %v1199 = vsel %vm815, %v1108, 0.0
        %v1200 = vadd.f32 %v1198, %v1199
        %v1201 = vsel %vm815, %v1109, 0.0
        %v1202 = vadd.f32 %v1200, %v1201
        %v1203 = vsel %vm815, %v1110, 0.0
        %v1204 = vadd.f32 %v1202, %v1203
        %v1205 = vsel %vm815, %v1111, 0.0
        %v1206 = vadd.f32 %v1204, %v1205
        %v1207 = vsel %vm815, %v1112, 0.0
        %v1208 = vadd.f32 %v1206, %v1207
        %v1209 = vsel %vm815, %v1113, 0.0
        %v1210 = vadd.f32 %v1208, %v1209
        %v1211 = vrot.slane %v1210, 4
        %v1212 = vadd.f32 %v1210, %v1211
        %v1213 = vrot.slane %v1212, 2
        %v1214 = vadd.f32 %v1212, %v1213
        %v1215 = vrot.slane %v1214, 1
        %v1216 = vadd.f32 %v1214, %v1215
        %v1217 = vsel %vm815, %v1114, 0.0
        %v1218 = vsel %vm815, %v1115, 0.0
        %v1219 = vadd.f32 %v1217, %v1218
        %v1220 = vsel %vm815, %v1116, 0.0
        %v1221 = vadd.f32 %v1219, %v1220
        %v1222 = vsel %vm815, %v1117, 0.0
        %v1223 = vadd.f32 %v1221, %v1222
        %v1224 = vsel %vm815, %v1118, 0.0
        %v1225 = vadd.f32 %v1223, %v1224
        %v1226 = vsel %vm815, %v1119, 0.0
        %v1227 = vadd.f32 %v1225, %v1226
        %v1228 = vsel %vm815, %v1120, 0.0
        %v1229 = vadd.f32 %v1227, %v1228
        %v1230 = vsel %vm815, %v1121, 0.0
        %v1231 = vadd.f32 %v1229, %v1230
        %v1232 = vrot.slane %v1231, 4
        %v1233 = vadd.f32 %v1231, %v1232
        %v1234 = vrot.slane %v1233, 2
        %v1235 = vadd.f32 %v1233, %v1234
        %v1236 = vrot.slane %v1235, 1
        %v1237 = vadd.f32 %v1235, %v1236
        %v1238 = vsel %vm815, %v1122, 0.0
        %v1239 = vsel %vm815, %v1123, 0.0
        %v1240 = vadd.f32 %v1238, %v1239
        %v1241 = vsel %vm815, %v1124, 0.0
        %v1242 = vadd.f32 %v1240, %v1241
        %v1243 = vsel %vm815, %v1125, 0.0
        %v1244 = vadd.f32 %v1242, %v1243
        %v1245 = vsel %vm815, %v1126, 0.0
        %v1246 = vadd.f32 %v1244, %v1245
        %v1247 = vsel %vm815, %v1127, 0.0
        %v1248 = vadd.f32 %v1246, %v1247
        %v1249 = vsel %vm815, %v1128, 0.0
        %v1250 = vadd.f32 %v1248, %v1249
        %v1251 = vsel %vm815, %v1129, 0.0
        %v1252 = vadd.f32 %v1250, %v1251
        %v1253 = vrot.slane %v1252, 4
        %v1254 = vadd.f32 %v1252, %v1253
        %v1255 = vrot.slane %v1254, 2
        %v1256 = vadd.f32 %v1254, %v1255
        %v1257 = vrot.slane %v1256, 1
        %v1258 = vadd.f32 %v1256, %v1257
        %v1259 = vsel %vm815, %v1130, 0.0
        %v1260 = vsel %vm815, %v1131, 0.0
        %v1261 = vadd.f32 %v1259, %v1260
        %v1262 = vsel %vm815, %v1132, 0.0
        %v1263 = vadd.f32 %v1261, %v1262
        %v1264 = vsel %vm815, %v1133, 0.0
        %v1265 = vadd.f32 %v1263, %v1264
        %v1266 = vsel %vm815, %v1134, 0.0
        %v1267 = vadd.f32 %v1265, %v1266
        %v1268 = vsel %vm815, %v1135, 0.0
        %v1269 = vadd.f32 %v1267, %v1268
        %v1270 = vsel %vm815, %v1136, 0.0
        %v1271 = vadd.f32 %v1269, %v1270
        %v1272 = vsel %vm815, %v1137, 0.0
        %v1273 = vadd.f32 %v1271, %v1272
        %v1274 = vrot.slane %v1273, 4
        %v1275 = vadd.f32 %v1273, %v1274
        %v1276 = vrot.slane %v1275, 2
        %v1277 = vadd.f32 %v1275, %v1276
        %v1278 = vrot.slane %v1277, 1
        %v1279 = vadd.f32 %v1277, %v1278
        %v1280 = vsel %vm815, %v1138, 0.0
        %v1281 = vsel %vm815, %v1139, 0.0
        %v1282 = vadd.f32 %v1280, %v1281
        %v1283 = vsel %vm815, %v1140, 0.0
        %v1284 = vadd.f32 %v1282, %v1283
        %v1285 = vsel %vm815, %v1141, 0.0
        %v1286 = vadd.f32 %v1284, %v1285
        %v1287 = vsel %vm815, %v1142, 0.0
        %v1288 = vadd.f32 %v1286, %v1287
        %v1289 = vsel %vm815, %v1143, 0.0
        %v1290 = vadd.f32 %v1288, %v1289
        %v1291 = vsel %vm815, %v1144, 0.0
        %v1292 = vadd.f32 %v1290, %v1291
        %v1293 = vsel %vm815, %v1145, 0.0
        %v1294 = vadd.f32 %v1292, %v1293
        %v1295 = vrot.slane %v1294, 4
        %v1296 = vadd.f32 %v1294, %v1295
        %v1297 = vrot.slane %v1296, 2
        %v1298 = vadd.f32 %v1296, %v1297
        %v1299 = vrot.slane %v1298, 1
        %v1300 = vadd.f32 %v1298, %v1299
        %v1301 = vsel %vm815, %v1146, 0.0
        %v1302 = vsel %vm815, %v1147, 0.0
        %v1303 = vadd.f32 %v1301, %v1302
        %v1304 = vsel %vm815, %v1148, 0.0
        %v1305 = vadd.f32 %v1303, %v1304
        %v1306 = vsel %vm815, %v1149, 0.0
        %v1307 = vadd.f32 %v1305, %v1306
        %v1308 = vsel %vm815, %v1150, 0.0
        %v1309 = vadd.f32 %v1307, %v1308
        %v1310 = vsel %vm815, %v1151, 0.0
        %v1311 = vadd.f32 %v1309, %v1310
        %v1312 = vsel %vm815, %v1152, 0.0
        %v1313 = vadd.f32 %v1311, %v1312
        %v1314 = vsel %vm815, %v1153, 0.0
        %v1315 = vadd.f32 %v1313, %v1314
        %v1316 = vrot.slane %v1315, 4
        %v1317 = vadd.f32 %v1315, %v1316
        %v1318 = vrot.slane %v1317, 2
        %v1319 = vadd.f32 %v1317, %v1318
        %v1320 = vrot.slane %v1319, 1
        %v1321 = vadd.f32 %v1319, %v1320
        %v1322 = vadd.f32 %v984, %v1174
        %v1323 = vadd.f32 %v985, %v1195
        %v1324 = vadd.f32 %v986, %v1216
        %v1325 = vadd.f32 %v987, %v1237
        %v1326 = vadd.f32 %v988, %v1258
        %v1327 = vadd.f32 %v989, %v1279
        %v1328 = vadd.f32 %v990, %v1300
        %v1329 = vadd.f32 %v991, %v1321
        %s1330 = scalar_lea.vmem %s604, 128 [#allocation3]
        %v1331 = vld [vmem:[%s1330] sm:$0xff]
        %v1332 = vld [vmem:[%s1330 + $0x8] sm:$0xff]
        %v1333 = vld [vmem:[%s1330 + $0x10] sm:$0xff]
        %v1334 = vld [vmem:[%s1330 + $0x18] sm:$0xff]
        %v1335 = vld [vmem:[%s1330 + $0x20] sm:$0xff]
        %v1336 = vld [vmem:[%s1330 + $0x28] sm:$0xff]
        %v1337 = vld [vmem:[%s1330 + $0x30] sm:$0xff]
        %v1338 = vld [vmem:[%s1330 + $0x38] sm:$0xff]
        %v1339 = vld [vmem:[%s1330 + $0x200] sm:$0xff]
        %v1340 = vld [vmem:[%s1330 + $0x208] sm:$0xff]
        %v1341 = vld [vmem:[%s1330 + $0x210] sm:$0xff]
        %v1342 = vld [vmem:[%s1330 + $0x218] sm:$0xff]
        %v1343 = vld [vmem:[%s1330 + $0x220] sm:$0xff]
        %v1344 = vld [vmem:[%s1330 + $0x228] sm:$0xff]
        %v1345 = vld [vmem:[%s1330 + $0x230] sm:$0xff]
        %v1346 = vld [vmem:[%s1330 + $0x238] sm:$0xff]
        %v1347 = vld [vmem:[%s1330 + $0x400] sm:$0xff]
        %v1348 = vld [vmem:[%s1330 + $0x408] sm:$0xff]
        %v1349 = vld [vmem:[%s1330 + $0x410] sm:$0xff]
        %v1350 = vld [vmem:[%s1330 + $0x418] sm:$0xff]
        %v1351 = vld [vmem:[%s1330 + $0x420] sm:$0xff]
        %v1352 = vld [vmem:[%s1330 + $0x428] sm:$0xff]
        %v1353 = vld [vmem:[%s1330 + $0x430] sm:$0xff]
        %v1354 = vld [vmem:[%s1330 + $0x438] sm:$0xff]
        %v1355 = vld [vmem:[%s1330 + $0x600] sm:$0xff]
        %v1356 = vld [vmem:[%s1330 + $0x608] sm:$0xff]
        %v1357 = vld [vmem:[%s1330 + $0x610] sm:$0xff]
        %v1358 = vld [vmem:[%s1330 + $0x618] sm:$0xff]
        %v1359 = vld [vmem:[%s1330 + $0x620] sm:$0xff]
        %v1360 = vld [vmem:[%s1330 + $0x628] sm:$0xff]
        %v1361 = vld [vmem:[%s1330 + $0x630] sm:$0xff]
        %v1362 = vld [vmem:[%s1330 + $0x638] sm:$0xff]
        %v1363 = vld [vmem:[%s1330 + $0x800] sm:$0xff]
        %v1364 = vld [vmem:[%s1330 + $0x808] sm:$0xff]
        %v1365 = vld [vmem:[%s1330 + $0x810] sm:$0xff]
        %v1366 = vld [vmem:[%s1330 + $0x818] sm:$0xff]
        %v1367 = vld [vmem:[%s1330 + $0x820] sm:$0xff]
        %v1368 = vld [vmem:[%s1330 + $0x828] sm:$0xff]
        %v1369 = vld [vmem:[%s1330 + $0x830] sm:$0xff]
        %v1370 = vld [vmem:[%s1330 + $0x838] sm:$0xff]
        %v1371 = vld [vmem:[%s1330 + $0xa00] sm:$0xff]
        %v1372 = vld [vmem:[%s1330 + $0xa08] sm:$0xff]
        %v1373 = vld [vmem:[%s1330 + $0xa10] sm:$0xff]
        %v1374 = vld [vmem:[%s1330 + $0xa18] sm:$0xff]
        %v1375 = vld [vmem:[%s1330 + $0xa20] sm:$0xff]
        %v1376 = vld [vmem:[%s1330 + $0xa28] sm:$0xff]
        %v1377 = vld [vmem:[%s1330 + $0xa30] sm:$0xff]
        %v1378 = vld [vmem:[%s1330 + $0xa38] sm:$0xff]
        %v1379 = vld [vmem:[%s1330 + $0xc00] sm:$0xff]
        %v1380 = vld [vmem:[%s1330 + $0xc08] sm:$0xff]
        %v1381 = vld [vmem:[%s1330 + $0xc10] sm:$0xff]
        %v1382 = vld [vmem:[%s1330 + $0xc18] sm:$0xff]
        %v1383 = vld [vmem:[%s1330 + $0xc20] sm:$0xff]
        %v1384 = vld [vmem:[%s1330 + $0xc28] sm:$0xff]
        %v1385 = vld [vmem:[%s1330 + $0xc30] sm:$0xff]
        %v1386 = vld [vmem:[%s1330 + $0xc38] sm:$0xff]
        %v1387 = vld [vmem:[%s1330 + $0xe00] sm:$0xff]
        %v1388 = vld [vmem:[%s1330 + $0xe08] sm:$0xff]
        %v1389 = vld [vmem:[%s1330 + $0xe10] sm:$0xff]
        %v1390 = vld [vmem:[%s1330 + $0xe18] sm:$0xff]
        %v1391 = vld [vmem:[%s1330 + $0xe20] sm:$0xff]
        %v1392 = vld [vmem:[%s1330 + $0xe28] sm:$0xff]
        %v1393 = vld [vmem:[%s1330 + $0xe30] sm:$0xff]
        %v1394 = vld [vmem:[%s1330 + $0xe38] sm:$0xff]
        %v1395 = vstv 128
        %v1396 = vadd.s32 %v709, %v1395
        %v1397 = vadd.s32 %v710, %v1395
        %v1398 = vadd.s32 %v711, %v1395
        %v1399 = vadd.s32 %v712, %v1395
        %v1400 = vadd.s32 %v713, %v1395
        %v1401 = vadd.s32 %v714, %v1395
        %v1402 = vadd.s32 %v715, %v1395
        %v1403 = vadd.s32 %v716, %v1395
        %vm1404 = vcmp.lt.s32.totalorder %v1396, %v726
        %vm1405 = vcmp.lt.s32.totalorder %v1397, %v726
        %vm1406 = vcmp.lt.s32.totalorder %v1398, %v726
        %vm1407 = vcmp.lt.s32.totalorder %v1399, %v726
        %vm1408 = vcmp.lt.s32.totalorder %v1400, %v726
        %vm1409 = vcmp.lt.s32.totalorder %v1401, %v726
        %vm1410 = vcmp.lt.s32.totalorder %v1402, %v726
        %vm1411 = vcmp.lt.s32.totalorder %v1403, %v726
        %v1412 = vsel %vm1404, 1, 0
        %v1413 = vsel %vm1405, 1, 0
        %v1414 = vsel %vm1406, 1, 0
        %v1415 = vsel %vm1407, 1, 0
        %v1416 = vsel %vm1408, 1, 0
        %v1417 = vsel %vm1409, 1, 0
        %v1418 = vsel %vm1410, 1, 0
        %v1419 = vsel %vm1411, 1, 0
        %vm1420 = vcmp.eq.s32.totalorder %v1412, 1
        %vm1421 = vcmp.eq.s32.totalorder %v1413, 1
        %vm1422 = vcmp.eq.s32.totalorder %v1414, 1
        %vm1423 = vcmp.eq.s32.totalorder %v1415, 1
        %vm1424 = vcmp.eq.s32.totalorder %v1416, 1
        %vm1425 = vcmp.eq.s32.totalorder %v1417, 1
        %vm1426 = vcmp.eq.s32.totalorder %v1418, 1
        %vm1427 = vcmp.eq.s32.totalorder %v1419, 1
        %v1428 = vsel %vm1420, %v1331, 0.0
        %v1429 = vsel %vm1421, %v1332, 0.0
        %v1430 = vsel %vm1422, %v1333, 0.0
        %v1431 = vsel %vm1423, %v1334, 0.0
        %v1432 = vsel %vm1424, %v1335, 0.0
        %v1433 = vsel %vm1425, %v1336, 0.0
        %v1434 = vsel %vm1426, %v1337, 0.0
        %v1435 = vsel %vm1427, %v1338, 0.0
        %v1436 = vsel %vm1420, %v1339, 0.0
        %v1437 = vsel %vm1421, %v1340, 0.0
        %v1438 = vsel %vm1422, %v1341, 0.0
        %v1439 = vsel %vm1423, %v1342, 0.0
        %v1440 = vsel %vm1424, %v1343, 0.0
        %v1441 = vsel %vm1425, %v1344, 0.0
        %v1442 = vsel %vm1426, %v1345, 0.0
        %v1443 = vsel %vm1427, %v1346, 0.0
        %v1444 = vsel %vm1420, %v1347, 0.0
        %v1445 = vsel %vm1421, %v1348, 0.0
        %v1446 = vsel %vm1422, %v1349, 0.0
        %v1447 = vsel %vm1423, %v1350, 0.0
        %v1448 = vsel %vm1424, %v1351, 0.0
        %v1449 = vsel %vm1425, %v1352, 0.0
        %v1450 = vsel %vm1426, %v1353, 0.0
        %v1451 = vsel %vm1427, %v1354, 0.0
        %v1452 = vsel %vm1420, %v1355, 0.0
        %v1453 = vsel %vm1421, %v1356, 0.0
        %v1454 = vsel %vm1422, %v1357, 0.0
        %v1455 = vsel %vm1423, %v1358, 0.0
        %v1456 = vsel %vm1424, %v1359, 0.0
        %v1457 = vsel %vm1425, %v1360, 0.0
        %v1458 = vsel %vm1426, %v1361, 0.0
        %v1459 = vsel %vm1427, %v1362, 0.0
        %v1460 = vsel %vm1420, %v1363, 0.0
        %v1461 = vsel %vm1421, %v1364, 0.0
        %v1462 = vsel %vm1422, %v1365, 0.0
        %v1463 = vsel %vm1423, %v1366, 0.0
        %v1464 = vsel %vm1424, %v1367, 0.0
        %v1465 = vsel %vm1425, %v1368, 0.0
        %v1466 = vsel %vm1426, %v1369, 0.0
        %v1467 = vsel %vm1427, %v1370, 0.0
        %v1468 = vsel %vm1420, %v1371, 0.0
        %v1469 = vsel %vm1421, %v1372, 0.0
        %v1470 = vsel %vm1422, %v1373, 0.0
        %v1471 = vsel %vm1423, %v1374, 0.0
        %v1472 = vsel %vm1424, %v1375, 0.0
        %v1473 = vsel %vm1425, %v1376, 0.0
        %v1474 = vsel %vm1426, %v1377, 0.0
        %v1475 = vsel %vm1427, %v1378, 0.0
        %v1476 = vsel %vm1420, %v1379, 0.0
        %v1477 = vsel %vm1421, %v1380, 0.0
        %v1478 = vsel %vm1422, %v1381, 0.0
        %v1479 = vsel %vm1423, %v1382, 0.0
        %v1480 = vsel %vm1424, %v1383, 0.0
        %v1481 = vsel %vm1425, %v1384, 0.0
        %v1482 = vsel %vm1426, %v1385, 0.0
        %v1483 = vsel %vm1427, %v1386, 0.0
        %v1484 = vsel %vm1420, %v1387, 0.0
        %v1485 = vsel %vm1421, %v1388, 0.0
        %v1486 = vsel %vm1422, %v1389, 0.0
        %v1487 = vsel %vm1423, %v1390, 0.0
        %v1488 = vsel %vm1424, %v1391, 0.0
        %v1489 = vsel %vm1425, %v1392, 0.0
        %v1490 = vsel %vm1426, %v1393, 0.0
        %v1491 = vsel %vm1427, %v1394, 0.0
        %v1492 = vsel %vm815, %v1428, 0.0
        %v1493 = vsel %vm815, %v1429, 0.0
        %v1494 = vadd.f32 %v1492, %v1493
        %v1495 = vsel %vm815, %v1430, 0.0
        %v1496 = vadd.f32 %v1494, %v1495
        %v1497 = vsel %vm815, %v1431, 0.0
        %v1498 = vadd.f32 %v1496, %v1497
        %v1499 = vsel %vm815, %v1432, 0.0
        %v1500 = vadd.f32 %v1498, %v1499
        %v1501 = vsel %vm815, %v1433, 0.0
        %v1502 = vadd.f32 %v1500, %v1501
        %v1503 = vsel %vm815, %v1434, 0.0
        %v1504 = vadd.f32 %v1502, %v1503
        %v1505 = vsel %vm815, %v1435, 0.0
        %v1506 = vadd.f32 %v1504, %v1505
        %v1507 = vrot.slane %v1506, 4
        %v1508 = vadd.f32 %v1506, %v1507
        %v1509 = vrot.slane %v1508, 2
        %v1510 = vadd.f32 %v1508, %v1509
        %v1511 = vrot.slane %v1510, 1
        %v1512 = vadd.f32 %v1510, %v1511
        %v1513 = vsel %vm815, %v1436, 0.0
        %v1514 = vsel %vm815, %v1437, 0.0
        %v1515 = vadd.f32 %v1513, %v1514
        %v1516 = vsel %vm815, %v1438, 0.0
        %v1517 = vadd.f32 %v1515, %v1516
        %v1518 = vsel %vm815, %v1439, 0.0
        %v1519 = vadd.f32 %v1517, %v1518
        %v1520 = vsel %vm815, %v1440, 0.0
        %v1521 = vadd.f32 %v1519, %v1520
        %v1522 = vsel %vm815, %v1441, 0.0
        %v1523 = vadd.f32 %v1521, %v1522
        %v1524 = vsel %vm815, %v1442, 0.0
        %v1525 = vadd.f32 %v1523, %v1524
        %v1526 = vsel %vm815, %v1443, 0.0
        %v1527 = vadd.f32 %v1525, %v1526
        %v1528 = vrot.slane %v1527, 4
        %v1529 = vadd.f32 %v1527, %v1528
        %v1530 = vrot.slane %v1529, 2
        %v1531 = vadd.f32 %v1529, %v1530
        %v1532 = vrot.slane %v1531, 1
        %v1533 = vadd.f32 %v1531, %v1532
        %v1534 = vsel %vm815, %v1444, 0.0
        %v1535 = vsel %vm815, %v1445, 0.0
        %v1536 = vadd.f32 %v1534, %v1535
        %v1537 = vsel %vm815, %v1446, 0.0
        %v1538 = vadd.f32 %v1536, %v1537
        %v1539 = vsel %vm815, %v1447, 0.0
        %v1540 = vadd.f32 %v1538, %v1539
        %v1541 = vsel %vm815, %v1448, 0.0
        %v1542 = vadd.f32 %v1540, %v1541
        %v1543 = vsel %vm815, %v1449, 0.0
        %v1544 = vadd.f32 %v1542, %v1543
        %v1545 = vsel %vm815, %v1450, 0.0
        %v1546 = vadd.f32 %v1544, %v1545
        %v1547 = vsel %vm815, %v1451, 0.0
        %v1548 = vadd.f32 %v1546, %v1547
        %v1549 = vrot.slane %v1548, 4
        %v1550 = vadd.f32 %v1548, %v1549
        %v1551 = vrot.slane %v1550, 2
        %v1552 = vadd.f32 %v1550, %v1551
        %v1553 = vrot.slane %v1552, 1
        %v1554 = vadd.f32 %v1552, %v1553
        %v1555 = vsel %vm815, %v1452, 0.0
        %v1556 = vsel %vm815, %v1453, 0.0
        %v1557 = vadd.f32 %v1555, %v1556
        %v1558 = vsel %vm815, %v1454, 0.0
        %v1559 = vadd.f32 %v1557, %v1558
        %v1560 = vsel %vm815, %v1455, 0.0
        %v1561 = vadd.f32 %v1559, %v1560
        %v1562 = vsel %vm815, %v1456, 0.0
        %v1563 = vadd.f32 %v1561, %v1562
        %v1564 = vsel %vm815, %v1457, 0.0
        %v1565 = vadd.f32 %v1563, %v1564
        %v1566 = vsel %vm815, %v1458, 0.0
        %v1567 = vadd.f32 %v1565, %v1566
        %v1568 = vsel %vm815, %v1459, 0.0
        %v1569 = vadd.f32 %v1567, %v1568
        %v1570 = vrot.slane %v1569, 4
        %v1571 = vadd.f32 %v1569, %v1570
        %v1572 = vrot.slane %v1571, 2
        %v1573 = vadd.f32 %v1571, %v1572
        %v1574 = vrot.slane %v1573, 1
        %v1575 = vadd.f32 %v1573, %v1574
        %v1576 = vsel %vm815, %v1460, 0.0
        %v1577 = vsel %vm815, %v1461, 0.0
        %v1578 = vadd.f32 %v1576, %v1577
        %v1579 = vsel %vm815, %v1462, 0.0
        %v1580 = vadd.f32 %v1578, %v1579
        %v1581 = vsel %vm815, %v1463, 0.0
        %v1582 = vadd.f32 %v1580, %v1581
        %v1583 = vsel %vm815, %v1464, 0.0
        %v1584 = vadd.f32 %v1582, %v1583
        %v1585 = vsel %vm815, %v1465, 0.0
        %v1586 = vadd.f32 %v1584, %v1585
        %v1587 = vsel %vm815, %v1466, 0.0
        %v1588 = vadd.f32 %v1586, %v1587
        %v1589 = vsel %vm815, %v1467, 0.0
        %v1590 = vadd.f32 %v1588, %v1589
        %v1591 = vrot.slane %v1590, 4
        %v1592 = vadd.f32 %v1590, %v1591
        %v1593 = vrot.slane %v1592, 2
        %v1594 = vadd.f32 %v1592, %v1593
        %v1595 = vrot.slane %v1594, 1
        %v1596 = vadd.f32 %v1594, %v1595
        %v1597 = vsel %vm815, %v1468, 0.0
        %v1598 = vsel %vm815, %v1469, 0.0
        %v1599 = vadd.f32 %v1597, %v1598
        %v1600 = vsel %vm815, %v1470, 0.0
        %v1601 = vadd.f32 %v1599, %v1600
        %v1602 = vsel %vm815, %v1471, 0.0
        %v1603 = vadd.f32 %v1601, %v1602
        %v1604 = vsel %vm815, %v1472, 0.0
        %v1605 = vadd.f32 %v1603, %v1604
        %v1606 = vsel %vm815, %v1473, 0.0
        %v1607 = vadd.f32 %v1605, %v1606
        %v1608 = vsel %vm815, %v1474, 0.0
        %v1609 = vadd.f32 %v1607, %v1608
        %v1610 = vsel %vm815, %v1475, 0.0
        %v1611 = vadd.f32 %v1609, %v1610
        %v1612 = vrot.slane %v1611, 4
        %v1613 = vadd.f32 %v1611, %v1612
        %v1614 = vrot.slane %v1613, 2
        %v1615 = vadd.f32 %v1613, %v1614
        %v1616 = vrot.slane %v1615, 1
        %v1617 = vadd.f32 %v1615, %v1616
        %v1618 = vsel %vm815, %v1476, 0.0
        %v1619 = vsel %vm815, %v1477, 0.0
        %v1620 = vadd.f32 %v1618, %v1619
        %v1621 = vsel %vm815, %v1478, 0.0
        %v1622 = vadd.f32 %v1620, %v1621
        %v1623 = vsel %vm815, %v1479, 0.0
        %v1624 = vadd.f32 %v1622, %v1623
        %v1625 = vsel %vm815, %v1480, 0.0
        %v1626 = vadd.f32 %v1624, %v1625
        %v1627 = vsel %vm815, %v1481, 0.0
        %v1628 = vadd.f32 %v1626, %v1627
        %v1629 = vsel %vm815, %v1482, 0.0
        %v1630 = vadd.f32 %v1628, %v1629
        %v1631 = vsel %vm815, %v1483, 0.0
        %v1632 = vadd.f32 %v1630, %v1631
        %v1633 = vrot.slane %v1632, 4
        %v1634 = vadd.f32 %v1632, %v1633
        %v1635 = vrot.slane %v1634, 2
        %v1636 = vadd.f32 %v1634, %v1635
        %v1637 = vrot.slane %v1636, 1
        %v1638 = vadd.f32 %v1636, %v1637
        %v1639 = vsel %vm815, %v1484, 0.0
        %v1640 = vsel %vm815, %v1485, 0.0
        %v1641 = vadd.f32 %v1639, %v1640
        %v1642 = vsel %vm815, %v1486, 0.0
        %v1643 = vadd.f32 %v1641, %v1642
        %v1644 = vsel %vm815, %v1487, 0.0
        %v1645 = vadd.f32 %v1643, %v1644
        %v1646 = vsel %vm815, %v1488, 0.0
        %v1647 = vadd.f32 %v1645, %v1646
        %v1648 = vsel %vm815, %v1489, 0.0
        %v1649 = vadd.f32 %v1647, %v1648
        %v1650 = vsel %vm815, %v1490, 0.0
        %v1651 = vadd.f32 %v1649, %v1650
        %v1652 = vsel %vm815, %v1491, 0.0
        %v1653 = vadd.f32 %v1651, %v1652
        %v1654 = vrot.slane %v1653, 4
        %v1655 = vadd.f32 %v1653, %v1654
        %v1656 = vrot.slane %v1655, 2
        %v1657 = vadd.f32 %v1655, %v1656
        %v1658 = vrot.slane %v1657, 1
        %v1659 = vadd.f32 %v1657, %v1658
        %v1660 = vadd.f32 %v1322, %v1512
        %v1661 = vadd.f32 %v1323, %v1533
        %v1662 = vadd.f32 %v1324, %v1554
        %v1663 = vadd.f32 %v1325, %v1575
        %v1664 = vadd.f32 %v1326, %v1596
        %v1665 = vadd.f32 %v1327, %v1617
        %v1666 = vadd.f32 %v1328, %v1638
        %v1667 = vadd.f32 %v1329, %v1659
        %s1668 = scalar_lea.vmem %s604, 192 [#allocation3]
        %v1669 = vld [vmem:[%s1668] sm:$0xff]
        %v1670 = vld [vmem:[%s1668 + $0x8] sm:$0xff]
        %v1671 = vld [vmem:[%s1668 + $0x10] sm:$0xff]
        %v1672 = vld [vmem:[%s1668 + $0x18] sm:$0xff]
        %v1673 = vld [vmem:[%s1668 + $0x20] sm:$0xff]
        %v1674 = vld [vmem:[%s1668 + $0x28] sm:$0xff]
        %v1675 = vld [vmem:[%s1668 + $0x30] sm:$0xff]
        %v1676 = vld [vmem:[%s1668 + $0x38] sm:$0xff]
        %v1677 = vld [vmem:[%s1668 + $0x200] sm:$0xff]
        %v1678 = vld [vmem:[%s1668 + $0x208] sm:$0xff]
        %v1679 = vld [vmem:[%s1668 + $0x210] sm:$0xff]
        %v1680 = vld [vmem:[%s1668 + $0x218] sm:$0xff]
        %v1681 = vld [vmem:[%s1668 + $0x220] sm:$0xff]
        %v1682 = vld [vmem:[%s1668 + $0x228] sm:$0xff]
        %v1683 = vld [vmem:[%s1668 + $0x230] sm:$0xff]
        %v1684 = vld [vmem:[%s1668 + $0x238] sm:$0xff]
        %v1685 = vld [vmem:[%s1668 + $0x400] sm:$0xff]
        %v1686 = vld [vmem:[%s1668 + $0x408] sm:$0xff]
        %v1687 = vld [vmem:[%s1668 + $0x410] sm:$0xff]
        %v1688 = vld [vmem:[%s1668 + $0x418] sm:$0xff]
        %v1689 = vld [vmem:[%s1668 + $0x420] sm:$0xff]
        %v1690 = vld [vmem:[%s1668 + $0x428] sm:$0xff]
        %v1691 = vld [vmem:[%s1668 + $0x430] sm:$0xff]
        %v1692 = vld [vmem:[%s1668 + $0x438] sm:$0xff]
        %v1693 = vld [vmem:[%s1668 + $0x600] sm:$0xff]
        %v1694 = vld [vmem:[%s1668 + $0x608] sm:$0xff]
        %v1695 = vld [vmem:[%s1668 + $0x610] sm:$0xff]
        %v1696 = vld [vmem:[%s1668 + $0x618] sm:$0xff]
        %v1697 = vld [vmem:[%s1668 + $0x620] sm:$0xff]
        %v1698 = vld [vmem:[%s1668 + $0x628] sm:$0xff]
        %v1699 = vld [vmem:[%s1668 + $0x630] sm:$0xff]
        %v1700 = vld [vmem:[%s1668 + $0x638] sm:$0xff]
        %v1701 = vld [vmem:[%s1668 + $0x800] sm:$0xff]
        %v1702 = vld [vmem:[%s1668 + $0x808] sm:$0xff]
        %v1703 = vld [vmem:[%s1668 + $0x810] sm:$0xff]
        %v1704 = vld [vmem:[%s1668 + $0x818] sm:$0xff]
        %v1705 = vld [vmem:[%s1668 + $0x820] sm:$0xff]
        %v1706 = vld [vmem:[%s1668 + $0x828] sm:$0xff]
        %v1707 = vld [vmem:[%s1668 + $0x830] sm:$0xff]
        %v1708 = vld [vmem:[%s1668 + $0x838] sm:$0xff]
        %v1709 = vld [vmem:[%s1668 + $0xa00] sm:$0xff]
        %v1710 = vld [vmem:[%s1668 + $0xa08] sm:$0xff]
        %v1711 = vld [vmem:[%s1668 + $0xa10] sm:$0xff]
        %v1712 = vld [vmem:[%s1668 + $0xa18] sm:$0xff]
        %v1713 = vld [vmem:[%s1668 + $0xa20] sm:$0xff]
        %v1714 = vld [vmem:[%s1668 + $0xa28] sm:$0xff]
        %v1715 = vld [vmem:[%s1668 + $0xa30] sm:$0xff]
        %v1716 = vld [vmem:[%s1668 + $0xa38] sm:$0xff]
        %v1717 = vld [vmem:[%s1668 + $0xc00] sm:$0xff]
        %v1718 = vld [vmem:[%s1668 + $0xc08] sm:$0xff]
        %v1719 = vld [vmem:[%s1668 + $0xc10] sm:$0xff]
        %v1720 = vld [vmem:[%s1668 + $0xc18] sm:$0xff]
        %v1721 = vld [vmem:[%s1668 + $0xc20] sm:$0xff]
        %v1722 = vld [vmem:[%s1668 + $0xc28] sm:$0xff]
        %v1723 = vld [vmem:[%s1668 + $0xc30] sm:$0xff]
        %v1724 = vld [vmem:[%s1668 + $0xc38] sm:$0xff]
        %v1725 = vld [vmem:[%s1668 + $0xe00] sm:$0xff]
        %v1726 = vld [vmem:[%s1668 + $0xe08] sm:$0xff]
        %v1727 = vld [vmem:[%s1668 + $0xe10] sm:$0xff]
        %v1728 = vld [vmem:[%s1668 + $0xe18] sm:$0xff]
        %v1729 = vld [vmem:[%s1668 + $0xe20] sm:$0xff]
        %v1730 = vld [vmem:[%s1668 + $0xe28] sm:$0xff]
        %v1731 = vld [vmem:[%s1668 + $0xe30] sm:$0xff]
        %v1732 = vld [vmem:[%s1668 + $0xe38] sm:$0xff]
        %v1733 = vstv 192
        %v1734 = vadd.s32 %v709, %v1733
        %v1735 = vadd.s32 %v710, %v1733
        %v1736 = vadd.s32 %v711, %v1733
        %v1737 = vadd.s32 %v712, %v1733
        %v1738 = vadd.s32 %v713, %v1733
        %v1739 = vadd.s32 %v714, %v1733
        %v1740 = vadd.s32 %v715, %v1733
        %v1741 = vadd.s32 %v716, %v1733
        %vm1742 = vcmp.lt.s32.totalorder %v1734, %v726
        %vm1743 = vcmp.lt.s32.totalorder %v1735, %v726
        %vm1744 = vcmp.lt.s32.totalorder %v1736, %v726
        %vm1745 = vcmp.lt.s32.totalorder %v1737, %v726
        %vm1746 = vcmp.lt.s32.totalorder %v1738, %v726
        %vm1747 = vcmp.lt.s32.totalorder %v1739, %v726
        %vm1748 = vcmp.lt.s32.totalorder %v1740, %v726
        %vm1749 = vcmp.lt.s32.totalorder %v1741, %v726
        %v1750 = vsel %vm1742, 1, 0
        %v1751 = vsel %vm1743, 1, 0
        %v1752 = vsel %vm1744, 1, 0
        %v1753 = vsel %vm1745, 1, 0
        %v1754 = vsel %vm1746, 1, 0
        %v1755 = vsel %vm1747, 1, 0
        %v1756 = vsel %vm1748, 1, 0
        %v1757 = vsel %vm1749, 1, 0
        %vm1758 = vcmp.eq.s32.totalorder %v1750, 1
        %vm1759 = vcmp.eq.s32.totalorder %v1751, 1
        %vm1760 = vcmp.eq.s32.totalorder %v1752, 1
        %vm1761 = vcmp.eq.s32.totalorder %v1753, 1
        %vm1762 = vcmp.eq.s32.totalorder %v1754, 1
        %vm1763 = vcmp.eq.s32.totalorder %v1755, 1
        %vm1764 = vcmp.eq.s32.totalorder %v1756, 1
        %vm1765 = vcmp.eq.s32.totalorder %v1757, 1
        %v1766 = vsel %vm1758, %v1669, 0.0
        %v1767 = vsel %vm1759, %v1670, 0.0
        %v1768 = vsel %vm1760, %v1671, 0.0
        %v1769 = vsel %vm1761, %v1672, 0.0
        %v1770 = vsel %vm1762, %v1673, 0.0
        %v1771 = vsel %vm1763, %v1674, 0.0
        %v1772 = vsel %vm1764, %v1675, 0.0
        %v1773 = vsel %vm1765, %v1676, 0.0
        %v1774 = vsel %vm1758, %v1677, 0.0
        %v1775 = vsel %vm1759, %v1678, 0.0
        %v1776 = vsel %vm1760, %v1679, 0.0
        %v1777 = vsel %vm1761, %v1680, 0.0
        %v1778 = vsel %vm1762, %v1681, 0.0
        %v1779 = vsel %vm1763, %v1682, 0.0
        %v1780 = vsel %vm1764, %v1683, 0.0
        %v1781 = vsel %vm1765, %v1684, 0.0
        %v1782 = vsel %vm1758, %v1685, 0.0
        %v1783 = vsel %vm1759, %v1686, 0.0
        %v1784 = vsel %vm1760, %v1687, 0.0
        %v1785 = vsel %vm1761, %v1688, 0.0
        %v1786 = vsel %vm1762, %v1689, 0.0
        %v1787 = vsel %vm1763, %v1690, 0.0
        %v1788 = vsel %vm1764, %v1691, 0.0
        %v1789 = vsel %vm1765, %v1692, 0.0
        %v1790 = vsel %vm1758, %v1693, 0.0
        %v1791 = vsel %vm1759, %v1694, 0.0
        %v1792 = vsel %vm1760, %v1695, 0.0
        %v1793 = vsel %vm1761, %v1696, 0.0
        %v1794 = vsel %vm1762, %v1697, 0.0
        %v1795 = vsel %vm1763, %v1698, 0.0
        %v1796 = vsel %vm1764, %v1699, 0.0
        %v1797 = vsel %vm1765, %v1700, 0.0
        %v1798 = vsel %vm1758, %v1701, 0.0
        %v1799 = vsel %vm1759, %v1702, 0.0
        %v1800 = vsel %vm1760, %v1703, 0.0
        %v1801 = vsel %vm1761, %v1704, 0.0
        %v1802 = vsel %vm1762, %v1705, 0.0
        %v1803 = vsel %vm1763, %v1706, 0.0
        %v1804 = vsel %vm1764, %v1707, 0.0
        %v1805 = vsel %vm1765, %v1708, 0.0
        %v1806 = vsel %vm1758, %v1709, 0.0
        %v1807 = vsel %vm1759, %v1710, 0.0
        %v1808 = vsel %vm1760, %v1711, 0.0
        %v1809 = vsel %vm1761, %v1712, 0.0
        %v1810 = vsel %vm1762, %v1713, 0.0
        %v1811 = vsel %vm1763, %v1714, 0.0
        %v1812 = vsel %vm1764, %v1715, 0.0
        %v1813 = vsel %vm1765, %v1716, 0.0
        %v1814 = vsel %vm1758, %v1717, 0.0
        %v1815 = vsel %vm1759, %v1718, 0.0
        %v1816 = vsel %vm1760, %v1719, 0.0
        %v1817 = vsel %vm1761, %v1720, 0.0
        %v1818 = vsel %vm1762, %v1721, 0.0
        %v1819 = vsel %vm1763, %v1722, 0.0
        %v1820 = vsel %vm1764, %v1723, 0.0
        %v1821 = vsel %vm1765, %v1724, 0.0
        %v1822 = vsel %vm1758, %v1725, 0.0
        %v1823 = vsel %vm1759, %v1726, 0.0
        %v1824 = vsel %vm1760, %v1727, 0.0
        %v1825 = vsel %vm1761, %v1728, 0.0
        %v1826 = vsel %vm1762, %v1729, 0.0
        %v1827 = vsel %vm1763, %v1730, 0.0
        %v1828 = vsel %vm1764, %v1731, 0.0
        %v1829 = vsel %vm1765, %v1732, 0.0
        %v1830 = vsel %vm815, %v1766, 0.0
        %v1831 = vsel %vm815, %v1767, 0.0
        %v1832 = vadd.f32 %v1830, %v1831
        %v1833 = vsel %vm815, %v1768, 0.0
        %v1834 = vadd.f32 %v1832, %v1833
        %v1835 = vsel %vm815, %v1769, 0.0
        %v1836 = vadd.f32 %v1834, %v1835
        %v1837 = vsel %vm815, %v1770, 0.0
        %v1838 = vadd.f32 %v1836, %v1837
        %v1839 = vsel %vm815, %v1771, 0.0
        %v1840 = vadd.f32 %v1838, %v1839
        %v1841 = vsel %vm815, %v1772, 0.0
        %v1842 = vadd.f32 %v1840, %v1841
        %v1843 = vsel %vm815, %v1773, 0.0
        %v1844 = vadd.f32 %v1842, %v1843
        %v1845 = vrot.slane %v1844, 4
        %v1846 = vadd.f32 %v1844, %v1845
        %v1847 = vrot.slane %v1846, 2
        %v1848 = vadd.f32 %v1846, %v1847
        %v1849 = vrot.slane %v1848, 1
        %v1850 = vadd.f32 %v1848, %v1849
        %v1851 = vsel %vm815, %v1774, 0.0
        %v1852 = vsel %vm815, %v1775, 0.0
        %v1853 = vadd.f32 %v1851, %v1852
        %v1854 = vsel %vm815, %v1776, 0.0
        %v1855 = vadd.f32 %v1853, %v1854
        %v1856 = vsel %vm815, %v1777, 0.0
        %v1857 = vadd.f32 %v1855, %v1856
        %v1858 = vsel %vm815, %v1778, 0.0
        %v1859 = vadd.f32 %v1857, %v1858
        %v1860 = vsel %vm815, %v1779, 0.0
        %v1861 = vadd.f32 %v1859, %v1860
        %v1862 = vsel %vm815, %v1780, 0.0
        %v1863 = vadd.f32 %v1861, %v1862
        %v1864 = vsel %vm815, %v1781, 0.0
        %v1865 = vadd.f32 %v1863, %v1864
        %v1866 = vrot.slane %v1865, 4
        %v1867 = vadd.f32 %v1865, %v1866
        %v1868 = vrot.slane %v1867, 2
        %v1869 = vadd.f32 %v1867, %v1868
        %v1870 = vrot.slane %v1869, 1
        %v1871 = vadd.f32 %v1869, %v1870
        %v1872 = vsel %vm815, %v1782, 0.0
        %v1873 = vsel %vm815, %v1783, 0.0
        %v1874 = vadd.f32 %v1872, %v1873
        %v1875 = vsel %vm815, %v1784, 0.0
        %v1876 = vadd.f32 %v1874, %v1875
        %v1877 = vsel %vm815, %v1785, 0.0
        %v1878 = vadd.f32 %v1876, %v1877
        %v1879 = vsel %vm815, %v1786, 0.0
        %v1880 = vadd.f32 %v1878, %v1879
        %v1881 = vsel %vm815, %v1787, 0.0
        %v1882 = vadd.f32 %v1880, %v1881
        %v1883 = vsel %vm815, %v1788, 0.0
        %v1884 = vadd.f32 %v1882, %v1883
        %v1885 = vsel %vm815, %v1789, 0.0
        %v1886 = vadd.f32 %v1884, %v1885
        %v1887 = vrot.slane %v1886, 4
        %v1888 = vadd.f32 %v1886, %v1887
        %v1889 = vrot.slane %v1888, 2
        %v1890 = vadd.f32 %v1888, %v1889
        %v1891 = vrot.slane %v1890, 1
        %v1892 = vadd.f32 %v1890, %v1891
        %v1893 = vsel %vm815, %v1790, 0.0
        %v1894 = vsel %vm815, %v1791, 0.0
        %v1895 = vadd.f32 %v1893, %v1894
        %v1896 = vsel %vm815, %v1792, 0.0
        %v1897 = vadd.f32 %v1895, %v1896
        %v1898 = vsel %vm815, %v1793, 0.0
        %v1899 = vadd.f32 %v1897, %v1898
        %v1900 = vsel %vm815, %v1794, 0.0
        %v1901 = vadd.f32 %v1899, %v1900
        %v1902 = vsel %vm815, %v1795, 0.0
        %v1903 = vadd.f32 %v1901, %v1902
        %v1904 = vsel %vm815, %v1796, 0.0
        %v1905 = vadd.f32 %v1903, %v1904
        %v1906 = vsel %vm815, %v1797, 0.0
        %v1907 = vadd.f32 %v1905, %v1906
        %v1908 = vrot.slane %v1907, 4
        %v1909 = vadd.f32 %v1907, %v1908
        %v1910 = vrot.slane %v1909, 2
        %v1911 = vadd.f32 %v1909, %v1910
        %v1912 = vrot.slane %v1911, 1
        %v1913 = vadd.f32 %v1911, %v1912
        %v1914 = vsel %vm815, %v1798, 0.0
        %v1915 = vsel %vm815, %v1799, 0.0
        %v1916 = vadd.f32 %v1914, %v1915
        %v1917 = vsel %vm815, %v1800, 0.0
        %v1918 = vadd.f32 %v1916, %v1917
        %v1919 = vsel %vm815, %v1801, 0.0
        %v1920 = vadd.f32 %v1918, %v1919
        %v1921 = vsel %vm815, %v1802, 0.0
        %v1922 = vadd.f32 %v1920, %v1921
        %v1923 = vsel %vm815, %v1803, 0.0
        %v1924 = vadd.f32 %v1922, %v1923
        %v1925 = vsel %vm815, %v1804, 0.0
        %v1926 = vadd.f32 %v1924, %v1925
        %v1927 = vsel %vm815, %v1805, 0.0
        %v1928 = vadd.f32 %v1926, %v1927
        %v1929 = vrot.slane %v1928, 4
        %v1930 = vadd.f32 %v1928, %v1929
        %v1931 = vrot.slane %v1930, 2
        %v1932 = vadd.f32 %v1930, %v1931
        %v1933 = vrot.slane %v1932, 1
        %v1934 = vadd.f32 %v1932, %v1933
        %v1935 = vsel %vm815, %v1806, 0.0
        %v1936 = vsel %vm815, %v1807, 0.0
        %v1937 = vadd.f32 %v1935, %v1936
        %v1938 = vsel %vm815, %v1808, 0.0
        %v1939 = vadd.f32 %v1937, %v1938
        %v1940 = vsel %vm815, %v1809, 0.0
        %v1941 = vadd.f32 %v1939, %v1940
        %v1942 = vsel %vm815, %v1810, 0.0
        %v1943 = vadd.f32 %v1941, %v1942
        %v1944 = vsel %vm815, %v1811, 0.0
        %v1945 = vadd.f32 %v1943, %v1944
        %v1946 = vsel %vm815, %v1812, 0.0
        %v1947 = vadd.f32 %v1945, %v1946
        %v1948 = vsel %vm815, %v1813, 0.0
        %v1949 = vadd.f32 %v1947, %v1948
        %v1950 = vrot.slane %v1949, 4
        %v1951 = vadd.f32 %v1949, %v1950
        %v1952 = vrot.slane %v1951, 2
        %v1953 = vadd.f32 %v1951, %v1952
        %v1954 = vrot.slane %v1953, 1
        %v1955 = vadd.f32 %v1953, %v1954
        %v1956 = vsel %vm815, %v1814, 0.0
        %v1957 = vsel %vm815, %v1815, 0.0
        %v1958 = vadd.f32 %v1956, %v1957
        %v1959 = vsel %vm815, %v1816, 0.0
        %v1960 = vadd.f32 %v1958, %v1959
        %v1961 = vsel %vm815, %v1817, 0.0
        %v1962 = vadd.f32 %v1960, %v1961
        %v1963 = vsel %vm815, %v1818, 0.0
        %v1964 = vadd.f32 %v1962, %v1963
        %v1965 = vsel %vm815, %v1819, 0.0
        %v1966 = vadd.f32 %v1964, %v1965
        %v1967 = vsel %vm815, %v1820, 0.0
        %v1968 = vadd.f32 %v1966, %v1967
        %v1969 = vsel %vm815, %v1821, 0.0
        %v1970 = vadd.f32 %v1968, %v1969
        %v1971 = vrot.slane %v1970, 4
        %v1972 = vadd.f32 %v1970, %v1971
        %v1973 = vrot.slane %v1972, 2
        %v1974 = vadd.f32 %v1972, %v1973
        %v1975 = vrot.slane %v1974, 1
        %v1976 = vadd.f32 %v1974, %v1975
        %v1977 = vsel %vm815, %v1822, 0.0
        %v1978 = vsel %vm815, %v1823, 0.0
        %v1979 = vadd.f32 %v1977, %v1978
        %v1980 = vsel %vm815, %v1824, 0.0
        %v1981 = vadd.f32 %v1979, %v1980
        %v1982 = vsel %vm815, %v1825, 0.0
        %v1983 = vadd.f32 %v1981, %v1982
        %v1984 = vsel %vm815, %v1826, 0.0
        %v1985 = vadd.f32 %v1983, %v1984
        %v1986 = vsel %vm815, %v1827, 0.0
        %v1987 = vadd.f32 %v1985, %v1986
        %v1988 = vsel %vm815, %v1828, 0.0
        %v1989 = vadd.f32 %v1987, %v1988
        %v1990 = vsel %vm815, %v1829, 0.0
        %v1991 = vadd.f32 %v1989, %v1990
        %v1992 = vrot.slane %v1991, 4
        %v1993 = vadd.f32 %v1991, %v1992
        %v1994 = vrot.slane %v1993, 2
        %v1995 = vadd.f32 %v1993, %v1994
        %v1996 = vrot.slane %v1995, 1
        %v1997 = vadd.f32 %v1995, %v1996
        %v1998 = vadd.f32 %v1660, %v1850
        %v1999 = vadd.f32 %v1661, %v1871
        %v2000 = vadd.f32 %v1662, %v1892
        %v2001 = vadd.f32 %v1663, %v1913
        %v2002 = vadd.f32 %v1664, %v1934
        %v2003 = vadd.f32 %v1665, %v1955
        %v2004 = vadd.f32 %v1666, %v1976
        %v2005 = vadd.f32 %v1667, %v1997
        %s2006 = scalar_lea.vmem %s604, 256 [#allocation3]
        %v2007 = vld [vmem:[%s2006] sm:$0xff]
        %v2008 = vld [vmem:[%s2006 + $0x8] sm:$0xff]
        %v2009 = vld [vmem:[%s2006 + $0x10] sm:$0xff]
        %v2010 = vld [vmem:[%s2006 + $0x18] sm:$0xff]
        %v2011 = vld [vmem:[%s2006 + $0x20] sm:$0xff]
        %v2012 = vld [vmem:[%s2006 + $0x28] sm:$0xff]
        %v2013 = vld [vmem:[%s2006 + $0x30] sm:$0xff]
        %v2014 = vld [vmem:[%s2006 + $0x38] sm:$0xff]
        %v2015 = vld [vmem:[%s2006 + $0x200] sm:$0xff]
        %v2016 = vld [vmem:[%s2006 + $0x208] sm:$0xff]
        %v2017 = vld [vmem:[%s2006 + $0x210] sm:$0xff]
        %v2018 = vld [vmem:[%s2006 + $0x218] sm:$0xff]
        %v2019 = vld [vmem:[%s2006 + $0x220] sm:$0xff]
        %v2020 = vld [vmem:[%s2006 + $0x228] sm:$0xff]
        %v2021 = vld [vmem:[%s2006 + $0x230] sm:$0xff]
        %v2022 = vld [vmem:[%s2006 + $0x238] sm:$0xff]
        %v2023 = vld [vmem:[%s2006 + $0x400] sm:$0xff]
        %v2024 = vld [vmem:[%s2006 + $0x408] sm:$0xff]
        %v2025 = vld [vmem:[%s2006 + $0x410] sm:$0xff]
        %v2026 = vld [vmem:[%s2006 + $0x418] sm:$0xff]
        %v2027 = vld [vmem:[%s2006 + $0x420] sm:$0xff]
        %v2028 = vld [vmem:[%s2006 + $0x428] sm:$0xff]
        %v2029 = vld [vmem:[%s2006 + $0x430] sm:$0xff]
        %v2030 = vld [vmem:[%s2006 + $0x438] sm:$0xff]
        %v2031 = vld [vmem:[%s2006 + $0x600] sm:$0xff]
        %v2032 = vld [vmem:[%s2006 + $0x608] sm:$0xff]
        %v2033 = vld [vmem:[%s2006 + $0x610] sm:$0xff]
        %v2034 = vld [vmem:[%s2006 + $0x618] sm:$0xff]
        %v2035 = vld [vmem:[%s2006 + $0x620] sm:$0xff]
        %v2036 = vld [vmem:[%s2006 + $0x628] sm:$0xff]
        %v2037 = vld [vmem:[%s2006 + $0x630] sm:$0xff]
        %v2038 = vld [vmem:[%s2006 + $0x638] sm:$0xff]
        %v2039 = vld [vmem:[%s2006 + $0x800] sm:$0xff]
        %v2040 = vld [vmem:[%s2006 + $0x808] sm:$0xff]
        %v2041 = vld [vmem:[%s2006 + $0x810] sm:$0xff]
        %v2042 = vld [vmem:[%s2006 + $0x818] sm:$0xff]
        %v2043 = vld [vmem:[%s2006 + $0x820] sm:$0xff]
        %v2044 = vld [vmem:[%s2006 + $0x828] sm:$0xff]
        %v2045 = vld [vmem:[%s2006 + $0x830] sm:$0xff]
        %v2046 = vld [vmem:[%s2006 + $0x838] sm:$0xff]
        %v2047 = vld [vmem:[%s2006 + $0xa00] sm:$0xff]
        %v2048 = vld [vmem:[%s2006 + $0xa08] sm:$0xff]
        %v2049 = vld [vmem:[%s2006 + $0xa10] sm:$0xff]
        %v2050 = vld [vmem:[%s2006 + $0xa18] sm:$0xff]
        %v2051 = vld [vmem:[%s2006 + $0xa20] sm:$0xff]
        %v2052 = vld [vmem:[%s2006 + $0xa28] sm:$0xff]
        %v2053 = vld [vmem:[%s2006 + $0xa30] sm:$0xff]
        %v2054 = vld [vmem:[%s2006 + $0xa38] sm:$0xff]
        %v2055 = vld [vmem:[%s2006 + $0xc00] sm:$0xff]
        %v2056 = vld [vmem:[%s2006 + $0xc08] sm:$0xff]
        %v2057 = vld [vmem:[%s2006 + $0xc10] sm:$0xff]
        %v2058 = vld [vmem:[%s2006 + $0xc18] sm:$0xff]
        %v2059 = vld [vmem:[%s2006 + $0xc20] sm:$0xff]
        %v2060 = vld [vmem:[%s2006 + $0xc28] sm:$0xff]
        %v2061 = vld [vmem:[%s2006 + $0xc30] sm:$0xff]
        %v2062 = vld [vmem:[%s2006 + $0xc38] sm:$0xff]
        %v2063 = vld [vmem:[%s2006 + $0xe00] sm:$0xff]
        %v2064 = vld [vmem:[%s2006 + $0xe08] sm:$0xff]
        %v2065 = vld [vmem:[%s2006 + $0xe10] sm:$0xff]
        %v2066 = vld [vmem:[%s2006 + $0xe18] sm:$0xff]
        %v2067 = vld [vmem:[%s2006 + $0xe20] sm:$0xff]
        %v2068 = vld [vmem:[%s2006 + $0xe28] sm:$0xff]
        %v2069 = vld [vmem:[%s2006 + $0xe30] sm:$0xff]
        %v2070 = vld [vmem:[%s2006 + $0xe38] sm:$0xff]
        %v2071 = vstv 256
        %v2072 = vadd.s32 %v709, %v2071
        %v2073 = vadd.s32 %v710, %v2071
        %v2074 = vadd.s32 %v711, %v2071
        %v2075 = vadd.s32 %v712, %v2071
        %v2076 = vadd.s32 %v713, %v2071
        %v2077 = vadd.s32 %v714, %v2071
        %v2078 = vadd.s32 %v715, %v2071
        %v2079 = vadd.s32 %v716, %v2071
        %vm2080 = vcmp.lt.s32.totalorder %v2072, %v726
        %vm2081 = vcmp.lt.s32.totalorder %v2073, %v726
        %vm2082 = vcmp.lt.s32.totalorder %v2074, %v726
        %vm2083 = vcmp.lt.s32.totalorder %v2075, %v726
        %vm2084 = vcmp.lt.s32.totalorder %v2076, %v726
        %vm2085 = vcmp.lt.s32.totalorder %v2077, %v726
        %vm2086 = vcmp.lt.s32.totalorder %v2078, %v726
        %vm2087 = vcmp.lt.s32.totalorder %v2079, %v726
        %v2088 = vsel %vm2080, 1, 0
        %v2089 = vsel %vm2081, 1, 0
        %v2090 = vsel %vm2082, 1, 0
        %v2091 = vsel %vm2083, 1, 0
        %v2092 = vsel %vm2084, 1, 0
        %v2093 = vsel %vm2085, 1, 0
        %v2094 = vsel %vm2086, 1, 0
        %v2095 = vsel %vm2087, 1, 0
        %vm2096 = vcmp.eq.s32.totalorder %v2088, 1
        %vm2097 = vcmp.eq.s32.totalorder %v2089, 1
        %vm2098 = vcmp.eq.s32.totalorder %v2090, 1
        %vm2099 = vcmp.eq.s32.totalorder %v2091, 1
        %vm2100 = vcmp.eq.s32.totalorder %v2092, 1
        %vm2101 = vcmp.eq.s32.totalorder %v2093, 1
        %vm2102 = vcmp.eq.s32.totalorder %v2094, 1
        %vm2103 = vcmp.eq.s32.totalorder %v2095, 1
        %v2104 = vsel %vm2096, %v2007, 0.0
        %v2105 = vsel %vm2097, %v2008, 0.0
        %v2106 = vsel %vm2098, %v2009, 0.0
        %v2107 = vsel %vm2099, %v2010, 0.0
        %v2108 = vsel %vm2100, %v2011, 0.0
        %v2109 = vsel %vm2101, %v2012, 0.0
        %v2110 = vsel %vm2102, %v2013, 0.0
        %v2111 = vsel %vm2103, %v2014, 0.0
        %v2112 = vsel %vm2096, %v2015, 0.0
        %v2113 = vsel %vm2097, %v2016, 0.0
        %v2114 = vsel %vm2098, %v2017, 0.0
        %v2115 = vsel %vm2099, %v2018, 0.0
        %v2116 = vsel %vm2100, %v2019, 0.0
        %v2117 = vsel %vm2101, %v2020, 0.0
        %v2118 = vsel %vm2102, %v2021, 0.0
        %v2119 = vsel %vm2103, %v2022, 0.0
        %v2120 = vsel %vm2096, %v2023, 0.0
        %v2121 = vsel %vm2097, %v2024, 0.0
        %v2122 = vsel %vm2098, %v2025, 0.0
        %v2123 = vsel %vm2099, %v2026, 0.0
        %v2124 = vsel %vm2100, %v2027, 0.0
        %v2125 = vsel %vm2101, %v2028, 0.0
        %v2126 = vsel %vm2102, %v2029, 0.0
        %v2127 = vsel %vm2103, %v2030, 0.0
        %v2128 = vsel %vm2096, %v2031, 0.0
        %v2129 = vsel %vm2097, %v2032, 0.0
        %v2130 = vsel %vm2098, %v2033, 0.0
        %v2131 = vsel %vm2099, %v2034, 0.0
        %v2132 = vsel %vm2100, %v2035, 0.0
        %v2133 = vsel %vm2101, %v2036, 0.0
        %v2134 = vsel %vm2102, %v2037, 0.0
        %v2135 = vsel %vm2103, %v2038, 0.0
        %v2136 = vsel %vm2096, %v2039, 0.0
        %v2137 = vsel %vm2097, %v2040, 0.0
        %v2138 = vsel %vm2098, %v2041, 0.0
        %v2139 = vsel %vm2099, %v2042, 0.0
        %v2140 = vsel %vm2100, %v2043, 0.0
        %v2141 = vsel %vm2101, %v2044, 0.0
        %v2142 = vsel %vm2102, %v2045, 0.0
        %v2143 = vsel %vm2103, %v2046, 0.0
        %v2144 = vsel %vm2096, %v2047, 0.0
        %v2145 = vsel %vm2097, %v2048, 0.0
        %v2146 = vsel %vm2098, %v2049, 0.0
        %v2147 = vsel %vm2099, %v2050, 0.0
        %v2148 = vsel %vm2100, %v2051, 0.0
        %v2149 = vsel %vm2101, %v2052, 0.0
        %v2150 = vsel %vm2102, %v2053, 0.0
        %v2151 = vsel %vm2103, %v2054, 0.0
        %v2152 = vsel %vm2096, %v2055, 0.0
        %v2153 = vsel %vm2097, %v2056, 0.0
        %v2154 = vsel %vm2098, %v2057, 0.0
        %v2155 = vsel %vm2099, %v2058, 0.0
        %v2156 = vsel %vm2100, %v2059, 0.0
        %v2157 = vsel %vm2101, %v2060, 0.0
        %v2158 = vsel %vm2102, %v2061, 0.0
        %v2159 = vsel %vm2103, %v2062, 0.0
        %v2160 = vsel %vm2096, %v2063, 0.0
        %v2161 = vsel %vm2097, %v2064, 0.0
        %v2162 = vsel %vm2098, %v2065, 0.0
        %v2163 = vsel %vm2099, %v2066, 0.0
        %v2164 = vsel %vm2100, %v2067, 0.0
        %v2165 = vsel %vm2101, %v2068, 0.0
        %v2166 = vsel %vm2102, %v2069, 0.0
        %v2167 = vsel %vm2103, %v2070, 0.0
        %v2168 = vsel %vm815, %v2104, 0.0
        %v2169 = vsel %vm815, %v2105, 0.0
        %v2170 = vadd.f32 %v2168, %v2169
        %v2171 = vsel %vm815, %v2106, 0.0
        %v2172 = vadd.f32 %v2170, %v2171
        %v2173 = vsel %vm815, %v2107, 0.0
        %v2174 = vadd.f32 %v2172, %v2173
        %v2175 = vsel %vm815, %v2108, 0.0
        %v2176 = vadd.f32 %v2174, %v2175
        %v2177 = vsel %vm815, %v2109, 0.0
        %v2178 = vadd.f32 %v2176, %v2177
        %v2179 = vsel %vm815, %v2110, 0.0
        %v2180 = vadd.f32 %v2178, %v2179
        %v2181 = vsel %vm815, %v2111, 0.0
        %v2182 = vadd.f32 %v2180, %v2181
        %v2183 = vrot.slane %v2182, 4
        %v2184 = vadd.f32 %v2182, %v2183
        %v2185 = vrot.slane %v2184, 2
        %v2186 = vadd.f32 %v2184, %v2185
        %v2187 = vrot.slane %v2186, 1
        %v2188 = vadd.f32 %v2186, %v2187
        %v2189 = vsel %vm815, %v2112, 0.0
        %v2190 = vsel %vm815, %v2113, 0.0
        %v2191 = vadd.f32 %v2189, %v2190
        %v2192 = vsel %vm815, %v2114, 0.0
        %v2193 = vadd.f32 %v2191, %v2192
        %v2194 = vsel %vm815, %v2115, 0.0
        %v2195 = vadd.f32 %v2193, %v2194
        %v2196 = vsel %vm815, %v2116, 0.0
        %v2197 = vadd.f32 %v2195, %v2196
        %v2198 = vsel %vm815, %v2117, 0.0
        %v2199 = vadd.f32 %v2197, %v2198
        %v2200 = vsel %vm815, %v2118, 0.0
        %v2201 = vadd.f32 %v2199, %v2200
        %v2202 = vsel %vm815, %v2119, 0.0
        %v2203 = vadd.f32 %v2201, %v2202
        %v2204 = vrot.slane %v2203, 4
        %v2205 = vadd.f32 %v2203, %v2204
        %v2206 = vrot.slane %v2205, 2
        %v2207 = vadd.f32 %v2205, %v2206
        %v2208 = vrot.slane %v2207, 1
        %v2209 = vadd.f32 %v2207, %v2208
        %v2210 = vsel %vm815, %v2120, 0.0
        %v2211 = vsel %vm815, %v2121, 0.0
        %v2212 = vadd.f32 %v2210, %v2211
        %v2213 = vsel %vm815, %v2122, 0.0
        %v2214 = vadd.f32 %v2212, %v2213
        %v2215 = vsel %vm815, %v2123, 0.0
        %v2216 = vadd.f32 %v2214, %v2215
        %v2217 = vsel %vm815, %v2124, 0.0
        %v2218 = vadd.f32 %v2216, %v2217
        %v2219 = vsel %vm815, %v2125, 0.0
        %v2220 = vadd.f32 %v2218, %v2219
        %v2221 = vsel %vm815, %v2126, 0.0
        %v2222 = vadd.f32 %v2220, %v2221
        %v2223 = vsel %vm815, %v2127, 0.0
        %v2224 = vadd.f32 %v2222, %v2223
        %v2225 = vrot.slane %v2224, 4
        %v2226 = vadd.f32 %v2224, %v2225
        %v2227 = vrot.slane %v2226, 2
        %v2228 = vadd.f32 %v2226, %v2227
        %v2229 = vrot.slane %v2228, 1
        %v2230 = vadd.f32 %v2228, %v2229
        %v2231 = vsel %vm815, %v2128, 0.0
        %v2232 = vsel %vm815, %v2129, 0.0
        %v2233 = vadd.f32 %v2231, %v2232
        %v2234 = vsel %vm815, %v2130, 0.0
        %v2235 = vadd.f32 %v2233, %v2234
        %v2236 = vsel %vm815, %v2131, 0.0
        %v2237 = vadd.f32 %v2235, %v2236
        %v2238 = vsel %vm815, %v2132, 0.0
        %v2239 = vadd.f32 %v2237, %v2238
        %v2240 = vsel %vm815, %v2133, 0.0
        %v2241 = vadd.f32 %v2239, %v2240
        %v2242 = vsel %vm815, %v2134, 0.0
        %v2243 = vadd.f32 %v2241, %v2242
        %v2244 = vsel %vm815, %v2135, 0.0
        %v2245 = vadd.f32 %v2243, %v2244
        %v2246 = vrot.slane %v2245, 4
        %v2247 = vadd.f32 %v2245, %v2246
        %v2248 = vrot.slane %v2247, 2
        %v2249 = vadd.f32 %v2247, %v2248
        %v2250 = vrot.slane %v2249, 1
        %v2251 = vadd.f32 %v2249, %v2250
        %v2252 = vsel %vm815, %v2136, 0.0
        %v2253 = vsel %vm815, %v2137, 0.0
        %v2254 = vadd.f32 %v2252, %v2253
        %v2255 = vsel %vm815, %v2138, 0.0
        %v2256 = vadd.f32 %v2254, %v2255
        %v2257 = vsel %vm815, %v2139, 0.0
        %v2258 = vadd.f32 %v2256, %v2257
        %v2259 = vsel %vm815, %v2140, 0.0
        %v2260 = vadd.f32 %v2258, %v2259
        %v2261 = vsel %vm815, %v2141, 0.0
        %v2262 = vadd.f32 %v2260, %v2261
        %v2263 = vsel %vm815, %v2142, 0.0
        %v2264 = vadd.f32 %v2262, %v2263
        %v2265 = vsel %vm815, %v2143, 0.0
        %v2266 = vadd.f32 %v2264, %v2265
        %v2267 = vrot.slane %v2266, 4
        %v2268 = vadd.f32 %v2266, %v2267
        %v2269 = vrot.slane %v2268, 2
        %v2270 = vadd.f32 %v2268, %v2269
        %v2271 = vrot.slane %v2270, 1
        %v2272 = vadd.f32 %v2270, %v2271
        %v2273 = vsel %vm815, %v2144, 0.0
        %v2274 = vsel %vm815, %v2145, 0.0
        %v2275 = vadd.f32 %v2273, %v2274
        %v2276 = vsel %vm815, %v2146, 0.0
        %v2277 = vadd.f32 %v2275, %v2276
        %v2278 = vsel %vm815, %v2147, 0.0
        %v2279 = vadd.f32 %v2277, %v2278
        %v2280 = vsel %vm815, %v2148, 0.0
        %v2281 = vadd.f32 %v2279, %v2280
        %v2282 = vsel %vm815, %v2149, 0.0
        %v2283 = vadd.f32 %v2281, %v2282
        %v2284 = vsel %vm815, %v2150, 0.0
        %v2285 = vadd.f32 %v2283, %v2284
        %v2286 = vsel %vm815, %v2151, 0.0
        %v2287 = vadd.f32 %v2285, %v2286
        %v2288 = vrot.slane %v2287, 4
        %v2289 = vadd.f32 %v2287, %v2288
        %v2290 = vrot.slane %v2289, 2
        %v2291 = vadd.f32 %v2289, %v2290
        %v2292 = vrot.slane %v2291, 1
        %v2293 = vadd.f32 %v2291, %v2292
        %v2294 = vsel %vm815, %v2152, 0.0
        %v2295 = vsel %vm815, %v2153, 0.0
        %v2296 = vadd.f32 %v2294, %v2295
        %v2297 = vsel %vm815, %v2154, 0.0
        %v2298 = vadd.f32 %v2296, %v2297
        %v2299 = vsel %vm815, %v2155, 0.0
        %v2300 = vadd.f32 %v2298, %v2299
        %v2301 = vsel %vm815, %v2156, 0.0
        %v2302 = vadd.f32 %v2300, %v2301
        %v2303 = vsel %vm815, %v2157, 0.0
        %v2304 = vadd.f32 %v2302, %v2303
        %v2305 = vsel %vm815, %v2158, 0.0
        %v2306 = vadd.f32 %v2304, %v2305
        %v2307 = vsel %vm815, %v2159, 0.0
        %v2308 = vadd.f32 %v2306, %v2307
        %v2309 = vrot.slane %v2308, 4
        %v2310 = vadd.f32 %v2308, %v2309
        %v2311 = vrot.slane %v2310, 2
        %v2312 = vadd.f32 %v2310, %v2311
        %v2313 = vrot.slane %v2312, 1
        %v2314 = vadd.f32 %v2312, %v2313
        %v2315 = vsel %vm815, %v2160, 0.0
        %v2316 = vsel %vm815, %v2161, 0.0
        %v2317 = vadd.f32 %v2315, %v2316
        %v2318 = vsel %vm815, %v2162, 0.0
        %v2319 = vadd.f32 %v2317, %v2318
        %v2320 = vsel %vm815, %v2163, 0.0
        %v2321 = vadd.f32 %v2319, %v2320
        %v2322 = vsel %vm815, %v2164, 0.0
        %v2323 = vadd.f32 %v2321, %v2322
        %v2324 = vsel %vm815, %v2165, 0.0
        %v2325 = vadd.f32 %v2323, %v2324
        %v2326 = vsel %vm815, %v2166, 0.0
        %v2327 = vadd.f32 %v2325, %v2326
        %v2328 = vsel %vm815, %v2167, 0.0
        %v2329 = vadd.f32 %v2327, %v2328
        %v2330 = vrot.slane %v2329, 4
        %v2331 = vadd.f32 %v2329, %v2330
        %v2332 = vrot.slane %v2331, 2
        %v2333 = vadd.f32 %v2331, %v2332
        %v2334 = vrot.slane %v2333, 1
        %v2335 = vadd.f32 %v2333, %v2334
        %v2336 = vadd.f32 %v1998, %v2188
        %v2337 = vadd.f32 %v1999, %v2209
        %v2338 = vadd.f32 %v2000, %v2230
        %v2339 = vadd.f32 %v2001, %v2251
        %v2340 = vadd.f32 %v2002, %v2272
        %v2341 = vadd.f32 %v2003, %v2293
        %v2342 = vadd.f32 %v2004, %v2314
        %v2343 = vadd.f32 %v2005, %v2335
        %s2344 = scalar_lea.vmem %s604, 320 [#allocation3]
        %v2345 = vld [vmem:[%s2344] sm:$0xff]
        %v2346 = vld [vmem:[%s2344 + $0x8] sm:$0xff]
        %v2347 = vld [vmem:[%s2344 + $0x10] sm:$0xff]
        %v2348 = vld [vmem:[%s2344 + $0x18] sm:$0xff]
        %v2349 = vld [vmem:[%s2344 + $0x20] sm:$0xff]
        %v2350 = vld [vmem:[%s2344 + $0x28] sm:$0xff]
        %v2351 = vld [vmem:[%s2344 + $0x30] sm:$0xff]
        %v2352 = vld [vmem:[%s2344 + $0x38] sm:$0xff]
        %v2353 = vld [vmem:[%s2344 + $0x200] sm:$0xff]
        %v2354 = vld [vmem:[%s2344 + $0x208] sm:$0xff]
        %v2355 = vld [vmem:[%s2344 + $0x210] sm:$0xff]
        %v2356 = vld [vmem:[%s2344 + $0x218] sm:$0xff]
        %v2357 = vld [vmem:[%s2344 + $0x220] sm:$0xff]
        %v2358 = vld [vmem:[%s2344 + $0x228] sm:$0xff]
        %v2359 = vld [vmem:[%s2344 + $0x230] sm:$0xff]
        %v2360 = vld [vmem:[%s2344 + $0x238] sm:$0xff]
        %v2361 = vld [vmem:[%s2344 + $0x400] sm:$0xff]
        %v2362 = vld [vmem:[%s2344 + $0x408] sm:$0xff]
        %v2363 = vld [vmem:[%s2344 + $0x410] sm:$0xff]
        %v2364 = vld [vmem:[%s2344 + $0x418] sm:$0xff]
        %v2365 = vld [vmem:[%s2344 + $0x420] sm:$0xff]
        %v2366 = vld [vmem:[%s2344 + $0x428] sm:$0xff]
        %v2367 = vld [vmem:[%s2344 + $0x430] sm:$0xff]
        %v2368 = vld [vmem:[%s2344 + $0x438] sm:$0xff]
        %v2369 = vld [vmem:[%s2344 + $0x600] sm:$0xff]
        %v2370 = vld [vmem:[%s2344 + $0x608] sm:$0xff]
        %v2371 = vld [vmem:[%s2344 + $0x610] sm:$0xff]
        %v2372 = vld [vmem:[%s2344 + $0x618] sm:$0xff]
        %v2373 = vld [vmem:[%s2344 + $0x620] sm:$0xff]
        %v2374 = vld [vmem:[%s2344 + $0x628] sm:$0xff]
        %v2375 = vld [vmem:[%s2344 + $0x630] sm:$0xff]
        %v2376 = vld [vmem:[%s2344 + $0x638] sm:$0xff]
        %v2377 = vld [vmem:[%s2344 + $0x800] sm:$0xff]
        %v2378 = vld [vmem:[%s2344 + $0x808] sm:$0xff]
        %v2379 = vld [vmem:[%s2344 + $0x810] sm:$0xff]
        %v2380 = vld [vmem:[%s2344 + $0x818] sm:$0xff]
        %v2381 = vld [vmem:[%s2344 + $0x820] sm:$0xff]
        %v2382 = vld [vmem:[%s2344 + $0x828] sm:$0xff]
        %v2383 = vld [vmem:[%s2344 + $0x830] sm:$0xff]
        %v2384 = vld [vmem:[%s2344 + $0x838] sm:$0xff]
        %v2385 = vld [vmem:[%s2344 + $0xa00] sm:$0xff]
        %v2386 = vld [vmem:[%s2344 + $0xa08] sm:$0xff]
        %v2387 = vld [vmem:[%s2344 + $0xa10] sm:$0xff]
        %v2388 = vld [vmem:[%s2344 + $0xa18] sm:$0xff]
        %v2389 = vld [vmem:[%s2344 + $0xa20] sm:$0xff]
        %v2390 = vld [vmem:[%s2344 + $0xa28] sm:$0xff]
        %v2391 = vld [vmem:[%s2344 + $0xa30] sm:$0xff]
        %v2392 = vld [vmem:[%s2344 + $0xa38] sm:$0xff]
        %v2393 = vld [vmem:[%s2344 + $0xc00] sm:$0xff]
        %v2394 = vld [vmem:[%s2344 + $0xc08] sm:$0xff]
        %v2395 = vld [vmem:[%s2344 + $0xc10] sm:$0xff]
        %v2396 = vld [vmem:[%s2344 + $0xc18] sm:$0xff]
        %v2397 = vld [vmem:[%s2344 + $0xc20] sm:$0xff]
        %v2398 = vld [vmem:[%s2344 + $0xc28] sm:$0xff]
        %v2399 = vld [vmem:[%s2344 + $0xc30] sm:$0xff]
        %v2400 = vld [vmem:[%s2344 + $0xc38] sm:$0xff]
        %v2401 = vld [vmem:[%s2344 + $0xe00] sm:$0xff]
        %v2402 = vld [vmem:[%s2344 + $0xe08] sm:$0xff]
        %v2403 = vld [vmem:[%s2344 + $0xe10] sm:$0xff]
        %v2404 = vld [vmem:[%s2344 + $0xe18] sm:$0xff]
        %v2405 = vld [vmem:[%s2344 + $0xe20] sm:$0xff]
        %v2406 = vld [vmem:[%s2344 + $0xe28] sm:$0xff]
        %v2407 = vld [vmem:[%s2344 + $0xe30] sm:$0xff]
        %v2408 = vld [vmem:[%s2344 + $0xe38] sm:$0xff]
        %v2409 = vstv 320
        %v2410 = vadd.s32 %v709, %v2409
        %v2411 = vadd.s32 %v710, %v2409
        %v2412 = vadd.s32 %v711, %v2409
        %v2413 = vadd.s32 %v712, %v2409
        %v2414 = vadd.s32 %v713, %v2409
        %v2415 = vadd.s32 %v714, %v2409
        %v2416 = vadd.s32 %v715, %v2409
        %v2417 = vadd.s32 %v716, %v2409
        %vm2418 = vcmp.lt.s32.totalorder %v2410, %v726
        %vm2419 = vcmp.lt.s32.totalorder %v2411, %v726
        %vm2420 = vcmp.lt.s32.totalorder %v2412, %v726
        %vm2421 = vcmp.lt.s32.totalorder %v2413, %v726
        %vm2422 = vcmp.lt.s32.totalorder %v2414, %v726
        %vm2423 = vcmp.lt.s32.totalorder %v2415, %v726
        %vm2424 = vcmp.lt.s32.totalorder %v2416, %v726
        %vm2425 = vcmp.lt.s32.totalorder %v2417, %v726
        %v2426 = vsel %vm2418, 1, 0
        %v2427 = vsel %vm2419, 1, 0
        %v2428 = vsel %vm2420, 1, 0
        %v2429 = vsel %vm2421, 1, 0
        %v2430 = vsel %vm2422, 1, 0
        %v2431 = vsel %vm2423, 1, 0
        %v2432 = vsel %vm2424, 1, 0
        %v2433 = vsel %vm2425, 1, 0
        %vm2434 = vcmp.eq.s32.totalorder %v2426, 1
        %vm2435 = vcmp.eq.s32.totalorder %v2427, 1
        %vm2436 = vcmp.eq.s32.totalorder %v2428, 1
        %vm2437 = vcmp.eq.s32.totalorder %v2429, 1
        %vm2438 = vcmp.eq.s32.totalorder %v2430, 1
        %vm2439 = vcmp.eq.s32.totalorder %v2431, 1
        %vm2440 = vcmp.eq.s32.totalorder %v2432, 1
        %vm2441 = vcmp.eq.s32.totalorder %v2433, 1
        %v2442 = vsel %vm2434, %v2345, 0.0
        %v2443 = vsel %vm2435, %v2346, 0.0
        %v2444 = vsel %vm2436, %v2347, 0.0
        %v2445 = vsel %vm2437, %v2348, 0.0
        %v2446 = vsel %vm2438, %v2349, 0.0
        %v2447 = vsel %vm2439, %v2350, 0.0
        %v2448 = vsel %vm2440, %v2351, 0.0
        %v2449 = vsel %vm2441, %v2352, 0.0
        %v2450 = vsel %vm2434, %v2353, 0.0
        %v2451 = vsel %vm2435, %v2354, 0.0
        %v2452 = vsel %vm2436, %v2355, 0.0
        %v2453 = vsel %vm2437, %v2356, 0.0
        %v2454 = vsel %vm2438, %v2357, 0.0
        %v2455 = vsel %vm2439, %v2358, 0.0
        %v2456 = vsel %vm2440, %v2359, 0.0
        %v2457 = vsel %vm2441, %v2360, 0.0
        %v2458 = vsel %vm2434, %v2361, 0.0
        %v2459 = vsel %vm2435, %v2362, 0.0
        %v2460 = vsel %vm2436, %v2363, 0.0
        %v2461 = vsel %vm2437, %v2364, 0.0
        %v2462 = vsel %vm2438, %v2365, 0.0
        %v2463 = vsel %vm2439, %v2366, 0.0
        %v2464 = vsel %vm2440, %v2367, 0.0
        %v2465 = vsel %vm2441, %v2368, 0.0
        %v2466 = vsel %vm2434, %v2369, 0.0
        %v2467 = vsel %vm2435, %v2370, 0.0
        %v2468 = vsel %vm2436, %v2371, 0.0
        %v2469 = vsel %vm2437, %v2372, 0.0
        %v2470 = vsel %vm2438, %v2373, 0.0
        %v2471 = vsel %vm2439, %v2374, 0.0
        %v2472 = vsel %vm2440, %v2375, 0.0
        %v2473 = vsel %vm2441, %v2376, 0.0
        %v2474 = vsel %vm2434, %v2377, 0.0
        %v2475 = vsel %vm2435, %v2378, 0.0
        %v2476 = vsel %vm2436, %v2379, 0.0
        %v2477 = vsel %vm2437, %v2380, 0.0
        %v2478 = vsel %vm2438, %v2381, 0.0
        %v2479 = vsel %vm2439, %v2382, 0.0
        %v2480 = vsel %vm2440, %v2383, 0.0
        %v2481 = vsel %vm2441, %v2384, 0.0
        %v2482 = vsel %vm2434, %v2385, 0.0
        %v2483 = vsel %vm2435, %v2386, 0.0
        %v2484 = vsel %vm2436, %v2387, 0.0
        %v2485 = vsel %vm2437, %v2388, 0.0
        %v2486 = vsel %vm2438, %v2389, 0.0
        %v2487 = vsel %vm2439, %v2390, 0.0
        %v2488 = vsel %vm2440, %v2391, 0.0
        %v2489 = vsel %vm2441, %v2392, 0.0
        %v2490 = vsel %vm2434, %v2393, 0.0
        %v2491 = vsel %vm2435, %v2394, 0.0
        %v2492 = vsel %vm2436, %v2395, 0.0
        %v2493 = vsel %vm2437, %v2396, 0.0
        %v2494 = vsel %vm2438, %v2397, 0.0
        %v2495 = vsel %vm2439, %v2398, 0.0
        %v2496 = vsel %vm2440, %v2399, 0.0
        %v2497 = vsel %vm2441, %v2400, 0.0
        %v2498 = vsel %vm2434, %v2401, 0.0
        %v2499 = vsel %vm2435, %v2402, 0.0
        %v2500 = vsel %vm2436, %v2403, 0.0
        %v2501 = vsel %vm2437, %v2404, 0.0
        %v2502 = vsel %vm2438, %v2405, 0.0
        %v2503 = vsel %vm2439, %v2406, 0.0
        %v2504 = vsel %vm2440, %v2407, 0.0
        %v2505 = vsel %vm2441, %v2408, 0.0
        %v2506 = vsel %vm815, %v2442, 0.0
        %v2507 = vsel %vm815, %v2443, 0.0
        %v2508 = vadd.f32 %v2506, %v2507
        %v2509 = vsel %vm815, %v2444, 0.0
        %v2510 = vadd.f32 %v2508, %v2509
        %v2511 = vsel %vm815, %v2445, 0.0
        %v2512 = vadd.f32 %v2510, %v2511
        %v2513 = vsel %vm815, %v2446, 0.0
        %v2514 = vadd.f32 %v2512, %v2513
        %v2515 = vsel %vm815, %v2447, 0.0
        %v2516 = vadd.f32 %v2514, %v2515
        %v2517 = vsel %vm815, %v2448, 0.0
        %v2518 = vadd.f32 %v2516, %v2517
        %v2519 = vsel %vm815, %v2449, 0.0
        %v2520 = vadd.f32 %v2518, %v2519
        %v2521 = vrot.slane %v2520, 4
        %v2522 = vadd.f32 %v2520, %v2521
        %v2523 = vrot.slane %v2522, 2
        %v2524 = vadd.f32 %v2522, %v2523
        %v2525 = vrot.slane %v2524, 1
        %v2526 = vadd.f32 %v2524, %v2525
        %v2527 = vsel %vm815, %v2450, 0.0
        %v2528 = vsel %vm815, %v2451, 0.0
        %v2529 = vadd.f32 %v2527, %v2528
        %v2530 = vsel %vm815, %v2452, 0.0
        %v2531 = vadd.f32 %v2529, %v2530
        %v2532 = vsel %vm815, %v2453, 0.0
        %v2533 = vadd.f32 %v2531, %v2532
        %v2534 = vsel %vm815, %v2454, 0.0
        %v2535 = vadd.f32 %v2533, %v2534
        %v2536 = vsel %vm815, %v2455, 0.0
        %v2537 = vadd.f32 %v2535, %v2536
        %v2538 = vsel %vm815, %v2456, 0.0
        %v2539 = vadd.f32 %v2537, %v2538
        %v2540 = vsel %vm815, %v2457, 0.0
        %v2541 = vadd.f32 %v2539, %v2540
        %v2542 = vrot.slane %v2541, 4
        %v2543 = vadd.f32 %v2541, %v2542
        %v2544 = vrot.slane %v2543, 2
        %v2545 = vadd.f32 %v2543, %v2544
        %v2546 = vrot.slane %v2545, 1
        %v2547 = vadd.f32 %v2545, %v2546
        %v2548 = vsel %vm815, %v2458, 0.0
        %v2549 = vsel %vm815, %v2459, 0.0
        %v2550 = vadd.f32 %v2548, %v2549
        %v2551 = vsel %vm815, %v2460, 0.0
        %v2552 = vadd.f32 %v2550, %v2551
        %v2553 = vsel %vm815, %v2461, 0.0
        %v2554 = vadd.f32 %v2552, %v2553
        %v2555 = vsel %vm815, %v2462, 0.0
        %v2556 = vadd.f32 %v2554, %v2555
        %v2557 = vsel %vm815, %v2463, 0.0
        %v2558 = vadd.f32 %v2556, %v2557
        %v2559 = vsel %vm815, %v2464, 0.0
        %v2560 = vadd.f32 %v2558, %v2559
        %v2561 = vsel %vm815, %v2465, 0.0
        %v2562 = vadd.f32 %v2560, %v2561
        %v2563 = vrot.slane %v2562, 4
        %v2564 = vadd.f32 %v2562, %v2563
        %v2565 = vrot.slane %v2564, 2
        %v2566 = vadd.f32 %v2564, %v2565
        %v2567 = vrot.slane %v2566, 1
        %v2568 = vadd.f32 %v2566, %v2567
        %v2569 = vsel %vm815, %v2466, 0.0
        %v2570 = vsel %vm815, %v2467, 0.0
        %v2571 = vadd.f32 %v2569, %v2570
        %v2572 = vsel %vm815, %v2468, 0.0
        %v2573 = vadd.f32 %v2571, %v2572
        %v2574 = vsel %vm815, %v2469, 0.0
        %v2575 = vadd.f32 %v2573, %v2574
        %v2576 = vsel %vm815, %v2470, 0.0
        %v2577 = vadd.f32 %v2575, %v2576
        %v2578 = vsel %vm815, %v2471, 0.0
        %v2579 = vadd.f32 %v2577, %v2578
        %v2580 = vsel %vm815, %v2472, 0.0
        %v2581 = vadd.f32 %v2579, %v2580
        %v2582 = vsel %vm815, %v2473, 0.0
        %v2583 = vadd.f32 %v2581, %v2582
        %v2584 = vrot.slane %v2583, 4
        %v2585 = vadd.f32 %v2583, %v2584
        %v2586 = vrot.slane %v2585, 2
        %v2587 = vadd.f32 %v2585, %v2586
        %v2588 = vrot.slane %v2587, 1
        %v2589 = vadd.f32 %v2587, %v2588
        %v2590 = vsel %vm815, %v2474, 0.0
        %v2591 = vsel %vm815, %v2475, 0.0
        %v2592 = vadd.f32 %v2590, %v2591
        %v2593 = vsel %vm815, %v2476, 0.0
        %v2594 = vadd.f32 %v2592, %v2593
        %v2595 = vsel %vm815, %v2477, 0.0
        %v2596 = vadd.f32 %v2594, %v2595
        %v2597 = vsel %vm815, %v2478, 0.0
        %v2598 = vadd.f32 %v2596, %v2597
        %v2599 = vsel %vm815, %v2479, 0.0
        %v2600 = vadd.f32 %v2598, %v2599
        %v2601 = vsel %vm815, %v2480, 0.0
        %v2602 = vadd.f32 %v2600, %v2601
        %v2603 = vsel %vm815, %v2481, 0.0
        %v2604 = vadd.f32 %v2602, %v2603
        %v2605 = vrot.slane %v2604, 4
        %v2606 = vadd.f32 %v2604, %v2605
        %v2607 = vrot.slane %v2606, 2
        %v2608 = vadd.f32 %v2606, %v2607
        %v2609 = vrot.slane %v2608, 1
        %v2610 = vadd.f32 %v2608, %v2609
        %v2611 = vsel %vm815, %v2482, 0.0
        %v2612 = vsel %vm815, %v2483, 0.0
        %v2613 = vadd.f32 %v2611, %v2612
        %v2614 = vsel %vm815, %v2484, 0.0
        %v2615 = vadd.f32 %v2613, %v2614
        %v2616 = vsel %vm815, %v2485, 0.0
        %v2617 = vadd.f32 %v2615, %v2616
        %v2618 = vsel %vm815, %v2486, 0.0
        %v2619 = vadd.f32 %v2617, %v2618
        %v2620 = vsel %vm815, %v2487, 0.0
        %v2621 = vadd.f32 %v2619, %v2620
        %v2622 = vsel %vm815, %v2488, 0.0
        %v2623 = vadd.f32 %v2621, %v2622
        %v2624 = vsel %vm815, %v2489, 0.0
        %v2625 = vadd.f32 %v2623, %v2624
        %v2626 = vrot.slane %v2625, 4
        %v2627 = vadd.f32 %v2625, %v2626
        %v2628 = vrot.slane %v2627, 2
        %v2629 = vadd.f32 %v2627, %v2628
        %v2630 = vrot.slane %v2629, 1
        %v2631 = vadd.f32 %v2629, %v2630
        %v2632 = vsel %vm815, %v2490, 0.0
        %v2633 = vsel %vm815, %v2491, 0.0
        %v2634 = vadd.f32 %v2632, %v2633
        %v2635 = vsel %vm815, %v2492, 0.0
        %v2636 = vadd.f32 %v2634, %v2635
        %v2637 = vsel %vm815, %v2493, 0.0
        %v2638 = vadd.f32 %v2636, %v2637
        %v2639 = vsel %vm815, %v2494, 0.0
        %v2640 = vadd.f32 %v2638, %v2639
        %v2641 = vsel %vm815, %v2495, 0.0
        %v2642 = vadd.f32 %v2640, %v2641
        %v2643 = vsel %vm815, %v2496, 0.0
        %v2644 = vadd.f32 %v2642, %v2643
        %v2645 = vsel %vm815, %v2497, 0.0
        %v2646 = vadd.f32 %v2644, %v2645
        %v2647 = vrot.slane %v2646, 4
        %v2648 = vadd.f32 %v2646, %v2647
        %v2649 = vrot.slane %v2648, 2
        %v2650 = vadd.f32 %v2648, %v2649
        %v2651 = vrot.slane %v2650, 1
        %v2652 = vadd.f32 %v2650, %v2651
        %v2653 = vsel %vm815, %v2498, 0.0
        %v2654 = vsel %vm815, %v2499, 0.0
        %v2655 = vadd.f32 %v2653, %v2654
        %v2656 = vsel %vm815, %v2500, 0.0
        %v2657 = vadd.f32 %v2655, %v2656
        %v2658 = vsel %vm815, %v2501, 0.0
        %v2659 = vadd.f32 %v2657, %v2658
        %v2660 = vsel %vm815, %v2502, 0.0
        %v2661 = vadd.f32 %v2659, %v2660
        %v2662 = vsel %vm815, %v2503, 0.0
        %v2663 = vadd.f32 %v2661, %v2662
        %v2664 = vsel %vm815, %v2504, 0.0
        %v2665 = vadd.f32 %v2663, %v2664
        %v2666 = vsel %vm815, %v2505, 0.0
        %v2667 = vadd.f32 %v2665, %v2666
        %v2668 = vrot.slane %v2667, 4
        %v2669 = vadd.f32 %v2667, %v2668
        %v2670 = vrot.slane %v2669, 2
        %v2671 = vadd.f32 %v2669, %v2670
        %v2672 = vrot.slane %v2671, 1
        %v2673 = vadd.f32 %v2671, %v2672
        %v2674 = vadd.f32 %v2336, %v2526
        %v2675 = vadd.f32 %v2337, %v2547
        %v2676 = vadd.f32 %v2338, %v2568
        %v2677 = vadd.f32 %v2339, %v2589
        %v2678 = vadd.f32 %v2340, %v2610
        %v2679 = vadd.f32 %v2341, %v2631
        %v2680 = vadd.f32 %v2342, %v2652
        %v2681 = vadd.f32 %v2343, %v2673
        %s2682 = scalar_lea.vmem %s604, 384 [#allocation3]
        %v2683 = vld [vmem:[%s2682] sm:$0xff]
        %v2684 = vld [vmem:[%s2682 + $0x8] sm:$0xff]
        %v2685 = vld [vmem:[%s2682 + $0x10] sm:$0xff]
        %v2686 = vld [vmem:[%s2682 + $0x18] sm:$0xff]
        %v2687 = vld [vmem:[%s2682 + $0x20] sm:$0xff]
        %v2688 = vld [vmem:[%s2682 + $0x28] sm:$0xff]
        %v2689 = vld [vmem:[%s2682 + $0x30] sm:$0xff]
        %v2690 = vld [vmem:[%s2682 + $0x38] sm:$0xff]
        %v2691 = vld [vmem:[%s2682 + $0x200] sm:$0xff]
        %v2692 = vld [vmem:[%s2682 + $0x208] sm:$0xff]
        %v2693 = vld [vmem:[%s2682 + $0x210] sm:$0xff]
        %v2694 = vld [vmem:[%s2682 + $0x218] sm:$0xff]
        %v2695 = vld [vmem:[%s2682 + $0x220] sm:$0xff]
        %v2696 = vld [vmem:[%s2682 + $0x228] sm:$0xff]
        %v2697 = vld [vmem:[%s2682 + $0x230] sm:$0xff]
        %v2698 = vld [vmem:[%s2682 + $0x238] sm:$0xff]
        %v2699 = vld [vmem:[%s2682 + $0x400] sm:$0xff]
        %v2700 = vld [vmem:[%s2682 + $0x408] sm:$0xff]
        %v2701 = vld [vmem:[%s2682 + $0x410] sm:$0xff]
        %v2702 = vld [vmem:[%s2682 + $0x418] sm:$0xff]
        %v2703 = vld [vmem:[%s2682 + $0x420] sm:$0xff]
        %v2704 = vld [vmem:[%s2682 + $0x428] sm:$0xff]
        %v2705 = vld [vmem:[%s2682 + $0x430] sm:$0xff]
        %v2706 = vld [vmem:[%s2682 + $0x438] sm:$0xff]
        %v2707 = vld [vmem:[%s2682 + $0x600] sm:$0xff]
        %v2708 = vld [vmem:[%s2682 + $0x608] sm:$0xff]
        %v2709 = vld [vmem:[%s2682 + $0x610] sm:$0xff]
        %v2710 = vld [vmem:[%s2682 + $0x618] sm:$0xff]
        %v2711 = vld [vmem:[%s2682 + $0x620] sm:$0xff]
        %v2712 = vld [vmem:[%s2682 + $0x628] sm:$0xff]
        %v2713 = vld [vmem:[%s2682 + $0x630] sm:$0xff]
        %v2714 = vld [vmem:[%s2682 + $0x638] sm:$0xff]
        %v2715 = vld [vmem:[%s2682 + $0x800] sm:$0xff]
        %v2716 = vld [vmem:[%s2682 + $0x808] sm:$0xff]
        %v2717 = vld [vmem:[%s2682 + $0x810] sm:$0xff]
        %v2718 = vld [vmem:[%s2682 + $0x818] sm:$0xff]
        %v2719 = vld [vmem:[%s2682 + $0x820] sm:$0xff]
        %v2720 = vld [vmem:[%s2682 + $0x828] sm:$0xff]
        %v2721 = vld [vmem:[%s2682 + $0x830] sm:$0xff]
        %v2722 = vld [vmem:[%s2682 + $0x838] sm:$0xff]
        %v2723 = vld [vmem:[%s2682 + $0xa00] sm:$0xff]
        %v2724 = vld [vmem:[%s2682 + $0xa08] sm:$0xff]
        %v2725 = vld [vmem:[%s2682 + $0xa10] sm:$0xff]
        %v2726 = vld [vmem:[%s2682 + $0xa18] sm:$0xff]
        %v2727 = vld [vmem:[%s2682 + $0xa20] sm:$0xff]
        %v2728 = vld [vmem:[%s2682 + $0xa28] sm:$0xff]
        %v2729 = vld [vmem:[%s2682 + $0xa30] sm:$0xff]
        %v2730 = vld [vmem:[%s2682 + $0xa38] sm:$0xff]
        %v2731 = vld [vmem:[%s2682 + $0xc00] sm:$0xff]
        %v2732 = vld [vmem:[%s2682 + $0xc08] sm:$0xff]
        %v2733 = vld [vmem:[%s2682 + $0xc10] sm:$0xff]
        %v2734 = vld [vmem:[%s2682 + $0xc18] sm:$0xff]
        %v2735 = vld [vmem:[%s2682 + $0xc20] sm:$0xff]
        %v2736 = vld [vmem:[%s2682 + $0xc28] sm:$0xff]
        %v2737 = vld [vmem:[%s2682 + $0xc30] sm:$0xff]
        %v2738 = vld [vmem:[%s2682 + $0xc38] sm:$0xff]
        %v2739 = vld [vmem:[%s2682 + $0xe00] sm:$0xff]
        %v2740 = vld [vmem:[%s2682 + $0xe08] sm:$0xff]
        %v2741 = vld [vmem:[%s2682 + $0xe10] sm:$0xff]
        %v2742 = vld [vmem:[%s2682 + $0xe18] sm:$0xff]
        %v2743 = vld [vmem:[%s2682 + $0xe20] sm:$0xff]
        %v2744 = vld [vmem:[%s2682 + $0xe28] sm:$0xff]
        %v2745 = vld [vmem:[%s2682 + $0xe30] sm:$0xff]
        %v2746 = vld [vmem:[%s2682 + $0xe38] sm:$0xff]
        %v2747 = vstv 384
        %v2748 = vadd.s32 %v709, %v2747
        %v2749 = vadd.s32 %v710, %v2747
        %v2750 = vadd.s32 %v711, %v2747
        %v2751 = vadd.s32 %v712, %v2747
        %v2752 = vadd.s32 %v713, %v2747
        %v2753 = vadd.s32 %v714, %v2747
        %v2754 = vadd.s32 %v715, %v2747
        %v2755 = vadd.s32 %v716, %v2747
        %vm2756 = vcmp.lt.s32.totalorder %v2748, %v726
        %vm2757 = vcmp.lt.s32.totalorder %v2749, %v726
        %vm2758 = vcmp.lt.s32.totalorder %v2750, %v726
        %vm2759 = vcmp.lt.s32.totalorder %v2751, %v726
        %vm2760 = vcmp.lt.s32.totalorder %v2752, %v726
        %vm2761 = vcmp.lt.s32.totalorder %v2753, %v726
        %vm2762 = vcmp.lt.s32.totalorder %v2754, %v726
        %vm2763 = vcmp.lt.s32.totalorder %v2755, %v726
        %v2764 = vsel %vm2756, 1, 0
        %v2765 = vsel %vm2757, 1, 0
        %v2766 = vsel %vm2758, 1, 0
        %v2767 = vsel %vm2759, 1, 0
        %v2768 = vsel %vm2760, 1, 0
        %v2769 = vsel %vm2761, 1, 0
        %v2770 = vsel %vm2762, 1, 0
        %v2771 = vsel %vm2763, 1, 0
        %vm2772 = vcmp.eq.s32.totalorder %v2764, 1
        %vm2773 = vcmp.eq.s32.totalorder %v2765, 1
        %vm2774 = vcmp.eq.s32.totalorder %v2766, 1
        %vm2775 = vcmp.eq.s32.totalorder %v2767, 1
        %vm2776 = vcmp.eq.s32.totalorder %v2768, 1
        %vm2777 = vcmp.eq.s32.totalorder %v2769, 1
        %vm2778 = vcmp.eq.s32.totalorder %v2770, 1
        %vm2779 = vcmp.eq.s32.totalorder %v2771, 1
        %v2780 = vsel %vm2772, %v2683, 0.0
        %v2781 = vsel %vm2773, %v2684, 0.0
        %v2782 = vsel %vm2774, %v2685, 0.0
        %v2783 = vsel %vm2775, %v2686, 0.0
        %v2784 = vsel %vm2776, %v2687, 0.0
        %v2785 = vsel %vm2777, %v2688, 0.0
        %v2786 = vsel %vm2778, %v2689, 0.0
        %v2787 = vsel %vm2779, %v2690, 0.0
        %v2788 = vsel %vm2772, %v2691, 0.0
        %v2789 = vsel %vm2773, %v2692, 0.0
        %v2790 = vsel %vm2774, %v2693, 0.0
        %v2791 = vsel %vm2775, %v2694, 0.0
        %v2792 = vsel %vm2776, %v2695, 0.0
        %v2793 = vsel %vm2777, %v2696, 0.0
        %v2794 = vsel %vm2778, %v2697, 0.0
        %v2795 = vsel %vm2779, %v2698, 0.0
        %v2796 = vsel %vm2772, %v2699, 0.0
        %v2797 = vsel %vm2773, %v2700, 0.0
        %v2798 = vsel %vm2774, %v2701, 0.0
        %v2799 = vsel %vm2775, %v2702, 0.0
        %v2800 = vsel %vm2776, %v2703, 0.0
        %v2801 = vsel %vm2777, %v2704, 0.0
        %v2802 = vsel %vm2778, %v2705, 0.0
        %v2803 = vsel %vm2779, %v2706, 0.0
        %v2804 = vsel %vm2772, %v2707, 0.0
        %v2805 = vsel %vm2773, %v2708, 0.0
        %v2806 = vsel %vm2774, %v2709, 0.0
        %v2807 = vsel %vm2775, %v2710, 0.0
        %v2808 = vsel %vm2776, %v2711, 0.0
        %v2809 = vsel %vm2777, %v2712, 0.0
        %v2810 = vsel %vm2778, %v2713, 0.0
        %v2811 = vsel %vm2779, %v2714, 0.0
        %v2812 = vsel %vm2772, %v2715, 0.0
        %v2813 = vsel %vm2773, %v2716, 0.0
        %v2814 = vsel %vm2774, %v2717, 0.0
        %v2815 = vsel %vm2775, %v2718, 0.0
        %v2816 = vsel %vm2776, %v2719, 0.0
        %v2817 = vsel %vm2777, %v2720, 0.0
        %v2818 = vsel %vm2778, %v2721, 0.0
        %v2819 = vsel %vm2779, %v2722, 0.0
        %v2820 = vsel %vm2772, %v2723, 0.0
        %v2821 = vsel %vm2773, %v2724, 0.0
        %v2822 = vsel %vm2774, %v2725, 0.0
        %v2823 = vsel %vm2775, %v2726, 0.0
        %v2824 = vsel %vm2776, %v2727, 0.0
        %v2825 = vsel %vm2777, %v2728, 0.0
        %v2826 = vsel %vm2778, %v2729, 0.0
        %v2827 = vsel %vm2779, %v2730, 0.0
        %v2828 = vsel %vm2772, %v2731, 0.0
        %v2829 = vsel %vm2773, %v2732, 0.0
        %v2830 = vsel %vm2774, %v2733, 0.0
        %v2831 = vsel %vm2775, %v2734, 0.0
        %v2832 = vsel %vm2776, %v2735, 0.0
        %v2833 = vsel %vm2777, %v2736, 0.0
        %v2834 = vsel %vm2778, %v2737, 0.0
        %v2835 = vsel %vm2779, %v2738, 0.0
        %v2836 = vsel %vm2772, %v2739, 0.0
        %v2837 = vsel %vm2773, %v2740, 0.0
        %v2838 = vsel %vm2774, %v2741, 0.0
        %v2839 = vsel %vm2775, %v2742, 0.0
        %v2840 = vsel %vm2776, %v2743, 0.0
        %v2841 = vsel %vm2777, %v2744, 0.0
        %v2842 = vsel %vm2778, %v2745, 0.0
        %v2843 = vsel %vm2779, %v2746, 0.0
        %v2844 = vsel %vm815, %v2780, 0.0
        %v2845 = vsel %vm815, %v2781, 0.0
        %v2846 = vadd.f32 %v2844, %v2845
        %v2847 = vsel %vm815, %v2782, 0.0
        %v2848 = vadd.f32 %v2846, %v2847
        %v2849 = vsel %vm815, %v2783, 0.0
        %v2850 = vadd.f32 %v2848, %v2849
        %v2851 = vsel %vm815, %v2784, 0.0
        %v2852 = vadd.f32 %v2850, %v2851
        %v2853 = vsel %vm815, %v2785, 0.0
        %v2854 = vadd.f32 %v2852, %v2853
        %v2855 = vsel %vm815, %v2786, 0.0
        %v2856 = vadd.f32 %v2854, %v2855
        %v2857 = vsel %vm815, %v2787, 0.0
        %v2858 = vadd.f32 %v2856, %v2857
        %v2859 = vrot.slane %v2858, 4
        %v2860 = vadd.f32 %v2858, %v2859
        %v2861 = vrot.slane %v2860, 2
        %v2862 = vadd.f32 %v2860, %v2861
        %v2863 = vrot.slane %v2862, 1
        %v2864 = vadd.f32 %v2862, %v2863
        %v2865 = vsel %vm815, %v2788, 0.0
        %v2866 = vsel %vm815, %v2789, 0.0
        %v2867 = vadd.f32 %v2865, %v2866
        %v2868 = vsel %vm815, %v2790, 0.0
        %v2869 = vadd.f32 %v2867, %v2868
        %v2870 = vsel %vm815, %v2791, 0.0
        %v2871 = vadd.f32 %v2869, %v2870
        %v2872 = vsel %vm815, %v2792, 0.0
        %v2873 = vadd.f32 %v2871, %v2872
        %v2874 = vsel %vm815, %v2793, 0.0
        %v2875 = vadd.f32 %v2873, %v2874
        %v2876 = vsel %vm815, %v2794, 0.0
        %v2877 = vadd.f32 %v2875, %v2876
        %v2878 = vsel %vm815, %v2795, 0.0
        %v2879 = vadd.f32 %v2877, %v2878
        %v2880 = vrot.slane %v2879, 4
        %v2881 = vadd.f32 %v2879, %v2880
        %v2882 = vrot.slane %v2881, 2
        %v2883 = vadd.f32 %v2881, %v2882
        %v2884 = vrot.slane %v2883, 1
        %v2885 = vadd.f32 %v2883, %v2884
        %v2886 = vsel %vm815, %v2796, 0.0
        %v2887 = vsel %vm815, %v2797, 0.0
        %v2888 = vadd.f32 %v2886, %v2887
        %v2889 = vsel %vm815, %v2798, 0.0
        %v2890 = vadd.f32 %v2888, %v2889
        %v2891 = vsel %vm815, %v2799, 0.0
        %v2892 = vadd.f32 %v2890, %v2891
        %v2893 = vsel %vm815, %v2800, 0.0
        %v2894 = vadd.f32 %v2892, %v2893
        %v2895 = vsel %vm815, %v2801, 0.0
        %v2896 = vadd.f32 %v2894, %v2895
        %v2897 = vsel %vm815, %v2802, 0.0
        %v2898 = vadd.f32 %v2896, %v2897
        %v2899 = vsel %vm815, %v2803, 0.0
        %v2900 = vadd.f32 %v2898, %v2899
        %v2901 = vrot.slane %v2900, 4
        %v2902 = vadd.f32 %v2900, %v2901
        %v2903 = vrot.slane %v2902, 2
        %v2904 = vadd.f32 %v2902, %v2903
        %v2905 = vrot.slane %v2904, 1
        %v2906 = vadd.f32 %v2904, %v2905
        %v2907 = vsel %vm815, %v2804, 0.0
        %v2908 = vsel %vm815, %v2805, 0.0
        %v2909 = vadd.f32 %v2907, %v2908
        %v2910 = vsel %vm815, %v2806, 0.0
        %v2911 = vadd.f32 %v2909, %v2910
        %v2912 = vsel %vm815, %v2807, 0.0
        %v2913 = vadd.f32 %v2911, %v2912
        %v2914 = vsel %vm815, %v2808, 0.0
        %v2915 = vadd.f32 %v2913, %v2914
        %v2916 = vsel %vm815, %v2809, 0.0
        %v2917 = vadd.f32 %v2915, %v2916
        %v2918 = vsel %vm815, %v2810, 0.0
        %v2919 = vadd.f32 %v2917, %v2918
        %v2920 = vsel %vm815, %v2811, 0.0
        %v2921 = vadd.f32 %v2919, %v2920
        %v2922 = vrot.slane %v2921, 4
        %v2923 = vadd.f32 %v2921, %v2922
        %v2924 = vrot.slane %v2923, 2
        %v2925 = vadd.f32 %v2923, %v2924
        %v2926 = vrot.slane %v2925, 1
        %v2927 = vadd.f32 %v2925, %v2926
        %v2928 = vsel %vm815, %v2812, 0.0
        %v2929 = vsel %vm815, %v2813, 0.0
        %v2930 = vadd.f32 %v2928, %v2929
        %v2931 = vsel %vm815, %v2814, 0.0
        %v2932 = vadd.f32 %v2930, %v2931
        %v2933 = vsel %vm815, %v2815, 0.0
        %v2934 = vadd.f32 %v2932, %v2933
        %v2935 = vsel %vm815, %v2816, 0.0
        %v2936 = vadd.f32 %v2934, %v2935
        %v2937 = vsel %vm815, %v2817, 0.0
        %v2938 = vadd.f32 %v2936, %v2937
        %v2939 = vsel %vm815, %v2818, 0.0
        %v2940 = vadd.f32 %v2938, %v2939
        %v2941 = vsel %vm815, %v2819, 0.0
        %v2942 = vadd.f32 %v2940, %v2941
        %v2943 = vrot.slane %v2942, 4
        %v2944 = vadd.f32 %v2942, %v2943
        %v2945 = vrot.slane %v2944, 2
        %v2946 = vadd.f32 %v2944, %v2945
        %v2947 = vrot.slane %v2946, 1
        %v2948 = vadd.f32 %v2946, %v2947
        %v2949 = vsel %vm815, %v2820, 0.0
        %v2950 = vsel %vm815, %v2821, 0.0
        %v2951 = vadd.f32 %v2949, %v2950
        %v2952 = vsel %vm815, %v2822, 0.0
        %v2953 = vadd.f32 %v2951, %v2952
        %v2954 = vsel %vm815, %v2823, 0.0
        %v2955 = vadd.f32 %v2953, %v2954
        %v2956 = vsel %vm815, %v2824, 0.0
        %v2957 = vadd.f32 %v2955, %v2956
        %v2958 = vsel %vm815, %v2825, 0.0
        %v2959 = vadd.f32 %v2957, %v2958
        %v2960 = vsel %vm815, %v2826, 0.0
        %v2961 = vadd.f32 %v2959, %v2960
        %v2962 = vsel %vm815, %v2827, 0.0
        %v2963 = vadd.f32 %v2961, %v2962
        %v2964 = vrot.slane %v2963, 4
        %v2965 = vadd.f32 %v2963, %v2964
        %v2966 = vrot.slane %v2965, 2
        %v2967 = vadd.f32 %v2965, %v2966
        %v2968 = vrot.slane %v2967, 1
        %v2969 = vadd.f32 %v2967, %v2968
        %v2970 = vsel %vm815, %v2828, 0.0
        %v2971 = vsel %vm815, %v2829, 0.0
        %v2972 = vadd.f32 %v2970, %v2971
        %v2973 = vsel %vm815, %v2830, 0.0
        %v2974 = vadd.f32 %v2972, %v2973
        %v2975 = vsel %vm815, %v2831, 0.0
        %v2976 = vadd.f32 %v2974, %v2975
        %v2977 = vsel %vm815, %v2832, 0.0
        %v2978 = vadd.f32 %v2976, %v2977
        %v2979 = vsel %vm815, %v2833, 0.0
        %v2980 = vadd.f32 %v2978, %v2979
        %v2981 = vsel %vm815, %v2834, 0.0
        %v2982 = vadd.f32 %v2980, %v2981
        %v2983 = vsel %vm815, %v2835, 0.0
        %v2984 = vadd.f32 %v2982, %v2983
        %v2985 = vrot.slane %v2984, 4
        %v2986 = vadd.f32 %v2984, %v2985
        %v2987 = vrot.slane %v2986, 2
        %v2988 = vadd.f32 %v2986, %v2987
        %v2989 = vrot.slane %v2988, 1
        %v2990 = vadd.f32 %v2988, %v2989
        %v2991 = vsel %vm815, %v2836, 0.0
        %v2992 = vsel %vm815, %v2837, 0.0
        %v2993 = vadd.f32 %v2991, %v2992
        %v2994 = vsel %vm815, %v2838, 0.0
        %v2995 = vadd.f32 %v2993, %v2994
        %v2996 = vsel %vm815, %v2839, 0.0
        %v2997 = vadd.f32 %v2995, %v2996
        %v2998 = vsel %vm815, %v2840, 0.0
        %v2999 = vadd.f32 %v2997, %v2998
        %v3000 = vsel %vm815, %v2841, 0.0
        %v3001 = vadd.f32 %v2999, %v3000
        %v3002 = vsel %vm815, %v2842, 0.0
        %v3003 = vadd.f32 %v3001, %v3002
        %v3004 = vsel %vm815, %v2843, 0.0
        %v3005 = vadd.f32 %v3003, %v3004
        %v3006 = vrot.slane %v3005, 4
        %v3007 = vadd.f32 %v3005, %v3006
        %v3008 = vrot.slane %v3007, 2
        %v3009 = vadd.f32 %v3007, %v3008
        %v3010 = vrot.slane %v3009, 1
        %v3011 = vadd.f32 %v3009, %v3010
        %v3012 = vadd.f32 %v2674, %v2864
        %v3013 = vadd.f32 %v2675, %v2885
        %v3014 = vadd.f32 %v2676, %v2906
        %v3015 = vadd.f32 %v2677, %v2927
        %v3016 = vadd.f32 %v2678, %v2948
        %v3017 = vadd.f32 %v2679, %v2969
        %v3018 = vadd.f32 %v2680, %v2990
        %v3019 = vadd.f32 %v2681, %v3011
        %s3020 = scalar_lea.vmem %s604, 448 [#allocation3]
        %v3021 = vld [vmem:[%s3020] sm:$0xff]
        %v3022 = vld [vmem:[%s3020 + $0x8] sm:$0xff]
        %v3023 = vld [vmem:[%s3020 + $0x10] sm:$0xff]
        %v3024 = vld [vmem:[%s3020 + $0x18] sm:$0xff]
        %v3025 = vld [vmem:[%s3020 + $0x20] sm:$0xff]
        %v3026 = vld [vmem:[%s3020 + $0x28] sm:$0xff]
        %v3027 = vld [vmem:[%s3020 + $0x30] sm:$0xff]
        %v3028 = vld [vmem:[%s3020 + $0x38] sm:$0xff]
        %v3029 = vld [vmem:[%s3020 + $0x200] sm:$0xff]
        %v3030 = vld [vmem:[%s3020 + $0x208] sm:$0xff]
        %v3031 = vld [vmem:[%s3020 + $0x210] sm:$0xff]
        %v3032 = vld [vmem:[%s3020 + $0x218] sm:$0xff]
        %v3033 = vld [vmem:[%s3020 + $0x220] sm:$0xff]
        %v3034 = vld [vmem:[%s3020 + $0x228] sm:$0xff]
        %v3035 = vld [vmem:[%s3020 + $0x230] sm:$0xff]
        %v3036 = vld [vmem:[%s3020 + $0x238] sm:$0xff]
        %v3037 = vld [vmem:[%s3020 + $0x400] sm:$0xff]
        %v3038 = vld [vmem:[%s3020 + $0x408] sm:$0xff]
        %v3039 = vld [vmem:[%s3020 + $0x410] sm:$0xff]
        %v3040 = vld [vmem:[%s3020 + $0x418] sm:$0xff]
        %v3041 = vld [vmem:[%s3020 + $0x420] sm:$0xff]
        %v3042 = vld [vmem:[%s3020 + $0x428] sm:$0xff]
        %v3043 = vld [vmem:[%s3020 + $0x430] sm:$0xff]
        %v3044 = vld [vmem:[%s3020 + $0x438] sm:$0xff]
        %v3045 = vld [vmem:[%s3020 + $0x600] sm:$0xff]
        %v3046 = vld [vmem:[%s3020 + $0x608] sm:$0xff]
        %v3047 = vld [vmem:[%s3020 + $0x610] sm:$0xff]
        %v3048 = vld [vmem:[%s3020 + $0x618] sm:$0xff]
        %v3049 = vld [vmem:[%s3020 + $0x620] sm:$0xff]
        %v3050 = vld [vmem:[%s3020 + $0x628] sm:$0xff]
        %v3051 = vld [vmem:[%s3020 + $0x630] sm:$0xff]
        %v3052 = vld [vmem:[%s3020 + $0x638] sm:$0xff]
        %v3053 = vld [vmem:[%s3020 + $0x800] sm:$0xff]
        %v3054 = vld [vmem:[%s3020 + $0x808] sm:$0xff]
        %v3055 = vld [vmem:[%s3020 + $0x810] sm:$0xff]
        %v3056 = vld [vmem:[%s3020 + $0x818] sm:$0xff]
        %v3057 = vld [vmem:[%s3020 + $0x820] sm:$0xff]
        %v3058 = vld [vmem:[%s3020 + $0x828] sm:$0xff]
        %v3059 = vld [vmem:[%s3020 + $0x830] sm:$0xff]
        %v3060 = vld [vmem:[%s3020 + $0x838] sm:$0xff]
        %v3061 = vld [vmem:[%s3020 + $0xa00] sm:$0xff]
        %v3062 = vld [vmem:[%s3020 + $0xa08] sm:$0xff]
        %v3063 = vld [vmem:[%s3020 + $0xa10] sm:$0xff]
        %v3064 = vld [vmem:[%s3020 + $0xa18] sm:$0xff]
        %v3065 = vld [vmem:[%s3020 + $0xa20] sm:$0xff]
        %v3066 = vld [vmem:[%s3020 + $0xa28] sm:$0xff]
        %v3067 = vld [vmem:[%s3020 + $0xa30] sm:$0xff]
        %v3068 = vld [vmem:[%s3020 + $0xa38] sm:$0xff]
        %v3069 = vld [vmem:[%s3020 + $0xc00] sm:$0xff]
        %v3070 = vld [vmem:[%s3020 + $0xc08] sm:$0xff]
        %v3071 = vld [vmem:[%s3020 + $0xc10] sm:$0xff]
        %v3072 = vld [vmem:[%s3020 + $0xc18] sm:$0xff]
        %v3073 = vld [vmem:[%s3020 + $0xc20] sm:$0xff]
        %v3074 = vld [vmem:[%s3020 + $0xc28] sm:$0xff]
        %v3075 = vld [vmem:[%s3020 + $0xc30] sm:$0xff]
        %v3076 = vld [vmem:[%s3020 + $0xc38] sm:$0xff]
        %v3077 = vld [vmem:[%s3020 + $0xe00] sm:$0xff]
        %v3078 = vld [vmem:[%s3020 + $0xe08] sm:$0xff]
        %v3079 = vld [vmem:[%s3020 + $0xe10] sm:$0xff]
        %v3080 = vld [vmem:[%s3020 + $0xe18] sm:$0xff]
        %v3081 = vld [vmem:[%s3020 + $0xe20] sm:$0xff]
        %v3082 = vld [vmem:[%s3020 + $0xe28] sm:$0xff]
        %v3083 = vld [vmem:[%s3020 + $0xe30] sm:$0xff]
        %v3084 = vld [vmem:[%s3020 + $0xe38] sm:$0xff]
        %v3085 = vstv 448
        %v3086 = vadd.s32 %v709, %v3085
        %v3087 = vadd.s32 %v710, %v3085
        %v3088 = vadd.s32 %v711, %v3085
        %v3089 = vadd.s32 %v712, %v3085
        %v3090 = vadd.s32 %v713, %v3085
        %v3091 = vadd.s32 %v714, %v3085
        %v3092 = vadd.s32 %v715, %v3085
        %v3093 = vadd.s32 %v716, %v3085
        %vm3094 = vcmp.lt.s32.totalorder %v3086, %v726
        %vm3095 = vcmp.lt.s32.totalorder %v3087, %v726
        %vm3096 = vcmp.lt.s32.totalorder %v3088, %v726
        %vm3097 = vcmp.lt.s32.totalorder %v3089, %v726
        %vm3098 = vcmp.lt.s32.totalorder %v3090, %v726
        %vm3099 = vcmp.lt.s32.totalorder %v3091, %v726
        %vm3100 = vcmp.lt.s32.totalorder %v3092, %v726
        %vm3101 = vcmp.lt.s32.totalorder %v3093, %v726
        %v3102 = vsel %vm3094, 1, 0
        %v3103 = vsel %vm3095, 1, 0
        %v3104 = vsel %vm3096, 1, 0
        %v3105 = vsel %vm3097, 1, 0
        %v3106 = vsel %vm3098, 1, 0
        %v3107 = vsel %vm3099, 1, 0
        %v3108 = vsel %vm3100, 1, 0
        %v3109 = vsel %vm3101, 1, 0
        %vm3110 = vcmp.eq.s32.totalorder %v3102, 1
        %vm3111 = vcmp.eq.s32.totalorder %v3103, 1
        %vm3112 = vcmp.eq.s32.totalorder %v3104, 1
        %vm3113 = vcmp.eq.s32.totalorder %v3105, 1
        %vm3114 = vcmp.eq.s32.totalorder %v3106, 1
        %vm3115 = vcmp.eq.s32.totalorder %v3107, 1
        %vm3116 = vcmp.eq.s32.totalorder %v3108, 1
        %vm3117 = vcmp.eq.s32.totalorder %v3109, 1
        %v3118 = vsel %vm3110, %v3021, 0.0
        %v3119 = vsel %vm3111, %v3022, 0.0
        %v3120 = vsel %vm3112, %v3023, 0.0
        %v3121 = vsel %vm3113, %v3024, 0.0
        %v3122 = vsel %vm3114, %v3025, 0.0
        %v3123 = vsel %vm3115, %v3026, 0.0
        %v3124 = vsel %vm3116, %v3027, 0.0
        %v3125 = vsel %vm3117, %v3028, 0.0
        %v3126 = vsel %vm3110, %v3029, 0.0
        %v3127 = vsel %vm3111, %v3030, 0.0
        %v3128 = vsel %vm3112, %v3031, 0.0
        %v3129 = vsel %vm3113, %v3032, 0.0
        %v3130 = vsel %vm3114, %v3033, 0.0
        %v3131 = vsel %vm3115, %v3034, 0.0
        %v3132 = vsel %vm3116, %v3035, 0.0
        %v3133 = vsel %vm3117, %v3036, 0.0
        %v3134 = vsel %vm3110, %v3037, 0.0
        %v3135 = vsel %vm3111, %v3038, 0.0
        %v3136 = vsel %vm3112, %v3039, 0.0
        %v3137 = vsel %vm3113, %v3040, 0.0
        %v3138 = vsel %vm3114, %v3041, 0.0
        %v3139 = vsel %vm3115, %v3042, 0.0
        %v3140 = vsel %vm3116, %v3043, 0.0
        %v3141 = vsel %vm3117, %v3044, 0.0
        %v3142 = vsel %vm3110, %v3045, 0.0
        %v3143 = vsel %vm3111, %v3046, 0.0
        %v3144 = vsel %vm3112, %v3047, 0.0
        %v3145 = vsel %vm3113, %v3048, 0.0
        %v3146 = vsel %vm3114, %v3049, 0.0
        %v3147 = vsel %vm3115, %v3050, 0.0
        %v3148 = vsel %vm3116, %v3051, 0.0
        %v3149 = vsel %vm3117, %v3052, 0.0
        %v3150 = vsel %vm3110, %v3053, 0.0
        %v3151 = vsel %vm3111, %v3054, 0.0
        %v3152 = vsel %vm3112, %v3055, 0.0
        %v3153 = vsel %vm3113, %v3056, 0.0
        %v3154 = vsel %vm3114, %v3057, 0.0
        %v3155 = vsel %vm3115, %v3058, 0.0
        %v3156 = vsel %vm3116, %v3059, 0.0
        %v3157 = vsel %vm3117, %v3060, 0.0
        %v3158 = vsel %vm3110, %v3061, 0.0
        %v3159 = vsel %vm3111, %v3062, 0.0
        %v3160 = vsel %vm3112, %v3063, 0.0
        %v3161 = vsel %vm3113, %v3064, 0.0
        %v3162 = vsel %vm3114, %v3065, 0.0
        %v3163 = vsel %vm3115, %v3066, 0.0
        %v3164 = vsel %vm3116, %v3067, 0.0
        %v3165 = vsel %vm3117, %v3068, 0.0
        %v3166 = vsel %vm3110, %v3069, 0.0
        %v3167 = vsel %vm3111, %v3070, 0.0
        %v3168 = vsel %vm3112, %v3071, 0.0
        %v3169 = vsel %vm3113, %v3072, 0.0
        %v3170 = vsel %vm3114, %v3073, 0.0
        %v3171 = vsel %vm3115, %v3074, 0.0
        %v3172 = vsel %vm3116, %v3075, 0.0
        %v3173 = vsel %vm3117, %v3076, 0.0
        %v3174 = vsel %vm3110, %v3077, 0.0
        %v3175 = vsel %vm3111, %v3078, 0.0
        %v3176 = vsel %vm3112, %v3079, 0.0
        %v3177 = vsel %vm3113, %v3080, 0.0
        %v3178 = vsel %vm3114, %v3081, 0.0
        %v3179 = vsel %vm3115, %v3082, 0.0
        %v3180 = vsel %vm3116, %v3083, 0.0
        %v3181 = vsel %vm3117, %v3084, 0.0
        %v3182 = vsel %vm815, %v3118, 0.0
        %v3183 = vsel %vm815, %v3119, 0.0
        %v3184 = vadd.f32 %v3182, %v3183
        %v3185 = vsel %vm815, %v3120, 0.0
        %v3186 = vadd.f32 %v3184, %v3185
        %v3187 = vsel %vm815, %v3121, 0.0
        %v3188 = vadd.f32 %v3186, %v3187
        %v3189 = vsel %vm815, %v3122, 0.0
        %v3190 = vadd.f32 %v3188, %v3189
        %v3191 = vsel %vm815, %v3123, 0.0
        %v3192 = vadd.f32 %v3190, %v3191
        %v3193 = vsel %vm815, %v3124, 0.0
        %v3194 = vadd.f32 %v3192, %v3193
        %v3195 = vsel %vm815, %v3125, 0.0
        %v3196 = vadd.f32 %v3194, %v3195
        %v3197 = vrot.slane %v3196, 4
        %v3198 = vadd.f32 %v3196, %v3197
        %v3199 = vrot.slane %v3198, 2
        %v3200 = vadd.f32 %v3198, %v3199
        %v3201 = vrot.slane %v3200, 1
        %v3202 = vadd.f32 %v3200, %v3201
        %v3203 = vsel %vm815, %v3126, 0.0
        %v3204 = vsel %vm815, %v3127, 0.0
        %v3205 = vadd.f32 %v3203, %v3204
        %v3206 = vsel %vm815, %v3128, 0.0
        %v3207 = vadd.f32 %v3205, %v3206
        %v3208 = vsel %vm815, %v3129, 0.0
        %v3209 = vadd.f32 %v3207, %v3208
        %v3210 = vsel %vm815, %v3130, 0.0
        %v3211 = vadd.f32 %v3209, %v3210
        %v3212 = vsel %vm815, %v3131, 0.0
        %v3213 = vadd.f32 %v3211, %v3212
        %v3214 = vsel %vm815, %v3132, 0.0
        %v3215 = vadd.f32 %v3213, %v3214
        %v3216 = vsel %vm815, %v3133, 0.0
        %v3217 = vadd.f32 %v3215, %v3216
        %v3218 = vrot.slane %v3217, 4
        %v3219 = vadd.f32 %v3217, %v3218
        %v3220 = vrot.slane %v3219, 2
        %v3221 = vadd.f32 %v3219, %v3220
        %v3222 = vrot.slane %v3221, 1
        %v3223 = vadd.f32 %v3221, %v3222
        %v3224 = vsel %vm815, %v3134, 0.0
        %v3225 = vsel %vm815, %v3135, 0.0
        %v3226 = vadd.f32 %v3224, %v3225
        %v3227 = vsel %vm815, %v3136, 0.0
        %v3228 = vadd.f32 %v3226, %v3227
        %v3229 = vsel %vm815, %v3137, 0.0
        %v3230 = vadd.f32 %v3228, %v3229
        %v3231 = vsel %vm815, %v3138, 0.0
        %v3232 = vadd.f32 %v3230, %v3231
        %v3233 = vsel %vm815, %v3139, 0.0
        %v3234 = vadd.f32 %v3232, %v3233
        %v3235 = vsel %vm815, %v3140, 0.0
        %v3236 = vadd.f32 %v3234, %v3235
        %v3237 = vsel %vm815, %v3141, 0.0
        %v3238 = vadd.f32 %v3236, %v3237
        %v3239 = vrot.slane %v3238, 4
        %v3240 = vadd.f32 %v3238, %v3239
        %v3241 = vrot.slane %v3240, 2
        %v3242 = vadd.f32 %v3240, %v3241
        %v3243 = vrot.slane %v3242, 1
        %v3244 = vadd.f32 %v3242, %v3243
        %v3245 = vsel %vm815, %v3142, 0.0
        %v3246 = vsel %vm815, %v3143, 0.0
        %v3247 = vadd.f32 %v3245, %v3246
        %v3248 = vsel %vm815, %v3144, 0.0
        %v3249 = vadd.f32 %v3247, %v3248
        %v3250 = vsel %vm815, %v3145, 0.0
        %v3251 = vadd.f32 %v3249, %v3250
        %v3252 = vsel %vm815, %v3146, 0.0
        %v3253 = vadd.f32 %v3251, %v3252
        %v3254 = vsel %vm815, %v3147, 0.0
        %v3255 = vadd.f32 %v3253, %v3254
        %v3256 = vsel %vm815, %v3148, 0.0
        %v3257 = vadd.f32 %v3255, %v3256
        %v3258 = vsel %vm815, %v3149, 0.0
        %v3259 = vadd.f32 %v3257, %v3258
        %v3260 = vrot.slane %v3259, 4
        %v3261 = vadd.f32 %v3259, %v3260
        %v3262 = vrot.slane %v3261, 2
        %v3263 = vadd.f32 %v3261, %v3262
        %v3264 = vrot.slane %v3263, 1
        %v3265 = vadd.f32 %v3263, %v3264
        %v3266 = vsel %vm815, %v3150, 0.0
        %v3267 = vsel %vm815, %v3151, 0.0
        %v3268 = vadd.f32 %v3266, %v3267
        %v3269 = vsel %vm815, %v3152, 0.0
        %v3270 = vadd.f32 %v3268, %v3269
        %v3271 = vsel %vm815, %v3153, 0.0
        %v3272 = vadd.f32 %v3270, %v3271
        %v3273 = vsel %vm815, %v3154, 0.0
        %v3274 = vadd.f32 %v3272, %v3273
        %v3275 = vsel %vm815, %v3155, 0.0
        %v3276 = vadd.f32 %v3274, %v3275
        %v3277 = vsel %vm815, %v3156, 0.0
        %v3278 = vadd.f32 %v3276, %v3277
        %v3279 = vsel %vm815, %v3157, 0.0
        %v3280 = vadd.f32 %v3278, %v3279
        %v3281 = vrot.slane %v3280, 4
        %v3282 = vadd.f32 %v3280, %v3281
        %v3283 = vrot.slane %v3282, 2
        %v3284 = vadd.f32 %v3282, %v3283
        %v3285 = vrot.slane %v3284, 1
        %v3286 = vadd.f32 %v3284, %v3285
        %v3287 = vsel %vm815, %v3158, 0.0
        %v3288 = vsel %vm815, %v3159, 0.0
        %v3289 = vadd.f32 %v3287, %v3288
        %v3290 = vsel %vm815, %v3160, 0.0
        %v3291 = vadd.f32 %v3289, %v3290
        %v3292 = vsel %vm815, %v3161, 0.0
        %v3293 = vadd.f32 %v3291, %v3292
        %v3294 = vsel %vm815, %v3162, 0.0
        %v3295 = vadd.f32 %v3293, %v3294
        %v3296 = vsel %vm815, %v3163, 0.0
        %v3297 = vadd.f32 %v3295, %v3296
        %v3298 = vsel %vm815, %v3164, 0.0
        %v3299 = vadd.f32 %v3297, %v3298
        %v3300 = vsel %vm815, %v3165, 0.0
        %v3301 = vadd.f32 %v3299, %v3300
        %v3302 = vrot.slane %v3301, 4
        %v3303 = vadd.f32 %v3301, %v3302
        %v3304 = vrot.slane %v3303, 2
        %v3305 = vadd.f32 %v3303, %v3304
        %v3306 = vrot.slane %v3305, 1
        %v3307 = vadd.f32 %v3305, %v3306
        %v3308 = vsel %vm815, %v3166, 0.0
        %v3309 = vsel %vm815, %v3167, 0.0
        %v3310 = vadd.f32 %v3308, %v3309
        %v3311 = vsel %vm815, %v3168, 0.0
        %v3312 = vadd.f32 %v3310, %v3311
        %v3313 = vsel %vm815, %v3169, 0.0
        %v3314 = vadd.f32 %v3312, %v3313
        %v3315 = vsel %vm815, %v3170, 0.0
        %v3316 = vadd.f32 %v3314, %v3315
        %v3317 = vsel %vm815, %v3171, 0.0
        %v3318 = vadd.f32 %v3316, %v3317
        %v3319 = vsel %vm815, %v3172, 0.0
        %v3320 = vadd.f32 %v3318, %v3319
        %v3321 = vsel %vm815, %v3173, 0.0
        %v3322 = vadd.f32 %v3320, %v3321
        %v3323 = vrot.slane %v3322, 4
        %v3324 = vadd.f32 %v3322, %v3323
        %v3325 = vrot.slane %v3324, 2
        %v3326 = vadd.f32 %v3324, %v3325
        %v3327 = vrot.slane %v3326, 1
        %v3328 = vadd.f32 %v3326, %v3327
        %v3329 = vsel %vm815, %v3174, 0.0
        %v3330 = vsel %vm815, %v3175, 0.0
        %v3331 = vadd.f32 %v3329, %v3330
        %v3332 = vsel %vm815, %v3176, 0.0
        %v3333 = vadd.f32 %v3331, %v3332
        %v3334 = vsel %vm815, %v3177, 0.0
        %v3335 = vadd.f32 %v3333, %v3334
        %v3336 = vsel %vm815, %v3178, 0.0
        %v3337 = vadd.f32 %v3335, %v3336
        %v3338 = vsel %vm815, %v3179, 0.0
        %v3339 = vadd.f32 %v3337, %v3338
        %v3340 = vsel %vm815, %v3180, 0.0
        %v3341 = vadd.f32 %v3339, %v3340
        %v3342 = vsel %vm815, %v3181, 0.0
        %v3343 = vadd.f32 %v3341, %v3342
        %v3344 = vrot.slane %v3343, 4
        %v3345 = vadd.f32 %v3343, %v3344
        %v3346 = vrot.slane %v3345, 2
        %v3347 = vadd.f32 %v3345, %v3346
        %v3348 = vrot.slane %v3347, 1
        %v3349 = vadd.f32 %v3347, %v3348
        %v3350 = vadd.f32 %v3012, %v3202
        %v3351 = vadd.f32 %v3013, %v3223
        %v3352 = vadd.f32 %v3014, %v3244
        %v3353 = vadd.f32 %v3015, %v3265
        %v3354 = vadd.f32 %v3016, %v3286
        %v3355 = vadd.f32 %v3017, %v3307
        %v3356 = vadd.f32 %v3018, %v3328
        %v3357 = vadd.f32 %v3019, %v3349
        %v3358 = vld [vmem:[#allocation2] sm:$0xff]
        %vm3367 = vcmask 1041409
        %v3368 = vsel %vm3367, %v3351, %v3350
        %vm3369 = vcmask 1042434
        %v3370 = vsel %vm3369, %v3352, %v3368
        %vm3371 = vcmask 1043459
        %v3372 = vsel %vm3371, %v3353, %v3370
        %vm3373 = vcmask 1044484
        %v3374 = vsel %vm3373, %v3354, %v3372
        %vm3375 = vcmask 1045509
        %v3376 = vsel %vm3375, %v3355, %v3374
        %vm3377 = vcmask 1046534
        %v3378 = vsel %vm3377, %v3356, %v3376
        %vm3379 = vcmask 1047559
        %v3380 = vsel %vm3379, %v3357, %v3378
        %v3382 = vadd.f32 %v3358, %v3380
        %3383 = vst.msk [vmem:[#allocation2] sm:$0xff] %vm815, %v3382
        %p3384 = scmp.eq.s32.totalorder %s24, 1
        // Predicated region
        $region97: #{tpu_custom_call.1} parent=87 // pred_check
          %p3385 = pneg %p3384
        $region98: #{tpu_custom_call.1} parent=87 // pred_check_branch
          %3387 = sbr.rel (%p3385) target = $region100
        $region99: #{tpu_custom_call.1} parent=87 // pred_region
          %v3388 = vld [vmem:[#allocation2] sm:$0xff]
          %v3389 = vmul.f32 %v3388, 0.0016666667
          %v3390 = vpack.c.bf16 %v3389, %v3389
          %v3391 = vld [vmem:[%s1] sm:$0xff]
          %v3392 = vld [vmem:[%s1 + $0x8] sm:$0xff]
          %v3393 = vld [vmem:[%s1 + $0x10] sm:$0xff]
          %v3394 = vld [vmem:[%s1 + $0x18] sm:$0xff]
          %v3395 = vld [vmem:[%s1 + $0x20] sm:$0xff]
          %v3396 = vld [vmem:[%s1 + $0x28] sm:$0xff]
          %v3397 = vld [vmem:[%s1 + $0x30] sm:$0xff]
          %v3398 = vld [vmem:[%s1 + $0x38] sm:$0xff]
          %v3399 = vld [vmem:[%s1 + $0x40] sm:$0xff]
          %v3400 = vld [vmem:[%s1 + $0x48] sm:$0xff]
          %v3401 = vld [vmem:[%s2] sm:$0x3]
          %v3403 = vlaneseq
          %v3404 = vshrl.u32 %v3403, 7
          %v3405 = vsub.s32 0, %v3404
          %v3406 = vrot.slane %v3401, %v3405
          %v3407 = vlaneseq
          %v3408 = vshrl.u32 %v3407, 7
          %v3409 = vsub.s32 1, %v3408
          %v3410 = vrot.slane %v3401, %v3409
          %v3423 = vunpack.c.l.b16 %v3391
          %v3424 = vunpack.c.h.b16 %v3391
          %v3425 = vunpack.c.l.b16 %v3392
          %v3426 = vunpack.c.h.b16 %v3392
          %v3427 = vunpack.c.l.b16 %v3393
          %v3428 = vunpack.c.h.b16 %v3393
          %v3429 = vunpack.c.l.b16 %v3394
          %v3430 = vunpack.c.h.b16 %v3394
          %v3431 = vunpack.c.l.b16 %v3395
          %v3432 = vunpack.c.h.b16 %v3395
          %v3433 = vunpack.c.l.b16 %v3396
          %v3434 = vunpack.c.h.b16 %v3396
          %v3435 = vunpack.c.l.b16 %v3397
          %v3436 = vunpack.c.h.b16 %v3397
          %v3437 = vunpack.c.l.b16 %v3398
          %v3438 = vunpack.c.h.b16 %v3398
          %v3439 = vunpack.c.l.b16 %v3399
          %v3440 = vunpack.c.h.b16 %v3399
          %v3441 = vunpack.c.l.b16 %v3400
          %v3442 = vunpack.c.h.b16 %v3400
          %v3443 = vpack.c.b16 %v3425, %v3423
          %v3444 = vpack.c.b16 %v3426, %v3424
          %v3445 = vpack.c.b16 %v3429, %v3427
          %v3446 = vpack.c.b16 %v3430, %v3428
          %v3447 = vpack.c.b16 %v3433, %v3431
          %v3448 = vpack.c.b16 %v3434, %v3432
          %v3449 = vpack.c.b16 %v3437, %v3435
          %v3450 = vpack.c.b16 %v3438, %v3436
          %v3451 = vpack.c.b16 %v3441, %v3439
          %v3452 = vpack.c.b16 %v3442, %v3440
          %v3464 = vsel %vm815, %v3390, 0
          %3466 = vmatprep.subr.bf16.mxu0 %v3444
          %3467 = vmatpush1.bf16.msra.mxu0 %v3443
          %3468 = vmatprep.subr.bf16.mxu0 %v3446
          %3469 = vmatpush1.bf16.msra.mxu0 %v3445
          %3470 = vmatprep.subr.bf16.mxu0 %v3448
          %3471 = vmatpush1.bf16.msra.mxu0 %v3447
          %3472 = vmatprep.subr.bf16.mxu0 %v3450
          %3473 = vmatpush1.bf16.msra.mxu0 %v3449
          %3474 = vmatprep.subr.bf16.mxu0 %v3452
          %3475 = vmatpush1.bf16.msra.mxu0 %v3451
          %3476 = vmatprep.subr.bf16.mxu0 0
          %3477 = vmatpush1.bf16.msra.mxu0 0
          %3478 = vmatprep.subr.bf16.mxu0 0
          %3479 = vmatpush1.bf16.msra.mxu0 0
          %3480 = vmatprep.subr.bf16.mxu0 0
          %3481 = vmatpush1.bf16.msra.mxu0 0
          %3482 = vmatprep.subr.bf16.mxu0 0
          %3483 = vmatpush1.bf16.msra.mxu0 0
          %3484 = vmatprep.subr.bf16.mxu0 0
          %3485 = vmatpush1.bf16.msra.mxu0 0
          %3486 = vmatprep.subr.bf16.mxu0 0
          %3487 = vmatpush1.bf16.msra.mxu0 0
          %3488 = vmatprep.subr.bf16.mxu0 0
          %3489 = vmatpush1.bf16.msra.mxu0 0
          %3490 = vmatprep.subr.bf16.mxu0 0
          %3491 = vmatpush1.bf16.msra.mxu0 0
          %3492 = vmatprep.subr.bf16.mxu0 0
          %3493 = vmatpush1.bf16.msra.mxu0 0
          %3494 = vmatprep.subr.bf16.mxu0 0
          %3495 = vmatpush1.bf16.msra.mxu0 0
          %3496 = vmatprep.subr.bf16.mxu0 0
          %3497 = vmatpush1.bf16.msra.mxu0 0
          %3498 = vmatprep.mubr.bf16.mxu0 0
          %3499 = vmatmul.mubr.bf16.gmra.mrb[0].mxu0 %v3464
          %v3500 = vpop.f32.mrb[0].mxu0
          %v3501 = vadd.f32 %v3406, %v3500
          %v3502 = vpop.f32.mrb[0].mxu0
          %v3503 = vadd.f32 %v3410, %v3502
          %v3504 = vpop.f32.mrb[0].mxu0
          %v3505 = vpop.f32.mrb[0].mxu0
          %3506 = vdwg.mxu0
          %v3507 = vmax.f32 %v3501, 0.0
          %v3508 = vmax.f32 %v3503, 0.0
          %v3509 = vpack.c.bf16 %v3507, %v3507
          %v3510 = vpack.c.bf16 %v3508, %v3508
          %v3511 = vld [vmem:[%s3] sm:$0xff]
          %v3512 = vld [vmem:[%s3 + $0x8] sm:$0xff]
          %v3513 = vld [vmem:[%s3 + $0x10] sm:$0xff]
          %v3514 = vld [vmem:[%s3 + $0x18] sm:$0xff]
          %v3515 = vld [vmem:[%s3 + $0x20] sm:$0xff]
          %v3516 = vld [vmem:[%s3 + $0x28] sm:$0xff]
          %v3517 = vld [vmem:[%s3 + $0x30] sm:$0xff]
          %v3518 = vld [vmem:[%s3 + $0x38] sm:$0xff]
          %v3519 = vld [vmem:[%s3 + $0x40] sm:$0xff]
          %v3520 = vld [vmem:[%s3 + $0x48] sm:$0xff]
          %v3521 = vld [vmem:[%s3 + $0x50] sm:$0xff]
          %v3522 = vld [vmem:[%s3 + $0x58] sm:$0xff]
          %v3523 = vld [vmem:[%s3 + $0x60] sm:$0xff]
          %v3524 = vld [vmem:[%s3 + $0x68] sm:$0xff]
          %v3525 = vld [vmem:[%s3 + $0x70] sm:$0xff]
          %v3526 = vld [vmem:[%s3 + $0x78] sm:$0xff]
          %v3527 = vld [vmem:[%s3 + $0x80] sm:$0xff]
          %v3528 = vld [vmem:[%s3 + $0x88] sm:$0xff]
          %v3529 = vld [vmem:[%s3 + $0x90] sm:$0xff]
          %v3530 = vld [vmem:[%s3 + $0x98] sm:$0xff]
          %v3531 = vld [vmem:[%s3 + $0xa0] sm:$0xff]
          %v3532 = vld [vmem:[%s3 + $0xa8] sm:$0xff]
          %v3533 = vld [vmem:[%s3 + $0xb0] sm:$0xff]
          %v3534 = vld [vmem:[%s3 + $0xb8] sm:$0xff]
          %v3535 = vld [vmem:[%s3 + $0xc0] sm:$0xff]
          %v3536 = vld [vmem:[%s3 + $0xc8] sm:$0xff]
          %v3537 = vld [vmem:[%s3 + $0xd0] sm:$0xff]
          %v3538 = vld [vmem:[%s3 + $0xd8] sm:$0xff]
          %v3539 = vld [vmem:[%s3 + $0xe0] sm:$0xff]
          %v3540 = vld [vmem:[%s3 + $0xe8] sm:$0xff]
          %v3541 = vld [vmem:[%s3 + $0xf0] sm:$0xff]
          %v3542 = vld [vmem:[%s3 + $0xf8] sm:$0xff]
          %v3543 = vld [vmem:[%s4] sm:$0x3]
          %v3545 = vlaneseq
          %v3546 = vshrl.u32 %v3545, 7
          %v3547 = vsub.s32 0, %v3546
          %v3548 = vrot.slane %v3543, %v3547
          %v3549 = vlaneseq
          %v3550 = vshrl.u32 %v3549, 7
          %v3551 = vsub.s32 1, %v3550
          %v3552 = vrot.slane %v3543, %v3551
          %v3587 = vunpack.c.l.b16 %v3511
          %v3588 = vunpack.c.h.b16 %v3511
          %v3589 = vunpack.c.l.b16 %v3512
          %v3590 = vunpack.c.h.b16 %v3512
          %v3591 = vunpack.c.l.b16 %v3513
          %v3592 = vunpack.c.h.b16 %v3513
          %v3593 = vunpack.c.l.b16 %v3514
          %v3594 = vunpack.c.h.b16 %v3514
          %v3595 = vunpack.c.l.b16 %v3515
          %v3596 = vunpack.c.h.b16 %v3515
          %v3597 = vunpack.c.l.b16 %v3516
          %v3598 = vunpack.c.h.b16 %v3516
          %v3599 = vunpack.c.l.b16 %v3517
          %v3600 = vunpack.c.h.b16 %v3517
          %v3601 = vunpack.c.l.b16 %v3518
          %v3602 = vunpack.c.h.b16 %v3518
          %v3603 = vunpack.c.l.b16 %v3519
          %v3604 = vunpack.c.h.b16 %v3519
          %v3605 = vunpack.c.l.b16 %v3520
          %v3606 = vunpack.c.h.b16 %v3520
          %v3607 = vunpack.c.l.b16 %v3521
          %v3608 = vunpack.c.h.b16 %v3521
          %v3609 = vunpack.c.l.b16 %v3522
          %v3610 = vunpack.c.h.b16 %v3522
          %v3611 = vunpack.c.l.b16 %v3523
          %v3612 = vunpack.c.h.b16 %v3523
          %v3613 = vunpack.c.l.b16 %v3524
          %v3614 = vunpack.c.h.b16 %v3524
          %v3615 = vunpack.c.l.b16 %v3525
          %v3616 = vunpack.c.h.b16 %v3525
          %v3617 = vunpack.c.l.b16 %v3526
          %v3618 = vunpack.c.h.b16 %v3526
          %v3619 = vunpack.c.l.b16 %v3527
          %v3620 = vunpack.c.h.b16 %v3527
          %v3621 = vunpack.c.l.b16 %v3528
          %v3622 = vunpack.c.h.b16 %v3528
          %v3623 = vunpack.c.l.b16 %v3529
          %v3624 = vunpack.c.h.b16 %v3529
          %v3625 = vunpack.c.l.b16 %v3530
          %v3626 = vunpack.c.h.b16 %v3530
          %v3627 = vunpack.c.l.b16 %v3531
          %v3628 = vunpack.c.h.b16 %v3531
          %v3629 = vunpack.c.l.b16 %v3532
          %v3630 = vunpack.c.h.b16 %v3532
          %v3631 = vunpack.c.l.b16 %v3533
          %v3632 = vunpack.c.h.b16 %v3533
          %v3633 = vunpack.c.l.b16 %v3534
          %v3634 = vunpack.c.h.b16 %v3534
          %v3635 = vunpack.c.l.b16 %v3535
          %v3636 = vunpack.c.h.b16 %v3535
          %v3637 = vunpack.c.l.b16 %v3536
          %v3638 = vunpack.c.h.b16 %v3536
          %v3639 = vunpack.c.l.b16 %v3537
          %v3640 = vunpack.c.h.b16 %v3537
          %v3641 = vunpack.c.l.b16 %v3538
          %v3642 = vunpack.c.h.b16 %v3538
          %v3643 = vunpack.c.l.b16 %v3539
          %v3644 = vunpack.c.h.b16 %v3539
          %v3645 = vunpack.c.l.b16 %v3540
          %v3646 = vunpack.c.h.b16 %v3540
          %v3647 = vunpack.c.l.b16 %v3541
          %v3648 = vunpack.c.h.b16 %v3541
          %v3649 = vunpack.c.l.b16 %v3542
          %v3650 = vunpack.c.h.b16 %v3542
          %v3651 = vpack.c.b16 %v3589, %v3587
          %v3652 = vpack.c.b16 %v3590, %v3588
          %v3653 = vpack.c.b16 %v3593, %v3591
          %v3654 = vpack.c.b16 %v3594, %v3592
          %v3655 = vpack.c.b16 %v3597, %v3595
          %v3656 = vpack.c.b16 %v3598, %v3596
          %v3657 = vpack.c.b16 %v3601, %v3599
          %v3658 = vpack.c.b16 %v3602, %v3600
          %v3659 = vpack.c.b16 %v3605, %v3603
          %v3660 = vpack.c.b16 %v3606, %v3604
          %v3661 = vpack.c.b16 %v3609, %v3607
          %v3662 = vpack.c.b16 %v3610, %v3608
          %v3663 = vpack.c.b16 %v3613, %v3611
          %v3664 = vpack.c.b16 %v3614, %v3612
          %v3665 = vpack.c.b16 %v3617, %v3615
          %v3666 = vpack.c.b16 %v3618, %v3616
          %v3667 = vpack.c.b16 %v3621, %v3619
          %v3668 = vpack.c.b16 %v3622, %v3620
          %v3669 = vpack.c.b16 %v3625, %v3623
          %v3670 = vpack.c.b16 %v3626, %v3624
          %v3671 = vpack.c.b16 %v3629, %v3627
          %v3672 = vpack.c.b16 %v3630, %v3628
          %v3673 = vpack.c.b16 %v3633, %v3631
          %v3674 = vpack.c.b16 %v3634, %v3632
          %v3675 = vpack.c.b16 %v3637, %v3635
          %v3676 = vpack.c.b16 %v3638, %v3636
          %v3677 = vpack.c.b16 %v3641, %v3639
          %v3678 = vpack.c.b16 %v3642, %v3640
          %v3679 = vpack.c.b16 %v3645, %v3643
          %v3680 = vpack.c.b16 %v3646, %v3644
          %v3681 = vpack.c.b16 %v3649, %v3647
          %v3682 = vpack.c.b16 %v3650, %v3648
          %3715 = vmatprep.subr.bf16.mxu0 %v3652
          %3716 = vmatpush1.bf16.msra.mxu0 %v3651
          %3717 = vmatprep.subr.bf16.mxu0 %v3654
          %3718 = vmatpush1.bf16.msra.mxu0 %v3653
          %3719 = vmatprep.subr.bf16.mxu0 %v3656
          %3720 = vmatpush1.bf16.msra.mxu0 %v3655
          %3721 = vmatprep.subr.bf16.mxu0 %v3658
          %3722 = vmatpush1.bf16.msra.mxu0 %v3657
          %3723 = vmatprep.subr.bf16.mxu0 %v3660
          %3724 = vmatpush1.bf16.msra.mxu0 %v3659
          %3725 = vmatprep.subr.bf16.mxu0 %v3662
          %3726 = vmatpush1.bf16.msra.mxu0 %v3661
          %3727 = vmatprep.subr.bf16.mxu0 %v3664
          %3728 = vmatpush1.bf16.msra.mxu0 %v3663
          %3729 = vmatprep.subr.bf16.mxu0 %v3666
          %3730 = vmatpush1.bf16.msra.mxu0 %v3665
          %3731 = vmatprep.subr.bf16.mxu0 %v3668
          %3732 = vmatpush1.bf16.msra.mxu0 %v3667
          %3733 = vmatprep.subr.bf16.mxu0 %v3670
          %3734 = vmatpush1.bf16.msra.mxu0 %v3669
          %3735 = vmatprep.subr.bf16.mxu0 %v3672
          %3736 = vmatpush1.bf16.msra.mxu0 %v3671
          %3737 = vmatprep.subr.bf16.mxu0 %v3674
          %3738 = vmatpush1.bf16.msra.mxu0 %v3673
          %3739 = vmatprep.subr.bf16.mxu0 %v3676
          %3740 = vmatpush1.bf16.msra.mxu0 %v3675
          %3741 = vmatprep.subr.bf16.mxu0 %v3678
          %3742 = vmatpush1.bf16.msra.mxu0 %v3677
          %3743 = vmatprep.subr.bf16.mxu0 %v3680
          %3744 = vmatpush1.bf16.msra.mxu0 %v3679
          %3745 = vmatprep.subr.bf16.mxu0 %v3682
          %3746 = vmatpush1.bf16.msra.mxu0 %v3681
          %3747 = vmatprep.mubr.bf16.mxu0 %v3510
          %3748 = vmatmul.mubr.bf16.gmra.mrb[0].mxu0 %v3509
          %v3749 = vpop.f32.mrb[0].mxu0
          %v3750 = vadd.f32 %v3548, %v3749
          %v3751 = vpop.f32.mrb[0].mxu0
          %v3752 = vadd.f32 %v3552, %v3751
          %v3753 = vpop.f32.mrb[0].mxu0
          %v3754 = vpop.f32.mrb[0].mxu0
          %3755 = vdwg.mxu0
          %3756 = vst [vmem:[%s628] sm:$0xff] %v3750
          %3757 = vst [vmem:[%s628 + $0x8] sm:$0xff] %v3752
        $region100: #{tpu_custom_call.1} parent=87 // pred_fallthru
          _
        %s3758 = sand.u32 %s151, 1
        %s3759 = scalar_lea.sflag [#allocation5], %s3758
        %s3760 = sand.u32 %s151, 1
        %s3761 = smul.addr %s3760, 16
        %s3762 = scalar_lea.vmem [#allocation4], %s3761
        // Predicated region
        $region101: #{tpu_custom_call.1} parent=87 // pred_check
          %p3763 = pneg %p161
        $region102: #{tpu_custom_call.1} parent=87 // pred_check_branch
          %3765 = sbr.rel (%p3763) target = $region104
        $region103: #{tpu_custom_call.1} parent=87 // pred_region
          %s3767 = ssub.s32 256, 256
          %3768 = vsyncadd %s3759, %s3767
          %s3769 = smul.addr %s23, 2
          %s3770 = smul.addr %s3769, 128
          %s3771 = scalar_lea.hbm %s5, %s3770
          %s3773 = sshll.u32 %s3762, 4
          %s3774 = int_to_ptr.vmem [resolvable:$true] %s3773
          %3776 = dma.vmem_to_hbm [thread:$0]  %s3774, 256, %s3771, %s3759
        $region104: #{tpu_custom_call.1} parent=87 // pred_fallthru
          _
      $region88: #{tpu_custom_call.1} parent=5 // pred_fallthru
        _
      %p3777 = scmp.le.s32.totalorder 2, %s14
      // Predicated region
      $region105: #{tpu_custom_call.1} parent=5 // pred_check
        %p3778 = pneg %p3777
      $region106: #{tpu_custom_call.1} parent=5 // pred_check_branch
        %3780 = sbr.rel (%p3778) target = $region108
      $region107: #{tpu_custom_call.1} parent=5 // pred_region
        %s3781 = ssub.s32 %s14, 2
        // Predicated region
        $region109: #{tpu_custom_call.1} parent=107 // pred_check
          %p3782 = pneg %p167
        $region110: #{tpu_custom_call.1} parent=107 // pred_check_branch
          %3784 = sbr.rel (%p3782) target = $region112
        $region111: #{tpu_custom_call.1} parent=107 // pred_region
          %s3785 = sand.u32 %s152, 1
          %s3786 = scalar_lea.sflag [#allocation5], %s3785
          %s3787 = sand.u32 %s152, 1
          %s3788 = smul.addr %s3787, 16
          %s3789 = scalar_lea.vmem [#allocation4], %s3788
          %3790 = dma.done %s3786, 256
        $region112: #{tpu_custom_call.1} parent=107 // pred_fallthru
          _
      $region108: #{tpu_custom_call.1} parent=5 // pred_fallthru
        _
    $region6: #{tpu_custom_call.1} parent=1 // loop_footer
      %s18 = sadd.s32 1, %s14
    $region7: #{tpu_custom_call.1} parent=1 // loop_footer_branch
      %13 = sbr.rel target = $region3
    $region8: #{tpu_custom_call.1} parent=1 // loop_exit
      _
    %3791 = vsyncpa [#allocation5], 1
    %s3792 = scalar_lea.sflag [#allocation5], 1
    %3793 = vsyncpa %s3792, 1

</llo_original>
